<compile_context>
chip_gen: v7x
topology: tpu7x:2x2x1
jax: 0.10.0
libtpu: 0.0.40
codegen_flags: <defaults>
</compile_context>

<pallas_src>
import functools

import jax
import jax.numpy as jnp
from jax import lax
from jax.experimental import pallas as pl
from jax.experimental.pallas import tpu as pltpu

EPS = 1e-5  # nn.GroupNorm default eps


# ----------------------------------------------------------------------------- kernels

def _gn_stats_kernel(x_ref, sum_ref, sumsq_ref):
    """Accumulate per-channel spatial sum / sum-of-squares over H-tiles (grid axis 1)."""
    t = pl.program_id(1)

    @pl.when(t == 0)
    def _():
        sum_ref[...] = jnp.zeros_like(sum_ref)
        sumsq_ref[...] = jnp.zeros_like(sumsq_ref)

    xf = x_ref[...].astype(jnp.float32)                       # (1, TH, W, C)
    sum_ref[...] += jnp.sum(xf, axis=(0, 1, 2))[None, None, :]
    sumsq_ref[...] += jnp.sum(xf * xf, axis=(0, 1, 2))[None, None, :]


def _gn_silu_conv3x3_kernel(scale_ref, shift_ref, xtop_ref, xmid_ref, xbot_ref,
                            w_ref, b_ref, *rest, TH, W, Cin, Cout,
                            apply_act, skip_mode, compute_dtype):
    """Fused GroupNorm-affine + SiLU + zero-pad + im2col 3x3 conv (+ fused skip / residual add).

    Inputs per grid step (n, t):
      scale/shift: (1, 1, Cin) per-sample per-channel GN scale/shift (precomputed).
      xtop/xmid/xbot: halo row above, TH main rows, halo row below of x (clamped at the image edge;
                      edge halos are zeroed in-kernel -> in-kernel 'same' padding).
      w: (9*Cin, Cout) HWIO weights reshaped for the im2col contraction.  b: (1, Cout) f32.
    """
    if skip_mode == "identity":
        xs_ref, out_ref, xpad_ref, col_ref = rest
        sw_ref = sb_ref = None
    elif skip_mode == "conv1x1":
        xs_ref, sw_ref, sb_ref, out_ref, xpad_ref, col_ref = rest
    else:
        out_ref, xpad_ref, col_ref = rest
        xs_ref = sw_ref = sb_ref = None

    t = pl.program_id(1)
    n_th = pl.num_programs(1)

    sc = scale_ref[...].astype(jnp.float32)                   # (1, 1, Cin)
    sh = shift_ref[...].astype(jnp.float32)

    def act(v):                                               # v: (rows, W, Cin)
        y = v.astype(jnp.float32)
        if apply_act:
            y = y * sc + sh                                   # GroupNorm affine (per channel)
            y = y * jax.nn.sigmoid(y)                         # SiLU (EUP sigmoid, f32 VPU mul)
        return y.astype(compute_dtype)

    # ---- assemble the zero-padded activation tile in a VMEM scratch (in-kernel 'same' padding) ----
    zcol = jnp.zeros((TH + 2, 1, Cin), compute_dtype)
    xpad_ref[:, 0:1, :] = zcol                                # left pad column (covers corners)
    xpad_ref[:, W + 1:W + 2, :] = zcol                        # right pad column

    xmid = act(xmid_ref[...].reshape(TH, W, Cin))
    top = act(xtop_ref[...].reshape(1, W, Cin))
    bot = act(xbot_ref[...].reshape(1, W, Cin))
    top = jnp.where(t > 0, top, jnp.zeros_like(top))          # zero pad at the image top
    bot = jnp.where(t < n_th - 1, bot, jnp.zeros_like(bot))   # zero pad at the image bottom

    xpad_ref[1:TH + 1, 1:W + 1, :] = xmid
    xpad_ref[0:1, 1:W + 1, :] = top
    xpad_ref[TH + 1:TH + 2, 1:W + 1, :] = bot

    # ---- im2col: one fat-K MXU matmul (K = 9*Cin) instead of 9 skinny dots ----
    for dy in range(3):
        for dx in range(3):
            j = dy * 3 + dx
            col_ref[:, j * Cin:(j + 1) * Cin] = (
                xpad_ref[dy:dy + TH, dx:dx + W, :].reshape(TH * W, Cin))

    acc = jnp.dot(col_ref[...], w_ref[...], preferred_element_type=jnp.float32)
    acc = acc + b_ref[...]                                    # (1, Cout) f32 bias broadcast

    # ---- fused skip connection + residual add (epilogue) ----
    if skip_mode == "identity":
        acc = acc + xs_ref[...].astype(jnp.float32).reshape(TH * W, Cout)
    elif skip_mode == "conv1x1":
        xs = xs_ref[...].astype(compute_dtype).reshape(TH * W, xs_ref.shape[-1])
        acc = acc + jnp.dot(xs, sw_ref[...], preferred_element_type=jnp.float32)
        acc = acc + sb_ref[...]

    out_ref[...] = acc.reshape(1, TH, W, Cout).astype(out_ref.dtype)


# ----------------------------------------------------------------------------- wrappers

def _pick_tile_h(H, W, cin, cout, budget_bytes=6 << 20):
    """Largest divisor of H whose per-step working set double-buffers comfortably in VMEM
    (v7x has only 64 MiB physical / 32 MiB default scoped)."""
    for th in range(H, 0, -1):
        if H % th:
            continue
        work = ((th + 2) * (W + 2) * cin        # padded activation scratch
                + th * W * 9 * cin              # im2col columns
                + 2 * (th + 2) * W * cin        # double-buffered input rows (+halo)
                + 2 * th * W * cout)            # double-buffered output tile
        if work * 4 <= budget_bytes:
            return th
    return 1


def gn_stats(x, tile_h):
    """Per-(sample, channel) spatial sum and sum-of-squares -> two (N, 1, C) f32 arrays."""
    N, H, W, C = x.shape
    assert H % tile_h == 0
    out = jax.ShapeDtypeStruct((N, 1, C), jnp.float32)
    return pl.pallas_call(
        _gn_stats_kernel,
        out_shape=(out, out),
        grid=(N, H // tile_h),
        in_specs=[pl.BlockSpec((1, tile_h, W, C), lambda n, t: (n, t, 0, 0))],
        out_specs=(pl.BlockSpec((1, 1, C), lambda n, t: (n, 0, 0)),
                   pl.BlockSpec((1, 1, C), lambda n, t: (n, 0, 0))),
        compiler_params=pltpu.CompilerParams(
            dimension_semantics=("parallel", "arbitrary")),
    )(x)


def _gn_scale_shift(s, ss, gamma, beta, hw, num_groups):
    """Turn per-channel sums into per-(sample, channel) GN scale/shift (tiny XLA op)."""
    N = s.shape[0]
    C = s.shape[-1]
    cg = C // num_groups
    cnt = float(hw * cg)
    gs = s.reshape(N, num_groups, cg).sum(-1, keepdims=True)
    gss = ss.reshape(N, num_groups, cg).sum(-1, keepdims=True)
    gmean = gs / cnt
    gvar = jnp.maximum(gss / cnt - gmean * gmean, 0.0)        # guard tiny negative variance
    rstd = lax.rsqrt(gvar + EPS)
    gmean = jnp.broadcast_to(gmean, (N, num_groups, cg)).reshape(N, 1, C)
    rstd = jnp.broadcast_to(rstd, (N, num_groups, cg)).reshape(N, 1, C)
    scale = rstd * gamma.reshape(1, 1, C)
    shift = beta.reshape(1, 1, C) - gmean * scale
    return scale, shift


def gn_silu_conv3x3(x, scale, shift, w_hwio, b, *, tile_h, apply_act=True,
                    skip_mode="none", x_skip=None, skip_w=None, skip_b=None,
                    compute_dtype=jnp.bfloat16, out_dtype=None):
    """Fused GN-affine + SiLU + 3x3 'same' conv (+ optional fused skip/residual add)."""
    N, H, W, Cin = x.shape
    Cout = w_hwio.shape[-1]
    assert H % tile_h == 0
    n_th = H // tile_h
    out_dtype = x.dtype if out_dtype is None else out_dtype

    w9 = w_hwio.reshape(9 * Cin, Cout).astype(compute_dtype)
    bb = jnp.asarray(b, jnp.float32).reshape(1, Cout)

    def top_map(n, t):
        return (n, jnp.maximum(t * tile_h - 1, 0), 0, 0)

    def bot_map(n, t):
        return (n, jnp.minimum(t * tile_h + tile_h, H - 1), 0, 0)

    in_specs = [
        pl.BlockSpec((1, 1, Cin), lambda n, t: (n, 0, 0)),              # scale
        pl.BlockSpec((1, 1, Cin), lambda n, t: (n, 0, 0)),              # shift
        pl.BlockSpec((1, 1, W, Cin), top_map),                          # halo row above (clamped)
        pl.BlockSpec((1, tile_h, W, Cin), lambda n, t: (n, t, 0, 0)),   # main rows
        pl.BlockSpec((1, 1, W, Cin), bot_map),                          # halo row below (clamped)
        pl.BlockSpec((9 * Cin, Cout), lambda n, t: (0, 0)),             # conv weights (im2col layout)
        pl.BlockSpec((1, Cout), lambda n, t: (0, 0)),                   # conv bias
    ]
    args = [scale, shift, x, x, x, w9, bb]

    if skip_mode == "identity":
        in_specs.append(pl.BlockSpec((1, tile_h, W, Cout), lambda n, t: (n, t, 0, 0)))
        args.append(x_skip)
    elif skip_mode == "conv1x1":
        Cs = x_skip.shape[-1]
        in_specs += [
            pl.BlockSpec((1, tile_h, W, Cs), lambda n, t: (n, t, 0, 0)),
            pl.BlockSpec((Cs, Cout), lambda n, t: (0, 0)),
            pl.BlockSpec((1, Cout), lambda n, t: (0, 0)),
        ]
        args += [x_skip, skip_w.astype(compute_dtype),
                 jnp.asarray(skip_b, jnp.float32).reshape(1, Cout)]

    kern = functools.partial(
        _gn_silu_conv3x3_kernel, TH=tile_h, W=W, Cin=Cin, Cout=Cout,
        apply_act=apply_act, skip_mode=skip_mode, compute_dtype=compute_dtype)

    return pl.pallas_call(
        kern,
        out_shape=jax.ShapeDtypeStruct((N, H, W, Cout), out_dtype),
        grid=(N, n_th),
        in_specs=in_specs,
        out_specs=pl.BlockSpec((1, tile_h, W, Cout), lambda n, t: (n, t, 0, 0)),
        scratch_shapes=[
            pltpu.VMEM((tile_h + 2, W + 2, Cin), compute_dtype),   # zero-padded activation tile
            pltpu.VMEM((tile_h * W, 9 * Cin), compute_dtype),      # im2col column matrix
        ],
        compiler_params=pltpu.CompilerParams(
            dimension_semantics=("parallel", "parallel")),
    )(*args)


def res_block_forward_nhwc(x, params, *, use_conv=False, num_groups=32,
                           tile_h=None, compute_dtype=jnp.bfloat16):
    """ResBlock.forward on NHWC activations: (N, H, W, C) -> (N, H, W, Cout)."""
    N, H, W, C = x.shape
    Cout = params["conv1_w"].shape[-1]
    if tile_h is None:
        tile_h = _pick_tile_h(H, W, max(C, Cout), max(C, Cout))
    hw = H * W

    # ---- in_layers: GroupNorm32 -> SiLU -> Conv3x3 (fused) ----
    s1, ss1 = gn_stats(x, tile_h)
    scale1, shift1 = _gn_scale_shift(s1, ss1, params["gn1_gamma"], params["gn1_beta"],
                                     hw, num_groups)
    h = gn_silu_conv3x3(x, scale1, shift1, params["conv1_w"], params["conv1_b"],
                        tile_h=tile_h, compute_dtype=compute_dtype,
                        out_dtype=compute_dtype)

    # ---- out_layers: GroupNorm32 -> SiLU -> Dropout -> Conv3x3 (fused, skip+add in epilogue) ----
    s2, ss2 = gn_stats(h, tile_h)
    scale2, shift2 = _gn_scale_shift(s2, ss2, params["gn2_gamma"], params["gn2_beta"],
                                     hw, num_groups)
    # TODO(synk): nn.Dropout is identity in eval mode; training-mode dropout not implemented.

    if Cout == C:
        # skip = nn.Identity(): residual add fused into conv2's epilogue
        out = gn_silu_conv3x3(h, scale2, shift2, params["conv2_w"], params["conv2_b"],
                              tile_h=tile_h, skip_mode="identity", x_skip=x,
                              compute_dtype=compute_dtype, out_dtype=x.dtype)
    elif use_conv:
        # skip = raw 3x3 conv on x (no norm/activation); requires skip_w of shape (3, 3, C, Cout).
        ones = jnp.ones((N, 1, C), jnp.float32)
        zeros = jnp.zeros((N, 1, C), jnp.float32)
        skip = gn_silu_conv3x3(x, ones, zeros, params["skip_w"], params["skip_b"],
                               tile_h=tile_h, apply_act=False,
                               compute_dtype=compute_dtype, out_dtype=x.dtype)
        out = gn_silu_conv3x3(h, scale2, shift2, params["conv2_w"], params["conv2_b"],
                              tile_h=tile_h, skip_mode="identity", x_skip=skip,
                              compute_dtype=compute_dtype, out_dtype=x.dtype)
    else:
        # skip = 1x1 conv: fused as a second (TH*W, C) x (C, Cout) matmul in conv2's epilogue
        out = gn_silu_conv3x3(h, scale2, shift2, params["conv2_w"], params["conv2_b"],
                              tile_h=tile_h, skip_mode="conv1x1", x_skip=x,
                              skip_w=params["skip_w"], skip_b=params["skip_b"],
                              compute_dtype=compute_dtype, out_dtype=x.dtype)
    return out


def res_block_forward(x_nchw, params, **kwargs):
    """PyTorch-layout entry point: (N, C, H, W) -> (N, Cout, H, W).

    NOTE: the NCHW<->NHWC transposes each cost a full HBM round trip; JAX pipelines that already
    keep activations in NHWC should call `res_block_forward_nhwc` directly.
    """
    x = jnp.transpose(x_nchw, (0, 2, 3, 1))
    out = res_block_forward_nhwc(x, params, **kwargs)
    return jnp.transpose(out, (0, 3, 1, 2))


# ----------------------------------------------------------------------------- reference

def ref_forward(x_nchw, p, use_conv=False):
    x = x_nchw.astype(jnp.float32)
    C = x.shape[1]
    Cout = p["conv1_w"].shape[-1]

    def gn(v, gamma, beta, G=32):
        N, Cv, H, W = v.shape
        vr = v.reshape(N, G, (Cv // G) * H * W)
        mean = vr.mean(axis=2, keepdims=True)
        var = vr.var(axis=2, keepdims=True)
        vn = ((vr - mean) * lax.rsqrt(var + EPS)).reshape(N, Cv, H, W)
        return vn * gamma.reshape(1, Cv, 1, 1) + beta.reshape(1, Cv, 1, 1)

    def silu(v):
        return v * jax.nn.sigmoid(v)

    def conv2d(v, w_hwio, b, pad):
        out = lax.conv_general_dilated(
            v, w_hwio, window_strides=(1, 1), padding=[(pad, pad), (pad, pad)],
            dimension_numbers=("NCHW", "HWIO", "NCHW"), precision=lax.Precision.HIGHEST)
        return out + b.reshape(1, -1, 1, 1)

    h = conv2d(silu(gn(x, p["gn1_gamma"][0], p["gn1_beta"][0])), p["conv1_w"], p["conv1_b"][0], 1)
    h = conv2d(silu(gn(h, p["gn2_gamma"][0], p["gn2_beta"][0])), p["conv2_w"], p["conv2_b"][0], 1)
    if Cout == C:
        skip = x
    elif use_conv:
        skip = conv2d(x, p["skip_w"], p["skip_b"][0], 1)
    else:
        skip = conv2d(x, p["skip_w"].reshape(1, 1, C, Cout), p["skip_b"][0], 0)
    return skip + h


# ----------------------------------------------------------------------------- main

def make_params(key, C, Cout, skip_kind):
    ks = jax.random.split(key, 10)
    p = dict(
        gn1_gamma=1.0 + 0.2 * jax.random.normal(ks[0], (1, C), jnp.float32),
        gn1_beta=0.1 * jax.random.normal(ks[1], (1, C), jnp.float32),
        conv1_w=0.05 * jax.random.normal(ks[2], (3, 3, C, Cout), jnp.float32),
        conv1_b=0.05 * jax.random.normal(ks[3], (1, Cout), jnp.float32),
        gn2_gamma=1.0 + 0.2 * jax.random.normal(ks[4], (1, Cout), jnp.float32),
        gn2_beta=0.1 * jax.random.normal(ks[5], (1, Cout), jnp.float32),
        # NOTE: the module zero-inits the last conv (zero_module); random values here so the
        # correctness check exercises the whole pipeline.  Use zeros for a bit-faithful init.
        conv2_w=0.05 * jax.random.normal(ks[6], (3, 3, Cout, Cout), jnp.float32),
        conv2_b=0.05 * jax.random.normal(ks[7], (1, Cout), jnp.float32),
    )
    if skip_kind == "1x1":
        p["skip_w"] = 0.05 * jax.random.normal(ks[8], (C, Cout), jnp.float32)
        p["skip_b"] = 0.05 * jax.random.normal(ks[9], (1, Cout), jnp.float32)
    elif skip_kind == "3x3":
        p["skip_w"] = 0.05 * jax.random.normal(ks[8], (3, 3, C, Cout), jnp.float32)
        p["skip_b"] = 0.05 * jax.random.normal(ks[9], (1, Cout), jnp.float32)
    return p


if __name__ == "__main__":
    key = jax.random.PRNGKey(0)
    k1, k2, k3, k4 = jax.random.split(key, 4)

    # ---- config A: channels change (32 -> 64) => 1x1-conv skip; tiled grid (2 H-tiles) ----
    N, C, H, W = 2, 32, 16, 16
    Cout = 64
    pa = make_params(k1, C, Cout, "1x1")
    xa = jax.random.normal(k2, (N, C, H, W), jnp.float32)      # NCHW like the PyTorch module
    ref_a = jax.block_until_ready(ref_forward(xa, pa))

    # exact-mode check (f32 end to end)
    fwd_f32 = jax.jit(functools.partial(res_block_forward, tile_h=8, compute_dtype=jnp.float32))
    out_f32 = jax.block_until_ready(fwd_f32(xa, pa))
    assert out_f32.shape == (N, Cout, H, W), out_f32.shape
    err_f32 = float(jnp.max(jnp.abs(out_f32 - ref_a)))
    if not bool(jnp.allclose(out_f32, ref_a, atol=3e-3, rtol=3e-3)):
        raise AssertionError(f"f32 ResBlock mismatch, max abs err = {err_f32}")

    # perf-mode check (bf16 MXU operands / bf16 intermediate, f32 accumulation and GN/SiLU math)
    fwd_bf16 = jax.jit(functools.partial(res_block_forward, tile_h=8, compute_dtype=jnp.bfloat16))
    out_bf16 = jax.block_until_ready(fwd_bf16(xa, pa))
    err_bf16 = float(jnp.max(jnp.abs(out_bf16 - ref_a)))
    if not bool(jnp.allclose(out_bf16, ref_a, atol=1e-1, rtol=1e-1)):
        raise AssertionError(f"bf16 ResBlock mismatch, max abs err = {err_bf16}")

    # ---- config B: channels unchanged (64 -> 64) => Identity skip fused into conv2 ----
    Cb = 64
    pb = make_params(k3, Cb, Cb, None)
    xb = jax.random.normal(k4, (N, Cb, H, W), jnp.float32)
    ref_b = jax.block_until_ready(ref_forward(xb, pb))
    fwd_b = jax.jit(functools.partial(res_block_forward, compute_dtype=jnp.float32))
    out_b = jax.block_until_ready(fwd_b(xb, pb))
    err_b = float(jnp.max(jnp.abs(out_b - ref_b)))
    if not bool(jnp.allclose(out_b, ref_b, atol=3e-3, rtol=3e-3)):
        raise AssertionError(f"identity-skip ResBlock mismatch, max abs err = {err_b}")

    print("KERNEL_OK")
</pallas_src>

<mosaic_0001>
module attributes {stable_mosaic.version = 11 : i64} {
  func.func @_gn_stats_kernel(%arg0: i32, %arg1: i32, %arg2: memref<1x8x16x64xf32, #tpu.memory_space<vmem>>, %arg3: memref<1x1x64xf32, #tpu.memory_space<vmem>>, %arg4: memref<1x1x64xf32, #tpu.memory_space<vmem>>) attributes {dimension_semantics = [#tpu.dimension_semantics<parallel>, #tpu.dimension_semantics<arbitrary>], iteration_bounds = array<i64: 2, 2>, scalar_prefetch = 0 : i64, scratch_operands = 0 : i64, tpu.core_type = #tpu.core_type<tc>, window_params = [{transform_indices = @transform_0, window_bounds = array<i64: 1, 8, 16, 64>}, {transform_indices = @transform_1, window_bounds = array<i64: 1, 1, 64>}, {transform_indices = @transform_2, window_bounds = array<i64: 1, 1, 64>}]} {
    %c0_i32 = arith.constant 0 : i32
    %0 = arith.cmpi eq, %arg1, %c0_i32 : i32
    %1 = arith.extui %0 : i1 to i32
    %c0_i32_0 = arith.constant 0 : i32
    %2 = arith.cmpi ne, %1, %c0_i32_0 : i32
    scf.if %2 {
      %cst_17 = arith.constant 0.000000e+00 : f32
      %15 = vector.broadcast %cst_17 : f32 to vector<1x1x64xf32>
      %c0_18 = arith.constant 0 : index
      %c0_19 = arith.constant 0 : index
      %c0_20 = arith.constant 0 : index
      %16 = vector.load %arg3[%c0_18, %c0_19, %c0_20] : memref<1x1x64xf32, #tpu.memory_space<vmem>>, vector<1x1x64xf32>
      tpu.vector_store %arg3[%c0_18, %c0_19, %c0_20], %15 {strides = array<i32>} : memref<1x1x64xf32, #tpu.memory_space<vmem>>, vector<1x1x64xf32>,
      %cst_21 = arith.constant 0.000000e+00 : f32
      %17 = vector.broadcast %cst_21 : f32 to vector<1x1x64xf32>
      %c0_22 = arith.constant 0 : index
      %c0_23 = arith.constant 0 : index
      %c0_24 = arith.constant 0 : index
      %18 = vector.load %arg4[%c0_22, %c0_23, %c0_24] : memref<1x1x64xf32, #tpu.memory_space<vmem>>, vector<1x1x64xf32>
      tpu.vector_store %arg4[%c0_22, %c0_23, %c0_24], %17 {strides = array<i32>} : memref<1x1x64xf32, #tpu.memory_space<vmem>>, vector<1x1x64xf32>,
    } else {
    }
    %c0 = arith.constant 0 : index
    %c0_1 = arith.constant 0 : index
    %c0_2 = arith.constant 0 : index
    %c0_3 = arith.constant 0 : index
    %3 = vector.load %arg2[%c0, %c0_1, %c0_2, %c0_3] : memref<1x8x16x64xf32, #tpu.memory_space<vmem>>, vector<1x8x16x64xf32>
    %c0_4 = arith.constant 0 : index
    %c0_5 = arith.constant 0 : index
    %c0_6 = arith.constant 0 : index
    %4 = vector.load %arg3[%c0_4, %c0_5, %c0_6] : memref<1x1x64xf32, #tpu.memory_space<vmem>>, vector<1x1x64xf32>
    %cst = arith.constant dense<0.000000e+00> : vector<64xf32>
    %5 = vector.multi_reduction <add>, %3, %cst [0, 1, 2] : vector<1x8x16x64xf32> to vector<64xf32>
    %6 = vector.shape_cast %5 : vector<64xf32> to vector<1x1x64xf32>
    %7 = arith.addf %4, %6 : vector<1x1x64xf32>
    %c0_7 = arith.constant 0 : index
    %c0_8 = arith.constant 0 : index
    %c0_9 = arith.constant 0 : index
    %8 = vector.load %arg3[%c0_7, %c0_8, %c0_9] : memref<1x1x64xf32, #tpu.memory_space<vmem>>, vector<1x1x64xf32>
    tpu.vector_store %arg3[%c0_7, %c0_8, %c0_9], %7 {strides = array<i32>} : memref<1x1x64xf32, #tpu.memory_space<vmem>>, vector<1x1x64xf32>,
    %c0_10 = arith.constant 0 : index
    %c0_11 = arith.constant 0 : index
    %c0_12 = arith.constant 0 : index
    %9 = vector.load %arg4[%c0_10, %c0_11, %c0_12] : memref<1x1x64xf32, #tpu.memory_space<vmem>>, vector<1x1x64xf32>
    %10 = arith.mulf %3, %3 : vector<1x8x16x64xf32>
    %cst_13 = arith.constant dense<0.000000e+00> : vector<64xf32>
    %11 = vector.multi_reduction <add>, %10, %cst_13 [0, 1, 2] : vector<1x8x16x64xf32> to vector<64xf32>
    %12 = vector.shape_cast %11 : vector<64xf32> to vector<1x1x64xf32>
    %13 = arith.addf %9, %12 : vector<1x1x64xf32>
    %c0_14 = arith.constant 0 : index
    %c0_15 = arith.constant 0 : index
    %c0_16 = arith.constant 0 : index
    %14 = vector.load %arg4[%c0_14, %c0_15, %c0_16] : memref<1x1x64xf32, #tpu.memory_space<vmem>>, vector<1x1x64xf32>
    tpu.vector_store %arg4[%c0_14, %c0_15, %c0_16], %13 {strides = array<i32>} : memref<1x1x64xf32, #tpu.memory_space<vmem>>, vector<1x1x64xf32>,
    return
  }
  func.func @transform_0(%arg0: i32, %arg1: i32) -> (i32, i32, i32, i32) {
    %c0_i32 = arith.constant 0 : i32
    %c0_i32_0 = arith.constant 0 : i32
    %c0_i32_1 = arith.constant 0 : i32
    return %arg0, %arg1, %c0_i32, %c0_i32_0 : i32, i32, i32, i32
  }
  func.func @transform_1(%arg0: i32, %arg1: i32) -> (i32, i32, i32) {
    %c0_i32 = arith.constant 0 : i32
    %c0_i32_0 = arith.constant 0 : i32
    %c0_i32_1 = arith.constant 0 : i32
    return %arg0, %c0_i32, %c0_i32_0 : i32, i32, i32
  }
  func.func @transform_2(%arg0: i32, %arg1: i32) -> (i32, i32, i32) {
    %c0_i32 = arith.constant 0 : i32
    %c0_i32_0 = arith.constant 0 : i32
    %c0_i32_1 = arith.constant 0 : i32
    return %arg0, %c0_i32, %c0_i32_0 : i32, i32, i32
  }
}

module attributes {stable_mosaic.version = 11 : i64} {
  func.func @_gn_stats_kernel(%arg0: i32, %arg1: i32, %arg2: memref<1x8x16x32xf32, #tpu.memory_space<vmem>>, %arg3: memref<1x1x32xf32, #tpu.memory_space<vmem>>, %arg4: memref<1x1x32xf32, #tpu.memory_space<vmem>>) attributes {dimension_semantics = [#tpu.dimension_semantics<parallel>, #tpu.dimension_semantics<arbitrary>], iteration_bounds = array<i64: 2, 2>, scalar_prefetch = 0 : i64, scratch_operands = 0 : i64, tpu.core_type = #tpu.core_type<tc>, window_params = [{transform_indices = @transform_0, window_bounds = array<i64: 1, 8, 16, 32>}, {transform_indices = @transform_1, window_bounds = array<i64: 1, 1, 32>}, {transform_indices = @transform_2, window_bounds = array<i64: 1, 1, 32>}]} {
    %c0_i32 = arith.constant 0 : i32
    %0 = arith.cmpi eq, %arg1, %c0_i32 : i32
    %1 = arith.extui %0 : i1 to i32
    %c0_i32_0 = arith.constant 0 : i32
    %2 = arith.cmpi ne, %1, %c0_i32_0 : i32
    scf.if %2 {
      %cst_17 = arith.constant 0.000000e+00 : f32
      %15 = vector.broadcast %cst_17 : f32 to vector<1x1x32xf32>
      %c0_18 = arith.constant 0 : index
      %c0_19 = arith.constant 0 : index
      %c0_20 = arith.constant 0 : index
      %16 = vector.load %arg3[%c0_18, %c0_19, %c0_20] : memref<1x1x32xf32, #tpu.memory_space<vmem>>, vector<1x1x32xf32>
      tpu.vector_store %arg3[%c0_18, %c0_19, %c0_20], %15 {strides = array<i32>} : memref<1x1x32xf32, #tpu.memory_space<vmem>>, vector<1x1x32xf32>,
      %cst_21 = arith.constant 0.000000e+00 : f32
      %17 = vector.broadcast %cst_21 : f32 to vector<1x1x32xf32>
      %c0_22 = arith.constant 0 : index
      %c0_23 = arith.constant 0 : index
      %c0_24 = arith.constant 0 : index
      %18 = vector.load %arg4[%c0_22, %c0_23, %c0_24] : memref<1x1x32xf32, #tpu.memory_space<vmem>>, vector<1x1x32xf32>
      tpu.vector_store %arg4[%c0_22, %c0_23, %c0_24], %17 {strides = array<i32>} : memref<1x1x32xf32, #tpu.memory_space<vmem>>, vector<1x1x32xf32>,
    } else {
    }
    %c0 = arith.constant 0 : index
    %c0_1 = arith.constant 0 : index
    %c0_2 = arith.constant 0 : index
    %c0_3 = arith.constant 0 : index
    %3 = vector.load %arg2[%c0, %c0_1, %c0_2, %c0_3] : memref<1x8x16x32xf32, #tpu.memory_space<vmem>>, vector<1x8x16x32xf32>
    %c0_4 = arith.constant 0 : index
    %c0_5 = arith.constant 0 : index
    %c0_6 = arith.constant 0 : index
    %4 = vector.load %arg3[%c0_4, %c0_5, %c0_6] : memref<1x1x32xf32, #tpu.memory_space<vmem>>, vector<1x1x32xf32>
    %cst = arith.constant dense<0.000000e+00> : vector<32xf32>
    %5 = vector.multi_reduction <add>, %3, %cst [0, 1, 2] : vector<1x8x16x32xf32> to vector<32xf32>
    %6 = vector.shape_cast %5 : vector<32xf32> to vector<1x1x32xf32>
    %7 = arith.addf %4, %6 : vector<1x1x32xf32>
    %c0_7 = arith.constant 0 : index
    %c0_8 = arith.constant 0 : index
    %c0_9 = arith.constant 0 : index
    %8 = vector.load %arg3[%c0_7, %c0_8, %c0_9] : memref<1x1x32xf32, #tpu.memory_space<vmem>>, vector<1x1x32xf32>
    tpu.vector_store %arg3[%c0_7, %c0_8, %c0_9], %7 {strides = array<i32>} : memref<1x1x32xf32, #tpu.memory_space<vmem>>, vector<1x1x32xf32>,
    %c0_10 = arith.constant 0 : index
    %c0_11 = arith.constant 0 : index
    %c0_12 = arith.constant 0 : index
    %9 = vector.load %arg4[%c0_10, %c0_11, %c0_12] : memref<1x1x32xf32, #tpu.memory_space<vmem>>, vector<1x1x32xf32>
    %10 = arith.mulf %3, %3 : vector<1x8x16x32xf32>
    %cst_13 = arith.constant dense<0.000000e+00> : vector<32xf32>
    %11 = vector.multi_reduction <add>, %10, %cst_13 [0, 1, 2] : vector<1x8x16x32xf32> to vector<32xf32>
    %12 = vector.shape_cast %11 : vector<32xf32> to vector<1x1x32xf32>
    %13 = arith.addf %9, %12 : vector<1x1x32xf32>
    %c0_14 = arith.constant 0 : index
    %c0_15 = arith.constant 0 : index
    %c0_16 = arith.constant 0 : index
    %14 = vector.load %arg4[%c0_14, %c0_15, %c0_16] : memref<1x1x32xf32, #tpu.memory_space<vmem>>, vector<1x1x32xf32>
    tpu.vector_store %arg4[%c0_14, %c0_15, %c0_16], %13 {strides = array<i32>} : memref<1x1x32xf32, #tpu.memory_space<vmem>>, vector<1x1x32xf32>,
    return
  }
  func.func @transform_0(%arg0: i32, %arg1: i32) -> (i32, i32, i32, i32) {
    %c0_i32 = arith.constant 0 : i32
    %c0_i32_0 = arith.constant 0 : i32
    %c0_i32_1 = arith.constant 0 : i32
    return %arg0, %arg1, %c0_i32, %c0_i32_0 : i32, i32, i32, i32
  }
  func.func @transform_1(%arg0: i32, %arg1: i32) -> (i32, i32, i32) {
    %c0_i32 = arith.constant 0 : i32
    %c0_i32_0 = arith.constant 0 : i32
    %c0_i32_1 = arith.constant 0 : i32
    return %arg0, %c0_i32, %c0_i32_0 : i32, i32, i32
  }
  func.func @transform_2(%arg0: i32, %arg1: i32) -> (i32, i32, i32) {
    %c0_i32 = arith.constant 0 : i32
    %c0_i32_0 = arith.constant 0 : i32
    %c0_i32_1 = arith.constant 0 : i32
    return %arg0, %c0_i32, %c0_i32_0 : i32, i32, i32
  }
}

module attributes {stable_mosaic.version = 11 : i64} {
  func.func @_gn_silu_conv3x3_kernel(%arg0: i32, %arg1: i32, %arg2: memref<1x1x32xf32, #tpu.memory_space<vmem>>, %arg3: memref<1x1x32xf32, #tpu.memory_space<vmem>>, %arg4: memref<1x1x16x32xf32, #tpu.memory_space<vmem>>, %arg5: memref<1x8x16x32xf32, #tpu.memory_space<vmem>>, %arg6: memref<1x1x16x32xf32, #tpu.memory_space<vmem>>, %arg7: memref<288x64xf32, #tpu.memory_space<vmem>>, %arg8: memref<1x64xf32, #tpu.memory_space<vmem>>, %arg9: memref<1x8x16x64xf32, #tpu.memory_space<vmem>>, %arg10: memref<10x18x32xf32, #tpu.memory_space<vmem>>, %arg11: memref<128x288xf32, #tpu.memory_space<vmem>>) attributes {dimension_semantics = [#tpu.dimension_semantics<parallel>, #tpu.dimension_semantics<parallel>], iteration_bounds = array<i64: 2, 2>, scalar_prefetch = 0 : i64, scratch_operands = 2 : i64, tpu.core_type = #tpu.core_type<tc>, window_params = [{transform_indices = @transform_0, window_bounds = array<i64: 1, 1, 32>}, {transform_indices = @transform_1, window_bounds = array<i64: 1, 1, 32>}, {transform_indices = @transform_2, window_bounds = array<i64: 1, 1, 16, 32>}, {transform_indices = @transform_3, window_bounds = array<i64: 1, 8, 16, 32>}, {transform_indices = @transform_4, window_bounds = array<i64: 1, 1, 16, 32>}, {pipeline_mode = #tpu.pipeline_mode<synchronous>, transform_indices = @transform_5, window_bounds = array<i64: 288, 64>}, {pipeline_mode = #tpu.pipeline_mode<synchronous>, transform_indices = @transform_6, window_bounds = array<i64: 1, 64>}, {transform_indices = @transform_7, window_bounds = array<i64: 1, 8, 16, 64>}]} {
    %c0 = arith.constant 0 : index
    %c0_0 = arith.constant 0 : index
    %c0_1 = arith.constant 0 : index
    %0 = vector.load %arg2[%c0, %c0_0, %c0_1] : memref<1x1x32xf32, #tpu.memory_space<vmem>>, vector<1x1x32xf32>
    %c0_2 = arith.constant 0 : index
    %c0_3 = arith.constant 0 : index
    %c0_4 = arith.constant 0 : index
    %1 = vector.load %arg3[%c0_2, %c0_3, %c0_4] : memref<1x1x32xf32, #tpu.memory_space<vmem>>, vector<1x1x32xf32>
    %cst = arith.constant 0.000000e+00 : f32
    %2 = vector.broadcast %cst : f32 to vector<10x1x32xf32>
    %c0_5 = arith.constant 0 : index
    %c0_6 = arith.constant 0 : index
    %c0_7 = arith.constant 0 : index
    %3 = vector.load %arg10[%c0_5, %c0_6, %c0_7] : memref<10x18x32xf32, #tpu.memory_space<vmem>>, vector<10x1x32xf32>
    tpu.vector_store %arg10[%c0_5, %c0_6, %c0_7], %2 {strides = array<i32>} : memref<10x18x32xf32, #tpu.memory_space<vmem>>, vector<10x1x32xf32>,
    %c0_8 = arith.constant 0 : index
    %c17 = arith.constant 17 : index
    %c0_9 = arith.constant 0 : index
    %4 = vector.load %arg10[%c0_8, %c17, %c0_9] : memref<10x18x32xf32, #tpu.memory_space<vmem>>, vector<10x1x32xf32>
    tpu.vector_store %arg10[%c0_8, %c17, %c0_9], %2 {strides = array<i32>} : memref<10x18x32xf32, #tpu.memory_space<vmem>>, vector<10x1x32xf32>,
    %c0_10 = arith.constant 0 : index
    %c0_11 = arith.constant 0 : index
    %c0_12 = arith.constant 0 : index
    %c0_13 = arith.constant 0 : index
    %5 = vector.load %arg5[%c0_10, %c0_11, %c0_12, %c0_13] : memref<1x8x16x32xf32, #tpu.memory_space<vmem>>, vector<1x8x16x32xf32>
    %6 = vector.shape_cast %5 : vector<1x8x16x32xf32> to vector<8x16x32xf32>
    %7 = vector.broadcast %0 : vector<1x1x32xf32> to vector<8x16x32xf32>
    %8 = arith.mulf %6, %7 : vector<8x16x32xf32>
    %9 = vector.broadcast %1 : vector<1x1x32xf32> to vector<8x16x32xf32>
    %10 = arith.addf %8, %9 : vector<8x16x32xf32>
    %11 = arith.negf %10 : vector<8x16x32xf32>
    %12 = math.exp %11 : vector<8x16x32xf32>
    %cst_14 = arith.constant 1.000000e+00 : f32
    %13 = vector.broadcast %cst_14 : f32 to vector<8x16x32xf32>
    %14 = arith.addf %13, %12 : vector<8x16x32xf32>
    %15 = arith.divf %13, %14 : vector<8x16x32xf32>
    %16 = arith.mulf %10, %15 : vector<8x16x32xf32>
    %c0_15 = arith.constant 0 : index
    %c0_16 = arith.constant 0 : index
    %c0_17 = arith.constant 0 : index
    %c0_18 = arith.constant 0 : index
    %17 = vector.load %arg4[%c0_15, %c0_16, %c0_17, %c0_18] : memref<1x1x16x32xf32, #tpu.memory_space<vmem>>, vector<1x1x16x32xf32>
    %18 = vector.shape_cast %17 : vector<1x1x16x32xf32> to vector<1x16x32xf32>
    %19 = vector.broadcast %0 : vector<1x1x32xf32> to vector<1x16x32xf32>
    %20 = arith.mulf %18, %19 : vector<1x16x32xf32>
    %21 = vector.broadcast %1 : vector<1x1x32xf32> to vector<1x16x32xf32>
    %22 = arith.addf %20, %21 : vector<1x16x32xf32>
    %23 = arith.negf %22 : vector<1x16x32xf32>
    %24 = math.exp %23 : vector<1x16x32xf32>
    %cst_19 = arith.constant 1.000000e+00 : f32
    %25 = vector.broadcast %cst_19 : f32 to vector<1x16x32xf32>
    %26 = arith.addf %25, %24 : vector<1x16x32xf32>
    %27 = arith.divf %25, %26 : vector<1x16x32xf32>
    %28 = arith.mulf %22, %27 : vector<1x16x32xf32>
    %c0_20 = arith.constant 0 : index
    %c0_21 = arith.constant 0 : index
    %c0_22 = arith.constant 0 : index
    %c0_23 = arith.constant 0 : index
    %29 = vector.load %arg6[%c0_20, %c0_21, %c0_22, %c0_23] : memref<1x1x16x32xf32, #tpu.memory_space<vmem>>, vector<1x1x16x32xf32>
    %30 = vector.shape_cast %29 : vector<1x1x16x32xf32> to vector<1x16x32xf32>
    %31 = vector.broadcast %0 : vector<1x1x32xf32> to vector<1x16x32xf32>
    %32 = arith.mulf %30, %31 : vector<1x16x32xf32>
    %33 = vector.broadcast %1 : vector<1x1x32xf32> to vector<1x16x32xf32>
    %34 = arith.addf %32, %33 : vector<1x16x32xf32>
    %35 = arith.negf %34 : vector<1x16x32xf32>
    %36 = math.exp %35 : vector<1x16x32xf32>
    %cst_24 = arith.constant 1.000000e+00 : f32
    %37 = vector.broadcast %cst_24 : f32 to vector<1x16x32xf32>
    %38 = arith.addf %37, %36 : vector<1x16x32xf32>
    %39 = arith.divf %37, %38 : vector<1x16x32xf32>
    %40 = arith.mulf %34, %39 : vector<1x16x32xf32>
    %c0_i32 = arith.constant 0 : i32
    %41 = arith.cmpi sgt, %arg1, %c0_i32 : i32
    %cst_25 = arith.constant 0.000000e+00 : f32
    %42 = vector.broadcast %cst_25 : f32 to vector<1x16x32xf32>
    %43 = arith.select %41, %28, %42 : vector<1x16x32xf32>
    %c1_i32 = arith.constant 1 : i32
    %44 = arith.cmpi slt, %arg1, %c1_i32 : i32
    %cst_26 = arith.constant 0.000000e+00 : f32
    %45 = vector.broadcast %cst_26 : f32 to vector<1x16x32xf32>
    %46 = arith.select %44, %40, %45 : vector<1x16x32xf32>
    %c1 = arith.constant 1 : index
    %c1_27 = arith.constant 1 : index
    %c0_28 = arith.constant 0 : index
    %47 = vector.load %arg10[%c1, %c1_27, %c0_28] : memref<10x18x32xf32, #tpu.memory_space<vmem>>, vector<8x16x32xf32>
    tpu.vector_store %arg10[%c1, %c1_27, %c0_28], %16 {strides = array<i32>} : memref<10x18x32xf32, #tpu.memory_space<vmem>>, vector<8x16x32xf32>,
    %c0_29 = arith.constant 0 : index
    %c1_30 = arith.constant 1 : index
    %c0_31 = arith.constant 0 : index
    %48 = vector.load %arg10[%c0_29, %c1_30, %c0_31] : memref<10x18x32xf32, #tpu.memory_space<vmem>>, vector<1x16x32xf32>
    tpu.vector_store %arg10[%c0_29, %c1_30, %c0_31], %43 {strides = array<i32>} : memref<10x18x32xf32, #tpu.memory_space<vmem>>, vector<1x16x32xf32>,
    %c9 = arith.constant 9 : index
    %c1_32 = arith.constant 1 : index
    %c0_33 = arith.constant 0 : index
    %49 = vector.load %arg10[%c9, %c1_32, %c0_33] : memref<10x18x32xf32, #tpu.memory_space<vmem>>, vector<1x16x32xf32>
    tpu.vector_store %arg10[%c9, %c1_32, %c0_33], %46 {strides = array<i32>} : memref<10x18x32xf32, #tpu.memory_space<vmem>>, vector<1x16x32xf32>,
    %c0_34 = arith.constant 0 : index
    %c0_35 = arith.constant 0 : index
    %c0_36 = arith.constant 0 : index
    %50 = vector.load %arg10[%c0_34, %c0_35, %c0_36] : memref<10x18x32xf32, #tpu.memory_space<vmem>>, vector<8x16x32xf32>
    %51 = vector.shape_cast %50 : vector<8x16x32xf32> to vector<128x32xf32>
    %c0_37 = arith.constant 0 : index
    %c0_38 = arith.constant 0 : index
    %52 = vector.load %arg11[%c0_37, %c0_38] : memref<128x288xf32, #tpu.memory_space<vmem>>, vector<128x32xf32>
    tpu.vector_store %arg11[%c0_37, %c0_38], %51 {strides = array<i32>} : memref<128x288xf32, #tpu.memory_space<vmem>>, vector<128x32xf32>,
    %c0_39 = arith.constant 0 : index
    %c1_40 = arith.constant 1 : index
    %c0_41 = arith.constant 0 : index
    %53 = vector.load %arg10[%c0_39, %c1_40, %c0_41] : memref<10x18x32xf32, #tpu.memory_space<vmem>>, vector<8x16x32xf32>
    %54 = vector.shape_cast %53 : vector<8x16x32xf32> to vector<128x32xf32>
    %c0_42 = arith.constant 0 : index
    %c32 = arith.constant 32 : index
    %55 = vector.load %arg11[%c0_42, %c32] : memref<128x288xf32, #tpu.memory_space<vmem>>, vector<128x32xf32>
    tpu.vector_store %arg11[%c0_42, %c32], %54 {strides = array<i32>} : memref<128x288xf32, #tpu.memory_space<vmem>>, vector<128x32xf32>,
    %c0_43 = arith.constant 0 : index
    %c2 = arith.constant 2 : index
    %c0_44 = arith.constant 0 : index
    %56 = vector.load %arg10[%c0_43, %c2, %c0_44] : memref<10x18x32xf32, #tpu.memory_space<vmem>>, vector<8x16x32xf32>
    %57 = vector.shape_cast %56 : vector<8x16x32xf32> to vector<128x32xf32>
    %c0_45 = arith.constant 0 : index
    %c64 = arith.constant 64 : index
    %58 = vector.load %arg11[%c0_45, %c64] : memref<128x288xf32, #tpu.memory_space<vmem>>, vector<128x32xf32>
    tpu.vector_store %arg11[%c0_45, %c64], %57 {strides = array<i32>} : memref<128x288xf32, #tpu.memory_space<vmem>>, vector<128x32xf32>,
    %c1_46 = arith.constant 1 : index
    %c0_47 = arith.constant 0 : index
    %c0_48 = arith.constant 0 : index
    %59 = vector.load %arg10[%c1_46, %c0_47, %c0_48] : memref<10x18x32xf32, #tpu.memory_space<vmem>>, vector<8x16x32xf32>
    %60 = vector.shape_cast %59 : vector<8x16x32xf32> to vector<128x32xf32>
    %c0_49 = arith.constant 0 : index
    %c96 = arith.constant 96 : index
    %61 = vector.load %arg11[%c0_49, %c96] : memref<128x288xf32, #tpu.memory_space<vmem>>, vector<128x32xf32>
    tpu.vector_store %arg11[%c0_49, %c96], %60 {strides = array<i32>} : memref<128x288xf32, #tpu.memory_space<vmem>>, vector<128x32xf32>,
    %c1_50 = arith.constant 1 : index
    %c1_51 = arith.constant 1 : index
    %c0_52 = arith.constant 0 : index
    %62 = vector.load %arg10[%c1_50, %c1_51, %c0_52] : memref<10x18x32xf32, #tpu.memory_space<vmem>>, vector<8x16x32xf32>
    %63 = vector.shape_cast %62 : vector<8x16x32xf32> to vector<128x32xf32>
    %c0_53 = arith.constant 0 : index
    %c128 = arith.constant 128 : index
    %64 = vector.load %arg11[%c0_53, %c128] : memref<128x288xf32, #tpu.memory_space<vmem>>, vector<128x32xf32>
    tpu.vector_store %arg11[%c0_53, %c128], %63 {strides = array<i32>} : memref<128x288xf32, #tpu.memory_space<vmem>>, vector<128x32xf32>,
    %c1_54 = arith.constant 1 : index
    %c2_55 = arith.constant 2 : index
    %c0_56 = arith.constant 0 : index
    %65 = vector.load %arg10[%c1_54, %c2_55, %c0_56] : memref<10x18x32xf32, #tpu.memory_space<vmem>>, vector<8x16x32xf32>
    %66 = vector.shape_cast %65 : vector<8x16x32xf32> to vector<128x32xf32>
    %c0_57 = arith.constant 0 : index
    %c160 = arith.constant 160 : index
    %67 = vector.load %arg11[%c0_57, %c160] : memref<128x288xf32, #tpu.memory_space<vmem>>, vector<128x32xf32>
    tpu.vector_store %arg11[%c0_57, %c160], %66 {strides = array<i32>} : memref<128x288xf32, #tpu.memory_space<vmem>>, vector<128x32xf32>,
    %c2_58 = arith.constant 2 : index
    %c0_59 = arith.constant 0 : index
    %c0_60 = arith.constant 0 : index
    %68 = vector.load %arg10[%c2_58, %c0_59, %c0_60] : memref<10x18x32xf32, #tpu.memory_space<vmem>>, vector<8x16x32xf32>
    %69 = vector.shape_cast %68 : vector<8x16x32xf32> to vector<128x32xf32>
    %c0_61 = arith.constant 0 : index
    %c192 = arith.constant 192 : index
    %70 = vector.load %arg11[%c0_61, %c192] : memref<128x288xf32, #tpu.memory_space<vmem>>, vector<128x32xf32>
    tpu.vector_store %arg11[%c0_61, %c192], %69 {strides = array<i32>} : memref<128x288xf32, #tpu.memory_space<vmem>>, vector<128x32xf32>,
    %c2_62 = arith.constant 2 : index
    %c1_63 = arith.constant 1 : index
    %c0_64 = arith.constant 0 : index
    %71 = vector.load %arg10[%c2_62, %c1_63, %c0_64] : memref<10x18x32xf32, #tpu.memory_space<vmem>>, vector<8x16x32xf32>
    %72 = vector.shape_cast %71 : vector<8x16x32xf32> to vector<128x32xf32>
    %c0_65 = arith.constant 0 : index
    %c224 = arith.constant 224 : index
    %73 = vector.load %arg11[%c0_65, %c224] : memref<128x288xf32, #tpu.memory_space<vmem>>, vector<128x32xf32>
    tpu.vector_store %arg11[%c0_65, %c224], %72 {strides = array<i32>} : memref<128x288xf32, #tpu.memory_space<vmem>>, vector<128x32xf32>,
    %c2_66 = arith.constant 2 : index
    %c2_67 = arith.constant 2 : index
    %c0_68 = arith.constant 0 : index
    %74 = vector.load %arg10[%c2_66, %c2_67, %c0_68] : memref<10x18x32xf32, #tpu.memory_space<vmem>>, vector<8x16x32xf32>
    %75 = vector.shape_cast %74 : vector<8x16x32xf32> to vector<128x32xf32>
    %c0_69 = arith.constant 0 : index
    %c256 = arith.constant 256 : index
    %76 = vector.load %arg11[%c0_69, %c256] : memref<128x288xf32, #tpu.memory_space<vmem>>, vector<128x32xf32>
    tpu.vector_store %arg11[%c0_69, %c256], %75 {strides = array<i32>} : memref<128x288xf32, #tpu.memory_space<vmem>>, vector<128x32xf32>,
    %c0_70 = arith.constant 0 : index
    %c0_71 = arith.constant 0 : index
    %77 = vector.load %arg11[%c0_70, %c0_71] : memref<128x288xf32, #tpu.memory_space<vmem>>, vector<128x288xf32>
    %c0_72 = arith.constant 0 : index
    %c0_73 = arith.constant 0 : index
    %78 = vector.load %arg7[%c0_72, %c0_73] : memref<288x64xf32, #tpu.memory_space<vmem>>, vector<288x64xf32>
    %cst_74 = arith.constant dense<0.000000e+00> : vector<128x64xf32>
    %79 = tpu.matmul %77, %78, %cst_74 {dimension_numbers = #tpu.dot_dimension_numbers<[1], [0], [0], [1], [0, 0, 1, 1], [], []>} : vector<128x288xf32>, vector<288x64xf32>, vector<128x64xf32> -> vector<128x64xf32>
    %c0_75 = arith.constant 0 : index
    %c0_76 = arith.constant 0 : index
    %80 = vector.load %arg8[%c0_75, %c0_76] : memref<1x64xf32, #tpu.memory_space<vmem>>, vector<1x64xf32>
    %81 = vector.broadcast %80 : vector<1x64xf32> to vector<128x64xf32>
    %82 = arith.addf %79, %81 : vector<128x64xf32>
    %83 = vector.shape_cast %82 : vector<128x64xf32> to vector<1x8x16x64xf32>
    %c0_77 = arith.constant 0 : index
    %c0_78 = arith.constant 0 : index
    %c0_79 = arith.constant 0 : index
    %c0_80 = arith.constant 0 : index
    %84 = vector.load %arg9[%c0_77, %c0_78, %c0_79, %c0_80] : memref<1x8x16x64xf32, #tpu.memory_space<vmem>>, vector<1x8x16x64xf32>
    tpu.vector_store %arg9[%c0_77, %c0_78, %c0_79, %c0_80], %83 {strides = array<i32>} : memref<1x8x16x64xf32, #tpu.memory_space<vmem>>, vector<1x8x16x64xf32>,
    return
  }
  func.func @transform_0(%arg0: i32, %arg1: i32) -> (i32, i32, i32) {
    %c0_i32 = arith.constant 0 : i32
    %c0_i32_0 = arith.constant 0 : i32
    %c0_i32_1 = arith.constant 0 : i32
    return %arg0, %c0_i32, %c0_i32_0 : i32, i32, i32
  }
  func.func @transform_1(%arg0: i32, %arg1: i32) -> (i32, i32, i32) {
    %c0_i32 = arith.constant 0 : i32
    %c0_i32_0 = arith.constant 0 : i32
    %c0_i32_1 = arith.constant 0 : i32
    return %arg0, %c0_i32, %c0_i32_0 : i32, i32, i32
  }
  func.func @transform_2(%arg0: i32, %arg1: i32) -> (i32, i32, i32, i32) {
    %c8_i32 = arith.constant 8 : i32
    %0 = arith.muli %arg1, %c8_i32 : i32
    %c1_i32 = arith.constant 1 : i32
    %1 = arith.subi %0, %c1_i32 : i32
    %c0_i32 = arith.constant 0 : i32
    %2 = arith.maxsi %1, %c0_i32 : i32
    %c0_i32_0 = arith.constant 0 : i32
    %c0_i32_1 = arith.constant 0 : i32
    %c0_i32_2 = arith.constant 0 : i32
    return %arg0, %2, %c0_i32_0, %c0_i32_1 : i32, i32, i32, i32
  }
  func.func @transform_3(%arg0: i32, %arg1: i32) -> (i32, i32, i32, i32) {
    %c0_i32 = arith.constant 0 : i32
    %c0_i32_0 = arith.constant 0 : i32
    %c0_i32_1 = arith.constant 0 : i32
    return %arg0, %arg1, %c0_i32, %c0_i32_0 : i32, i32, i32, i32
  }
  func.func @transform_4(%arg0: i32, %arg1: i32) -> (i32, i32, i32, i32) {
    %c8_i32 = arith.constant 8 : i32
    %0 = arith.muli %arg1, %c8_i32 : i32
    %c8_i32_0 = arith.constant 8 : i32
    %1 = arith.addi %0, %c8_i32_0 : i32
    %c15_i32 = arith.constant 15 : i32
    %2 = arith.minsi %1, %c15_i32 : i32
    %c0_i32 = arith.constant 0 : i32
    %c0_i32_1 = arith.constant 0 : i32
    %c0_i32_2 = arith.constant 0 : i32
    return %arg0, %2, %c0_i32, %c0_i32_1 : i32, i32, i32, i32
  }
  func.func @transform_5(%arg0: i32, %arg1: i32) -> (i32, i32) {
    %c0_i32 = arith.constant 0 : i32
    %c0_i32_0 = arith.constant 0 : i32
    %c0_i32_1 = arith.constant 0 : i32
    return %c0_i32, %c0_i32_0 : i32, i32
  }
  func.func @transform_6(%arg0: i32, %arg1: i32) -> (i32, i32) {
    %c0_i32 = arith.constant 0 : i32
    %c0_i32_0 = arith.constant 0 : i32
    %c0_i32_1 = arith.constant 0 : i32
    return %c0_i32, %c0_i32_0 : i32, i32
  }
  func.func @transform_7(%arg0: i32, %arg1: i32) -> (i32, i32, i32, i32) {
    %c0_i32 = arith.constant 0 : i32
    %c0_i32_0 = arith.constant 0 : i32
    %c0_i32_1 = arith.constant 0 : i32
    return %arg0, %arg1, %c0_i32, %c0_i32_0 : i32, i32, i32, i32
  }
}

module attributes {stable_mosaic.version = 11 : i64} {
  func.func @_gn_silu_conv3x3_kernel(%arg0: i32, %arg1: i32, %arg2: memref<1x1x64xf32, #tpu.memory_space<vmem>>, %arg3: memref<1x1x64xf32, #tpu.memory_space<vmem>>, %arg4: memref<1x1x16x64xf32, #tpu.memory_space<vmem>>, %arg5: memref<1x8x16x64xf32, #tpu.memory_space<vmem>>, %arg6: memref<1x1x16x64xf32, #tpu.memory_space<vmem>>, %arg7: memref<576x64xf32, #tpu.memory_space<vmem>>, %arg8: memref<1x64xf32, #tpu.memory_space<vmem>>, %arg9: memref<1x8x16x32xf32, #tpu.memory_space<vmem>>, %arg10: memref<32x64xf32, #tpu.memory_space<vmem>>, %arg11: memref<1x64xf32, #tpu.memory_space<vmem>>, %arg12: memref<1x8x16x64xf32, #tpu.memory_space<vmem>>, %arg13: memref<10x18x64xf32, #tpu.memory_space<vmem>>, %arg14: memref<128x576xf32, #tpu.memory_space<vmem>>) attributes {dimension_semantics = [#tpu.dimension_semantics<parallel>, #tpu.dimension_semantics<parallel>], iteration_bounds = array<i64: 2, 2>, scalar_prefetch = 0 : i64, scratch_operands = 2 : i64, tpu.core_type = #tpu.core_type<tc>, window_params = [{transform_indices = @transform_0, window_bounds = array<i64: 1, 1, 64>}, {transform_indices = @transform_1, window_bounds = array<i64: 1, 1, 64>}, {transform_indices = @transform_2, window_bounds = array<i64: 1, 1, 16, 64>}, {transform_indices = @transform_3, window_bounds = array<i64: 1, 8, 16, 64>}, {transform_indices = @transform_4, window_bounds = array<i64: 1, 1, 16, 64>}, {pipeline_mode = #tpu.pipeline_mode<synchronous>, transform_indices = @transform_5, window_bounds = array<i64: 576, 64>}, {pipeline_mode = #tpu.pipeline_mode<synchronous>, transform_indices = @transform_6, window_bounds = array<i64: 1, 64>}, {transform_indices = @transform_7, window_bounds = array<i64: 1, 8, 16, 32>}, {pipeline_mode = #tpu.pipeline_mode<synchronous>, transform_indices = @transform_8, window_bounds = array<i64: 32, 64>}, {pipeline_mode = #tpu.pipeline_mode<synchronous>, transform_indices = @transform_9, window_bounds = array<i64: 1, 64>}, {transform_indices = @transform_10, window_bounds = array<i64: 1, 8, 16, 64>}]} {
    %c0 = arith.constant 0 : index
    %c0_0 = arith.constant 0 : index
    %c0_1 = arith.constant 0 : index
    %0 = vector.load %arg2[%c0, %c0_0, %c0_1] : memref<1x1x64xf32, #tpu.memory_space<vmem>>, vector<1x1x64xf32>
    %c0_2 = arith.constant 0 : index
    %c0_3 = arith.constant 0 : index
    %c0_4 = arith.constant 0 : index
    %1 = vector.load %arg3[%c0_2, %c0_3, %c0_4] : memref<1x1x64xf32, #tpu.memory_space<vmem>>, vector<1x1x64xf32>
    %cst = arith.constant 0.000000e+00 : f32
    %2 = vector.broadcast %cst : f32 to vector<10x1x64xf32>
    %c0_5 = arith.constant 0 : index
    %c0_6 = arith.constant 0 : index
    %c0_7 = arith.constant 0 : index
    %3 = vector.load %arg13[%c0_5, %c0_6, %c0_7] : memref<10x18x64xf32, #tpu.memory_space<vmem>>, vector<10x1x64xf32>
    tpu.vector_store %arg13[%c0_5, %c0_6, %c0_7], %2 {strides = array<i32>} : memref<10x18x64xf32, #tpu.memory_space<vmem>>, vector<10x1x64xf32>,
    %c0_8 = arith.constant 0 : index
    %c17 = arith.constant 17 : index
    %c0_9 = arith.constant 0 : index
    %4 = vector.load %arg13[%c0_8, %c17, %c0_9] : memref<10x18x64xf32, #tpu.memory_space<vmem>>, vector<10x1x64xf32>
    tpu.vector_store %arg13[%c0_8, %c17, %c0_9], %2 {strides = array<i32>} : memref<10x18x64xf32, #tpu.memory_space<vmem>>, vector<10x1x64xf32>,
    %c0_10 = arith.constant 0 : index
    %c0_11 = arith.constant 0 : index
    %c0_12 = arith.constant 0 : index
    %c0_13 = arith.constant 0 : index
    %5 = vector.load %arg5[%c0_10, %c0_11, %c0_12, %c0_13] : memref<1x8x16x64xf32, #tpu.memory_space<vmem>>, vector<1x8x16x64xf32>
    %6 = vector.shape_cast %5 : vector<1x8x16x64xf32> to vector<8x16x64xf32>
    %7 = vector.broadcast %0 : vector<1x1x64xf32> to vector<8x16x64xf32>
    %8 = arith.mulf %6, %7 : vector<8x16x64xf32>
    %9 = vector.broadcast %1 : vector<1x1x64xf32> to vector<8x16x64xf32>
    %10 = arith.addf %8, %9 : vector<8x16x64xf32>
    %11 = arith.negf %10 : vector<8x16x64xf32>
    %12 = math.exp %11 : vector<8x16x64xf32>
    %cst_14 = arith.constant 1.000000e+00 : f32
    %13 = vector.broadcast %cst_14 : f32 to vector<8x16x64xf32>
    %14 = arith.addf %13, %12 : vector<8x16x64xf32>
    %15 = arith.divf %13, %14 : vector<8x16x64xf32>
    %16 = arith.mulf %10, %15 : vector<8x16x64xf32>
    %c0_15 = arith.constant 0 : index
    %c0_16 = arith.constant 0 : index
    %c0_17 = arith.constant 0 : index
    %c0_18 = arith.constant 0 : index
    %17 = vector.load %arg4[%c0_15, %c0_16, %c0_17, %c0_18] : memref<1x1x16x64xf32, #tpu.memory_space<vmem>>, vector<1x1x16x64xf32>
    %18 = vector.shape_cast %17 : vector<1x1x16x64xf32> to vector<1x16x64xf32>
    %19 = vector.broadcast %0 : vector<1x1x64xf32> to vector<1x16x64xf32>
    %20 = arith.mulf %18, %19 : vector<1x16x64xf32>
    %21 = vector.broadcast %1 : vector<1x1x64xf32> to vector<1x16x64xf32>
    %22 = arith.addf %20, %21 : vector<1x16x64xf32>
    %23 = arith.negf %22 : vector<1x16x64xf32>
    %24 = math.exp %23 : vector<1x16x64xf32>
    %cst_19 = arith.constant 1.000000e+00 : f32
    %25 = vector.broadcast %cst_19 : f32 to vector<1x16x64xf32>
    %26 = arith.addf %25, %24 : vector<1x16x64xf32>
    %27 = arith.divf %25, %26 : vector<1x16x64xf32>
    %28 = arith.mulf %22, %27 : vector<1x16x64xf32>
    %c0_20 = arith.constant 0 : index
    %c0_21 = arith.constant 0 : index
    %c0_22 = arith.constant 0 : index
    %c0_23 = arith.constant 0 : index
    %29 = vector.load %arg6[%c0_20, %c0_21, %c0_22, %c0_23] : memref<1x1x16x64xf32, #tpu.memory_space<vmem>>, vector<1x1x16x64xf32>
    %30 = vector.shape_cast %29 : vector<1x1x16x64xf32> to vector<1x16x64xf32>
    %31 = vector.broadcast %0 : vector<1x1x64xf32> to vector<1x16x64xf32>
    %32 = arith.mulf %30, %31 : vector<1x16x64xf32>
    %33 = vector.broadcast %1 : vector<1x1x64xf32> to vector<1x16x64xf32>
    %34 = arith.addf %32, %33 : vector<1x16x64xf32>
    %35 = arith.negf %34 : vector<1x16x64xf32>
    %36 = math.exp %35 : vector<1x16x64xf32>
    %cst_24 = arith.constant 1.000000e+00 : f32
    %37 = vector.broadcast %cst_24 : f32 to vector<1x16x64xf32>
    %38 = arith.addf %37, %36 : vector<1x16x64xf32>
    %39 = arith.divf %37, %38 : vector<1x16x64xf32>
    %40 = arith.mulf %34, %39 : vector<1x16x64xf32>
    %c0_i32 = arith.constant 0 : i32
    %41 = arith.cmpi sgt, %arg1, %c0_i32 : i32
    %cst_25 = arith.constant 0.000000e+00 : f32
    %42 = vector.broadcast %cst_25 : f32 to vector<1x16x64xf32>
    %43 = arith.select %41, %28, %42 : vector<1x16x64xf32>
    %c1_i32 = arith.constant 1 : i32
    %44 = arith.cmpi slt, %arg1, %c1_i32 : i32
    %cst_26 = arith.constant 0.000000e+00 : f32
    %45 = vector.broadcast %cst_26 : f32 to vector<1x16x64xf32>
    %46 = arith.select %44, %40, %45 : vector<1x16x64xf32>
    %c1 = arith.constant 1 : index
    %c1_27 = arith.constant 1 : index
    %c0_28 = arith.constant 0 : index
    %47 = vector.load %arg13[%c1, %c1_27, %c0_28] : memref<10x18x64xf32, #tpu.memory_space<vmem>>, vector<8x16x64xf32>
    tpu.vector_store %arg13[%c1, %c1_27, %c0_28], %16 {strides = array<i32>} : memref<10x18x64xf32, #tpu.memory_space<vmem>>, vector<8x16x64xf32>,
    %c0_29 = arith.constant 0 : index
    %c1_30 = arith.constant 1 : index
    %c0_31 = arith.constant 0 : index
    %48 = vector.load %arg13[%c0_29, %c1_30, %c0_31] : memref<10x18x64xf32, #tpu.memory_space<vmem>>, vector<1x16x64xf32>
    tpu.vector_store %arg13[%c0_29, %c1_30, %c0_31], %43 {strides = array<i32>} : memref<10x18x64xf32, #tpu.memory_space<vmem>>, vector<1x16x64xf32>,
    %c9 = arith.constant 9 : index
    %c1_32 = arith.constant 1 : index
    %c0_33 = arith.constant 0 : index
    %49 = vector.load %arg13[%c9, %c1_32, %c0_33] : memref<10x18x64xf32, #tpu.memory_space<vmem>>, vector<1x16x64xf32>
    tpu.vector_store %arg13[%c9, %c1_32, %c0_33], %46 {strides = array<i32>} : memref<10x18x64xf32, #tpu.memory_space<vmem>>, vector<1x16x64xf32>,
    %c0_34 = arith.constant 0 : index
    %c0_35 = arith.constant 0 : index
    %c0_36 = arith.constant 0 : index
    %50 = vector.load %arg13[%c0_34, %c0_35, %c0_36] : memref<10x18x64xf32, #tpu.memory_space<vmem>>, vector<8x16x64xf32>
    %51 = vector.shape_cast %50 : vector<8x16x64xf32> to vector<128x64xf32>
    %c0_37 = arith.constant 0 : index
    %c0_38 = arith.constant 0 : index
    %52 = vector.load %arg14[%c0_37, %c0_38] : memref<128x576xf32, #tpu.memory_space<vmem>>, vector<128x64xf32>
    tpu.vector_store %arg14[%c0_37, %c0_38], %51 {strides = array<i32>} : memref<128x576xf32, #tpu.memory_space<vmem>>, vector<128x64xf32>,
    %c0_39 = arith.constant 0 : index
    %c1_40 = arith.constant 1 : index
    %c0_41 = arith.constant 0 : index
    %53 = vector.load %arg13[%c0_39, %c1_40, %c0_41] : memref<10x18x64xf32, #tpu.memory_space<vmem>>, vector<8x16x64xf32>
    %54 = vector.shape_cast %53 : vector<8x16x64xf32> to vector<128x64xf32>
    %c0_42 = arith.constant 0 : index
    %c64 = arith.constant 64 : index
    %55 = vector.load %arg14[%c0_42, %c64] : memref<128x576xf32, #tpu.memory_space<vmem>>, vector<128x64xf32>
    tpu.vector_store %arg14[%c0_42, %c64], %54 {strides = array<i32>} : memref<128x576xf32, #tpu.memory_space<vmem>>, vector<128x64xf32>,
    %c0_43 = arith.constant 0 : index
    %c2 = arith.constant 2 : index
    %c0_44 = arith.constant 0 : index
    %56 = vector.load %arg13[%c0_43, %c2, %c0_44] : memref<10x18x64xf32, #tpu.memory_space<vmem>>, vector<8x16x64xf32>
    %57 = vector.shape_cast %56 : vector<8x16x64xf32> to vector<128x64xf32>
    %c0_45 = arith.constant 0 : index
    %c128 = arith.constant 128 : index
    %58 = vector.load %arg14[%c0_45, %c128] : memref<128x576xf32, #tpu.memory_space<vmem>>, vector<128x64xf32>
    tpu.vector_store %arg14[%c0_45, %c128], %57 {strides = array<i32>} : memref<128x576xf32, #tpu.memory_space<vmem>>, vector<128x64xf32>,
    %c1_46 = arith.constant 1 : index
    %c0_47 = arith.constant 0 : index
    %c0_48 = arith.constant 0 : index
    %59 = vector.load %arg13[%c1_46, %c0_47, %c0_48] : memref<10x18x64xf32, #tpu.memory_space<vmem>>, vector<8x16x64xf32>
    %60 = vector.shape_cast %59 : vector<8x16x64xf32> to vector<128x64xf32>
    %c0_49 = arith.constant 0 : index
    %c192 = arith.constant 192 : index
    %61 = vector.load %arg14[%c0_49, %c192] : memref<128x576xf32, #tpu.memory_space<vmem>>, vector<128x64xf32>
    tpu.vector_store %arg14[%c0_49, %c192], %60 {strides = array<i32>} : memref<128x576xf32, #tpu.memory_space<vmem>>, vector<128x64xf32>,
    %c1_50 = arith.constant 1 : index
    %c1_51 = arith.constant 1 : index
    %c0_52 = arith.constant 0 : index
    %62 = vector.load %arg13[%c1_50, %c1_51, %c0_52] : memref<10x18x64xf32, #tpu.memory_space<vmem>>, vector<8x16x64xf32>
    %63 = vector.shape_cast %62 : vector<8x16x64xf32> to vector<128x64xf32>
    %c0_53 = arith.constant 0 : index
    %c256 = arith.constant 256 : index
    %64 = vector.load %arg14[%c0_53, %c256] : memref<128x576xf32, #tpu.memory_space<vmem>>, vector<128x64xf32>
    tpu.vector_store %arg14[%c0_53, %c256], %63 {strides = array<i32>} : memref<128x576xf32, #tpu.memory_space<vmem>>, vector<128x64xf32>,
    %c1_54 = arith.constant 1 : index
    %c2_55 = arith.constant 2 : index
    %c0_56 = arith.constant 0 : index
    %65 = vector.load %arg13[%c1_54, %c2_55, %c0_56] : memref<10x18x64xf32, #tpu.memory_space<vmem>>, vector<8x16x64xf32>
    %66 = vector.shape_cast %65 : vector<8x16x64xf32> to vector<128x64xf32>
    %c0_57 = arith.constant 0 : index
    %c320 = arith.constant 320 : index
    %67 = vector.load %arg14[%c0_57, %c320] : memref<128x576xf32, #tpu.memory_space<vmem>>, vector<128x64xf32>
    tpu.vector_store %arg14[%c0_57, %c320], %66 {strides = array<i32>} : memref<128x576xf32, #tpu.memory_space<vmem>>, vector<128x64xf32>,
    %c2_58 = arith.constant 2 : index
    %c0_59 = arith.constant 0 : index
    %c0_60 = arith.constant 0 : index
    %68 = vector.load %arg13[%c2_58, %c0_59, %c0_60] : memref<10x18x64xf32, #tpu.memory_space<vmem>>, vector<8x16x64xf32>
    %69 = vector.shape_cast %68 : vector<8x16x64xf32> to vector<128x64xf32>
    %c0_61 = arith.constant 0 : index
    %c384 = arith.constant 384 : index
    %70 = vector.load %arg14[%c0_61, %c384] : memref<128x576xf32, #tpu.memory_space<vmem>>, vector<128x64xf32>
    tpu.vector_store %arg14[%c0_61, %c384], %69 {strides = array<i32>} : memref<128x576xf32, #tpu.memory_space<vmem>>, vector<128x64xf32>,
    %c2_62 = arith.constant 2 : index
    %c1_63 = arith.constant 1 : index
    %c0_64 = arith.constant 0 : index
    %71 = vector.load %arg13[%c2_62, %c1_63, %c0_64] : memref<10x18x64xf32, #tpu.memory_space<vmem>>, vector<8x16x64xf32>
    %72 = vector.shape_cast %71 : vector<8x16x64xf32> to vector<128x64xf32>
    %c0_65 = arith.constant 0 : index
    %c448 = arith.constant 448 : index
    %73 = vector.load %arg14[%c0_65, %c448] : memref<128x576xf32, #tpu.memory_space<vmem>>, vector<128x64xf32>
    tpu.vector_store %arg14[%c0_65, %c448], %72 {strides = array<i32>} : memref<128x576xf32, #tpu.memory_space<vmem>>, vector<128x64xf32>,
    %c2_66 = arith.constant 2 : index
    %c2_67 = arith.constant 2 : index
    %c0_68 = arith.constant 0 : index
    %74 = vector.load %arg13[%c2_66, %c2_67, %c0_68] : memref<10x18x64xf32, #tpu.memory_space<vmem>>, vector<8x16x64xf32>
    %75 = vector.shape_cast %74 : vector<8x16x64xf32> to vector<128x64xf32>
    %c0_69 = arith.constant 0 : index
    %c512 = arith.constant 512 : index
    %76 = vector.load %arg14[%c0_69, %c512] : memref<128x576xf32, #tpu.memory_space<vmem>>, vector<128x64xf32>
    tpu.vector_store %arg14[%c0_69, %c512], %75 {strides = array<i32>} : memref<128x576xf32, #tpu.memory_space<vmem>>, vector<128x64xf32>,
    %c0_70 = arith.constant 0 : index
    %c0_71 = arith.constant 0 : index
    %77 = vector.load %arg14[%c0_70, %c0_71] : memref<128x576xf32, #tpu.memory_space<vmem>>, vector<128x576xf32>
    %c0_72 = arith.constant 0 : index
    %c0_73 = arith.constant 0 : index
    %78 = vector.load %arg7[%c0_72, %c0_73] : memref<576x64xf32, #tpu.memory_space<vmem>>, vector<576x64xf32>
    %cst_74 = arith.constant dense<0.000000e+00> : vector<128x64xf32>
    %79 = tpu.matmul %77, %78, %cst_74 {dimension_numbers = #tpu.dot_dimension_numbers<[1], [0], [0], [1], [0, 0, 1, 1], [], []>} : vector<128x576xf32>, vector<576x64xf32>, vector<128x64xf32> -> vector<128x64xf32>
    %c0_75 = arith.constant 0 : index
    %c0_76 = arith.constant 0 : index
    %80 = vector.load %arg8[%c0_75, %c0_76] : memref<1x64xf32, #tpu.memory_space<vmem>>, vector<1x64xf32>
    %81 = vector.broadcast %80 : vector<1x64xf32> to vector<128x64xf32>
    %82 = arith.addf %79, %81 : vector<128x64xf32>
    %c0_77 = arith.constant 0 : index
    %c0_78 = arith.constant 0 : index
    %c0_79 = arith.constant 0 : index
    %c0_80 = arith.constant 0 : index
    %83 = vector.load %arg9[%c0_77, %c0_78, %c0_79, %c0_80] : memref<1x8x16x32xf32, #tpu.memory_space<vmem>>, vector<1x8x16x32xf32>
    %84 = vector.shape_cast %83 : vector<1x8x16x32xf32> to vector<128x32xf32>
    %c0_81 = arith.constant 0 : index
    %c0_82 = arith.constant 0 : index
    %85 = vector.load %arg10[%c0_81, %c0_82] : memref<32x64xf32, #tpu.memory_space<vmem>>, vector<32x64xf32>
    %cst_83 = arith.constant dense<0.000000e+00> : vector<128x64xf32>
    %86 = tpu.matmul %84, %85, %cst_83 {dimension_numbers = #tpu.dot_dimension_numbers<[1], [0], [0], [1], [0, 0, 1, 1], [], []>} : vector<128x32xf32>, vector<32x64xf32>, vector<128x64xf32> -> vector<128x64xf32>
    %87 = arith.addf %82, %86 : vector<128x64xf32>
    %c0_84 = arith.constant 0 : index
    %c0_85 = arith.constant 0 : index
    %88 = vector.load %arg11[%c0_84, %c0_85] : memref<1x64xf32, #tpu.memory_space<vmem>>, vector<1x64xf32>
    %89 = vector.broadcast %88 : vector<1x64xf32> to vector<128x64xf32>
    %90 = arith.addf %87, %89 : vector<128x64xf32>
    %91 = vector.shape_cast %90 : vector<128x64xf32> to vector<1x8x16x64xf32>
    %c0_86 = arith.constant 0 : index
    %c0_87 = arith.constant 0 : index
    %c0_88 = arith.constant 0 : index
    %c0_89 = arith.constant 0 : index
    %92 = vector.load %arg12[%c0_86, %c0_87, %c0_88, %c0_89] : memref<1x8x16x64xf32, #tpu.memory_space<vmem>>, vector<1x8x16x64xf32>
    tpu.vector_store %arg12[%c0_86, %c0_87, %c0_88, %c0_89], %91 {strides = array<i32>} : memref<1x8x16x64xf32, #tpu.memory_space<vmem>>, vector<1x8x16x64xf32>,
    return
  }
  func.func @transform_0(%arg0: i32, %arg1: i32) -> (i32, i32, i32) {
    %c0_i32 = arith.constant 0 : i32
    %c0_i32_0 = arith.constant 0 : i32
    %c0_i32_1 = arith.constant 0 : i32
    return %arg0, %c0_i32, %c0_i32_0 : i32, i32, i32
  }
  func.func @transform_1(%arg0: i32, %arg1: i32) -> (i32, i32, i32) {
    %c0_i32 = arith.constant 0 : i32
    %c0_i32_0 = arith.constant 0 : i32
    %c0_i32_1 = arith.constant 0 : i32
    return %arg0, %c0_i32, %c0_i32_0 : i32, i32, i32
  }
  func.func @transform_2(%arg0: i32, %arg1: i32) -> (i32, i32, i32, i32) {
    %c8_i32 = arith.constant 8 : i32
    %0 = arith.muli %arg1, %c8_i32 : i32
    %c1_i32 = arith.constant 1 : i32
    %1 = arith.subi %0, %c1_i32 : i32
    %c0_i32 = arith.constant 0 : i32
    %2 = arith.maxsi %1, %c0_i32 : i32
    %c0_i32_0 = arith.constant 0 : i32
    %c0_i32_1 = arith.constant 0 : i32
    %c0_i32_2 = arith.constant 0 : i32
    return %arg0, %2, %c0_i32_0, %c0_i32_1 : i32, i32, i32, i32
  }
  func.func @transform_3(%arg0: i32, %arg1: i32) -> (i32, i32, i32, i32) {
    %c0_i32 = arith.constant 0 : i32
    %c0_i32_0 = arith.constant 0 : i32
    %c0_i32_1 = arith.constant 0 : i32
    return %arg0, %arg1, %c0_i32, %c0_i32_0 : i32, i32, i32, i32
  }
  func.func @transform_4(%arg0: i32, %arg1: i32) -> (i32, i32, i32, i32) {
    %c8_i32 = arith.constant 8 : i32
    %0 = arith.muli %arg1, %c8_i32 : i32
    %c8_i32_0 = arith.constant 8 : i32
    %1 = arith.addi %0, %c8_i32_0 : i32
    %c15_i32 = arith.constant 15 : i32
    %2 = arith.minsi %1, %c15_i32 : i32
    %c0_i32 = arith.constant 0 : i32
    %c0_i32_1 = arith.constant 0 : i32
    %c0_i32_2 = arith.constant 0 : i32
    return %arg0, %2, %c0_i32, %c0_i32_1 : i32, i32, i32, i32
  }
  func.func @transform_5(%arg0: i32, %arg1: i32) -> (i32, i32) {
    %c0_i32 = arith.constant 0 : i32
    %c0_i32_0 = arith.constant 0 : i32
    %c0_i32_1 = arith.constant 0 : i32
    return %c0_i32, %c0_i32_0 : i32, i32
  }
  func.func @transform_6(%arg0: i32, %arg1: i32) -> (i32, i32) {
    %c0_i32 = arith.constant 0 : i32
    %c0_i32_0 = arith.constant 0 : i32
    %c0_i32_1 = arith.constant 0 : i32
    return %c0_i32, %c0_i32_0 : i32, i32
  }
  func.func @transform_7(%arg0: i32, %arg1: i32) -> (i32, i32, i32, i32) {
    %c0_i32 = arith.constant 0 : i32
    %c0_i32_0 = arith.constant 0 : i32
    %c0_i32_1 = arith.constant 0 : i32
    return %arg0, %arg1, %c0_i32, %c0_i32_0 : i32, i32, i32, i32
  }
  func.func @transform_8(%arg0: i32, %arg1: i32) -> (i32, i32) {
    %c0_i32 = arith.constant 0 : i32
    %c0_i32_0 = arith.constant 0 : i32
    %c0_i32_1 = arith.constant 0 : i32
    return %c0_i32, %c0_i32_0 : i32, i32
  }
  func.func @transform_9(%arg0: i32, %arg1: i32) -> (i32, i32) {
    %c0_i32 = arith.constant 0 : i32
    %c0_i32_0 = arith.constant 0 : i32
    %c0_i32_1 = arith.constant 0 : i32
    return %c0_i32, %c0_i32_0 : i32, i32
  }
  func.func @transform_10(%arg0: i32, %arg1: i32) -> (i32, i32, i32, i32) {
    %c0_i32 = arith.constant 0 : i32
    %c0_i32_0 = arith.constant 0 : i32
    %c0_i32_1 = arith.constant 0 : i32
    return %arg0, %arg1, %c0_i32, %c0_i32_0 : i32, i32, i32, i32
  }
}

</mosaic_0001>

<llo_original>
// kernel: res_block_forward.4
$region0: #{res_block_forward.4}
  #allocation0 [shape = 'u32[]', space=smem, size = 0x4, offset = 0x4, fixed_abs, tag = 'smem constant byte address 0x4 - core index']
  #allocation1 [shape = 'u32[144,128]{1,0:T(1,128)}', space=vmem, size = 0x12000, scoped, tag = 'internal scratch']
  %s0 = inlined_call_operand.hbm [shape: f32[2,16,16,32], index: 0, kind: input, shape index: {}]
  %s1 = inlined_call_operand.vmem [shape: f32[2,1,32], index: 1, kind: output, shape index: {0}]
  %s2 = inlined_call_operand.vmem [shape: f32[2,1,32], index: 2, kind: output, shape index: {1}]
  %3 = xla_tuple %s1, %s2
  %s4 = sld [smem:[#allocation0]]
  $region53: #{res_block_forward.4} parent=0
    _
  %s6 = ssub.s32 1, %s4
  %s7 = scalar_select 0, %s6, %s4
  $region1: #{res_block_forward.4} parent=0
    #allocation2 [shape = 'u8[131072]{0}', space=vmem, size = 0x20000, scoped, tag = 'input window, operand 0']
    #allocation3 [shape = 's32[2]{0}', space=sflag, size = 0x8, scoped, tag = 'scoped memory for res_block_forward.4']
    %8 = vsyncpa [#allocation3], 0
    %s9 = scalar_lea.sflag [#allocation3], 1
    %10 = vsyncpa %s9, 0
    loop: start=0, step=1, limit=6
    $region2: #{res_block_forward.4} parent=1 // loop_pre_header
      _
    $region3: #{res_block_forward.4} parent=1 // loop_header
      %s12 = sphi 0, %s16
      %p13 = scmp.ge.s32.totalorder %s12, 6
      %s19 = sphi 0, %s31
      %s20 = sphi 0, %s27
      %s21 = sphi 0, %s19
      %s22 = sphi 0, %s20
      %s23 = sphi 0, %s21
      %s24 = sphi 0, %s22
      %s36 = sphi 0, %s38
      %s39 = sphi 0, %s36
      %s40 = sphi 0, %s39
      %s56 = sphi 0, %s40
      %s62 = sphi 0, %s64
      %s65 = sphi 0, %s62
      %s66 = sphi 0, %s65
      %s82 = sphi 0, %s66
      %s88 = sphi 0, %s90
      %s91 = sphi 0, %s88
      %s92 = sphi 0, %s91
      %s108 = sphi 0, %s92
    $region4: #{res_block_forward.4} parent=1 // loop_header_branch
      %15 = sbr.rel (%p13) target = $region8
    $region5: #{res_block_forward.4} parent=1 // loop_body
      %s17 = ssub.s32 %s12, 1
      %s18 = ssub.s32 %s12, 2
      %s25 = sadd.s32 1, %s20
      %p26 = scmp.ge.s32.totalorder %s25, 2
      %s27 = scalar_select %p26, 0, %s25
      %s28 = sadd.s32 1, %s19
      %s29 = scalar_select %p26, %s28, %s19
      %p30 = scmp.ge.s32.totalorder %s29, 2
      %s31 = scalar_select %p30, 0, %s29
      %s32 = ssub.s32 %s19, %s31
      %s33 = ssub.s32 %s20, %s27
      %s34 = sor.u32 %s32, %s33
      %p35 = scmp.eq.s32.totalorder %s34, 0
      %s37 = sadd.s32 %s36, 1
      %s38 = scalar_select %p35, %s36, %s37
      %p41 = pneg %p35
      %p42 = scmp.eq.s32.totalorder %s12, 3
      %p43 = por %p41, %p42
      %p44 = scmp.ne.s32.totalorder %s36, %s39
      %p45 = scmp.eq.s32.totalorder %s12, 0
      %p46 = por %p44, %p45
      %p47 = scmp.ne.s32.totalorder %s36, %s39
      %p48 = scmp.eq.s32.totalorder %s17, 3
      %p49 = por %p47, %p48
      %p50 = scmp.ne.s32.totalorder %s39, %s40
      %p51 = scmp.eq.s32.totalorder %s17, 0
      %p52 = por %p50, %p51
      %p53 = scmp.ne.s32.totalorder %s39, %s40
      %p54 = scmp.eq.s32.totalorder %s18, 3
      %p55 = por %p53, %p54
      %p57 = scmp.ne.s32.totalorder %s40, %s56
      %p58 = scmp.eq.s32.totalorder %s18, 0
      %p59 = por %p57, %p58
      %s60 = ssub.s32 %s19, %s31
      %p61 = scmp.eq.s32.totalorder %s60, 0
      %s63 = sadd.s32 %s62, 1
      %s64 = scalar_select %p61, %s62, %s63
      %p67 = pneg %p61
      %p68 = scmp.eq.s32.totalorder %s12, 3
      %p69 = por %p67, %p68
      %p70 = scmp.ne.s32.totalorder %s62, %s65
      %p71 = scmp.eq.s32.totalorder %s12, 0
      %p72 = por %p70, %p71
      %p73 = scmp.ne.s32.totalorder %s62, %s65
      %p74 = scmp.eq.s32.totalorder %s17, 3
      %p75 = por %p73, %p74
      %p76 = scmp.ne.s32.totalorder %s65, %s66
      %p77 = scmp.eq.s32.totalorder %s17, 0
      %p78 = por %p76, %p77
      %p79 = scmp.ne.s32.totalorder %s65, %s66
      %p80 = scmp.eq.s32.totalorder %s18, 3
      %p81 = por %p79, %p80
      %p83 = scmp.ne.s32.totalorder %s66, %s82
      %p84 = scmp.eq.s32.totalorder %s18, 0
      %p85 = por %p83, %p84
      %s86 = ssub.s32 %s19, %s31
      %p87 = scmp.eq.s32.totalorder %s86, 0
      %s89 = sadd.s32 %s88, 1
      %s90 = scalar_select %p87, %s88, %s89
      %p93 = pneg %p87
      %p94 = scmp.eq.s32.totalorder %s12, 3
      %p95 = por %p93, %p94
      %p96 = scmp.ne.s32.totalorder %s88, %s91
      %p97 = scmp.eq.s32.totalorder %s12, 0
      %p98 = por %p96, %p97
      %p99 = scmp.ne.s32.totalorder %s88, %s91
      %p100 = scmp.eq.s32.totalorder %s17, 3
      %p101 = por %p99, %p100
      %p102 = scmp.ne.s32.totalorder %s91, %s92
      %p103 = scmp.eq.s32.totalorder %s17, 0
      %p104 = por %p102, %p103
      %p105 = scmp.ne.s32.totalorder %s91, %s92
      %p106 = scmp.eq.s32.totalorder %s18, 3
      %p107 = por %p105, %p106
      %p109 = scmp.ne.s32.totalorder %s92, %s108
      %p110 = scmp.eq.s32.totalorder %s18, 0
      %p111 = por %p109, %p110
      %p112 = scmp.le.s32.totalorder 1, %s12
      %p113 = scmp.lt.s32.totalorder %s12, 5
      %p114 = pnand %p112, %p113
      %p115 = pneg %p114
      // Predicated region
      $region9: #{res_block_forward.4} parent=5 // pred_check
        _
      $region10: #{res_block_forward.4} parent=5 // pred_check_branch
        %117 = sbr.rel (%p114) target = $region12
      $region11: #{res_block_forward.4} parent=5 // pred_region
        %s118 = ssub.s32 %s12, 1
      $region12: #{res_block_forward.4} parent=5 // pred_fallthru
        _
      %p119 = scmp.lt.s32.totalorder %s12, 4
      // Predicated region
      $region13: #{res_block_forward.4} parent=5 // pred_check
        %p120 = pneg %p119
      $region14: #{res_block_forward.4} parent=5 // pred_check_branch
        %122 = sbr.rel (%p120) target = $region16
      $region15: #{res_block_forward.4} parent=5 // pred_region
        // Predicated region
        $region17: #{res_block_forward.4} parent=15 // pred_check
          %p123 = pneg %p46
        $region18: #{res_block_forward.4} parent=15 // pred_check_branch
          %125 = sbr.rel (%p123) target = $region20
        $region19: #{res_block_forward.4} parent=15 // pred_region
          %s126 = sand.u32 %s36, 1
          %s127 = scalar_lea.sflag [#allocation3], %s126
          %s128 = sand.u32 %s36, 1
          %s129 = smul.addr %s128, 128
          %s130 = scalar_lea.vmem [#allocation2], %s129
          %s131 = smul.u32 8, %s20
          %s133 = ssub.s32 2048, 2048
          %134 = vsyncadd %s127, %s133
          %s135 = smul.addr %s131, 2
          %s136 = smul.addr %s19, 32
          %s137 = sadd.s32 %s135, %s136
          %s138 = smul.addr %s137, 128
          %s139 = scalar_lea.hbm %s0, %s138
          %s140 = sshll.u32 %s130, 4
          %s141 = int_to_ptr.vmem [resolvable:$true] %s140
          %146 = dma.hbm_to_vmem [thread:$0]  %s139, 2048, %s141, %s127, 128, 128, 8
        $region20: #{res_block_forward.4} parent=15 // pred_fallthru
          _
      $region16: #{res_block_forward.4} parent=5 // pred_fallthru
        _
      %p147 = scmp.le.s32.totalorder 1, %s12
      %p148 = scmp.lt.s32.totalorder %s12, 5
      %p149 = pnand %p147, %p148
      %p150 = pneg %p149
      // Predicated region
      $region21: #{res_block_forward.4} parent=5 // pred_check
        _
      $region22: #{res_block_forward.4} parent=5 // pred_check_branch
        %152 = sbr.rel (%p149) target = $region24
      $region23: #{res_block_forward.4} parent=5 // pred_region
        %s153 = ssub.s32 %s12, 1
        %s154 = sand.u32 %s39, 1
        %s155 = scalar_lea.sflag [#allocation3], %s154
        %s156 = sand.u32 %s39, 1
        %s157 = smul.addr %s156, 128
        %s158 = scalar_lea.vmem [#allocation2], %s157
        // Predicated region
        $region25: #{res_block_forward.4} parent=23 // pred_check
          %p159 = pneg %p52
        $region26: #{res_block_forward.4} parent=23 // pred_check_branch
          %161 = sbr.rel (%p159) target = $region28
        $region27: #{res_block_forward.4} parent=23 // pred_region
          %162 = dma.done %s155, 2048
        $region28: #{res_block_forward.4} parent=23 // pred_fallthru
          _
        %s163 = sand.u32 %s39, 1
        %s164 = scalar_lea.sflag [#allocation3], %s163
        %s165 = sand.u32 %s39, 1
        %s166 = smul.addr %s165, 128
        %s167 = scalar_lea.vmem [#allocation2], %s166
        %p168 = pneg %p52
        %p169 = pneg %p49
        %p170 = pneg %p78
        %p171 = pneg %p75
        %p172 = scmp.lt.s32.totalorder %s21, 1
        %s173 = scalar_select %p172, %s21, 1
        %s174 = scalar_lea.vmem %s1, %s173
        %p175 = pneg %p104
        %p176 = pneg %p101
        %p177 = scmp.lt.s32.totalorder %s21, 1
        %s178 = scalar_select %p177, %s21, 1
        %s179 = scalar_lea.vmem %s2, %s178
        %s180 = smul.u32 8, %s22
        %p181 = scmp.lt.s32.totalorder %s21, 1
        %s182 = scalar_select %p181, %s21, 1
        %s183 = scalar_lea.vmem %s1, %s182
        %p184 = scmp.lt.s32.totalorder %s21, 1
        %s185 = scalar_select %p184, %s21, 1
        %s186 = scalar_lea.vmem %s2, %s185
        %p187 = scmp.eq.s32.totalorder %s22, 0
        // Predicated region
        $region29: #{res_block_forward.4} parent=23 // pred_check
          %p188 = pneg %p187
        $region30: #{res_block_forward.4} parent=23 // pred_check_branch
          %190 = sbr.rel (%p188) target = $region32
        $region31: #{res_block_forward.4} parent=23 // pred_region
          %vm191 = vcmask 253952
          %192 = vst.msk [vmem:[%s183] sm:$0x1] %vm191, 0.0
          %193 = vst.msk [vmem:[%s186] sm:$0x1] %vm191, 0.0
        $region32: #{res_block_forward.4} parent=23 // pred_fallthru
          _
        %v194 = vld [vmem:[%s158] sm:$0xff]
        %v195 = vld [vmem:[%s158 + $0x8] sm:$0xff]
        %v196 = vld [vmem:[%s158 + $0x10] sm:$0xff]
        %v197 = vld [vmem:[%s158 + $0x18] sm:$0xff]
        %v198 = vld [vmem:[%s158 + $0x20] sm:$0xff]
        %v199 = vld [vmem:[%s158 + $0x28] sm:$0xff]
        %v200 = vld [vmem:[%s158 + $0x30] sm:$0xff]
        %v201 = vld [vmem:[%s158 + $0x38] sm:$0xff]
        %v202 = vld [vmem:[%s158 + $0x40] sm:$0xff]
        %v203 = vld [vmem:[%s158 + $0x48] sm:$0xff]
        %v204 = vld [vmem:[%s158 + $0x50] sm:$0xff]
        %v205 = vld [vmem:[%s158 + $0x58] sm:$0xff]
        %v206 = vld [vmem:[%s158 + $0x60] sm:$0xff]
        %v207 = vld [vmem:[%s158 + $0x68] sm:$0xff]
        %v208 = vld [vmem:[%s158 + $0x70] sm:$0xff]
        %v209 = vld [vmem:[%s158 + $0x78] sm:$0xff]
        %v210 = vld [vmem:[%s183] sm:$0x1]
        %vm211 = vcmask 261120
        %v212 = vsel %vm211, %v194, 0.0
        %v213 = vsel %vm211, %v195, 0.0
        %v214 = vadd.f32 %v212, %v213
        %v215 = vsel %vm211, %v196, 0.0
        %v216 = vadd.f32 %v214, %v215
        %v217 = vsel %vm211, %v197, 0.0
        %v218 = vadd.f32 %v216, %v217
        %v219 = vsel %vm211, %v198, 0.0
        %v220 = vadd.f32 %v218, %v219
        %v221 = vsel %vm211, %v199, 0.0
        %v222 = vadd.f32 %v220, %v221
        %v223 = vsel %vm211, %v200, 0.0
        %v224 = vadd.f32 %v222, %v223
        %v225 = vsel %vm211, %v201, 0.0
        %v226 = vadd.f32 %v224, %v225
        %v227 = vsel %vm211, %v202, 0.0
        %v228 = vadd.f32 %v226, %v227
        %v229 = vsel %vm211, %v203, 0.0
        %v230 = vadd.f32 %v228, %v229
        %v231 = vsel %vm211, %v204, 0.0
        %v232 = vadd.f32 %v230, %v231
        %v233 = vsel %vm211, %v205, 0.0
        %v234 = vadd.f32 %v232, %v233
        %v235 = vsel %vm211, %v206, 0.0
        %v236 = vadd.f32 %v234, %v235
        %v237 = vsel %vm211, %v207, 0.0
        %v238 = vadd.f32 %v236, %v237
        %v239 = vsel %vm211, %v208, 0.0
        %v240 = vadd.f32 %v238, %v239
        %v241 = vsel %vm211, %v209, 0.0
        %v242 = vadd.f32 %v240, %v241
        %v243 = vrot.slane %v242, 4
        %v244 = vadd.f32 %v242, %v243
        %v245 = vrot.slane %v244, 2
        %v246 = vadd.f32 %v244, %v245
        %v247 = vrot.slane %v246, 1
        %v248 = vadd.f32 %v246, %v247
        %v249 = vadd.f32 %v210, %v248
        %vm250 = vcmask 253952
        %251 = vst.msk [vmem:[%s183] sm:$0x1] %vm250, %v249
        %v252 = vld [vmem:[%s186] sm:$0x1]
        %v253 = vmul.f32 %v194, %v194
        %v254 = vmul.f32 %v195, %v195
        %v255 = vmul.f32 %v196, %v196
        %v256 = vmul.f32 %v197, %v197
        %v257 = vmul.f32 %v198, %v198
        %v258 = vmul.f32 %v199, %v199
        %v259 = vmul.f32 %v200, %v200
        %v260 = vmul.f32 %v201, %v201
        %v261 = vmul.f32 %v202, %v202
        %v262 = vmul.f32 %v203, %v203
        %v263 = vmul.f32 %v204, %v204
        %v264 = vmul.f32 %v205, %v205
        %v265 = vmul.f32 %v206, %v206
        %v266 = vmul.f32 %v207, %v207
        %v267 = vmul.f32 %v208, %v208
        %v268 = vmul.f32 %v209, %v209
        %v269 = vsel %vm211, %v253, 0.0
        %v270 = vsel %vm211, %v254, 0.0
        %v271 = vadd.f32 %v269, %v270
        %v272 = vsel %vm211, %v255, 0.0
        %v273 = vadd.f32 %v271, %v272
        %v274 = vsel %vm211, %v256, 0.0
        %v275 = vadd.f32 %v273, %v274
        %v276 = vsel %vm211, %v257, 0.0
        %v277 = vadd.f32 %v275, %v276
        %v278 = vsel %vm211, %v258, 0.0
        %v279 = vadd.f32 %v277, %v278
        %v280 = vsel %vm211, %v259, 0.0
        %v281 = vadd.f32 %v279, %v280
        %v282 = vsel %vm211, %v260, 0.0
        %v283 = vadd.f32 %v281, %v282
        %v284 = vsel %vm211, %v261, 0.0
        %v285 = vadd.f32 %v283, %v284
        %v286 = vsel %vm211, %v262, 0.0
        %v287 = vadd.f32 %v285, %v286
        %v288 = vsel %vm211, %v263, 0.0
        %v289 = vadd.f32 %v287, %v288
        %v290 = vsel %vm211, %v264, 0.0
        %v291 = vadd.f32 %v289, %v290
        %v292 = vsel %vm211, %v265, 0.0
        %v293 = vadd.f32 %v291, %v292
        %v294 = vsel %vm211, %v266, 0.0
        %v295 = vadd.f32 %v293, %v294
        %v296 = vsel %vm211, %v267, 0.0
        %v297 = vadd.f32 %v295, %v296
        %v298 = vsel %vm211, %v268, 0.0
        %v299 = vadd.f32 %v297, %v298
        %v300 = vrot.slane %v299, 4
        %v301 = vadd.f32 %v299, %v300
        %v302 = vrot.slane %v301, 2
        %v303 = vadd.f32 %v301, %v302
        %v304 = vrot.slane %v303, 1
        %v305 = vadd.f32 %v303, %v304
        %v306 = vadd.f32 %v252, %v305
        %307 = vst.msk [vmem:[%s186] sm:$0x1] %vm250, %v306
        %p308 = scmp.lt.s32.totalorder %s21, 1
        %s309 = scalar_select %p308, %s21, 1
        %s310 = scalar_lea.vmem %s1, %s309
        %p311 = scmp.lt.s32.totalorder %s21, 1
        %s312 = scalar_select %p311, %s21, 1
        %s313 = scalar_lea.vmem %s2, %s312
        // Predicated region
        $region33: #{res_block_forward.4} parent=23 // pred_check
          %p314 = pneg %p75
        $region34: #{res_block_forward.4} parent=23 // pred_check_branch
          %316 = sbr.rel (%p314) target = $region36
        $region35: #{res_block_forward.4} parent=23 // pred_region
          _
        $region36: #{res_block_forward.4} parent=23 // pred_fallthru
          _
        // Predicated region
        $region37: #{res_block_forward.4} parent=23 // pred_check
          %p317 = pneg %p101
        $region38: #{res_block_forward.4} parent=23 // pred_check_branch
          %319 = sbr.rel (%p317) target = $region40
        $region39: #{res_block_forward.4} parent=23 // pred_region
          _
        $region40: #{res_block_forward.4} parent=23 // pred_fallthru
          _
      $region24: #{res_block_forward.4} parent=5 // pred_fallthru
        _
      %p320 = scmp.le.s32.totalorder 2, %s12
      // Predicated region
      $region41: #{res_block_forward.4} parent=5 // pred_check
        %p321 = pneg %p320
      $region42: #{res_block_forward.4} parent=5 // pred_check_branch
        %323 = sbr.rel (%p321) target = $region44
      $region43: #{res_block_forward.4} parent=5 // pred_region
        %s324 = ssub.s32 %s12, 2
        // Predicated region
        $region45: #{res_block_forward.4} parent=43 // pred_check
          %p325 = pneg %p81
        $region46: #{res_block_forward.4} parent=43 // pred_check_branch
          %327 = sbr.rel (%p325) target = $region48
        $region47: #{res_block_forward.4} parent=43 // pred_region
          %p328 = scmp.lt.s32.totalorder %s23, 1
          %s329 = scalar_select %p328, %s23, 1
          %s330 = scalar_lea.vmem %s1, %s329
        $region48: #{res_block_forward.4} parent=43 // pred_fallthru
          _
        // Predicated region
        $region49: #{res_block_forward.4} parent=43 // pred_check
          %p331 = pneg %p107
        $region50: #{res_block_forward.4} parent=43 // pred_check_branch
          %333 = sbr.rel (%p331) target = $region52
        $region51: #{res_block_forward.4} parent=43 // pred_region
          %p334 = scmp.lt.s32.totalorder %s23, 1
          %s335 = scalar_select %p334, %s23, 1
          %s336 = scalar_lea.vmem %s2, %s335
        $region52: #{res_block_forward.4} parent=43 // pred_fallthru
          _
      $region44: #{res_block_forward.4} parent=5 // pred_fallthru
        _
    $region6: #{res_block_forward.4} parent=1 // loop_footer
      %s16 = sadd.s32 1, %s12
    $region7: #{res_block_forward.4} parent=1 // loop_footer_branch
      %11 = sbr.rel target = $region3
    $region8: #{res_block_forward.4} parent=1 // loop_exit
      _
    %337 = vsyncpa [#allocation3], 1
    %s338 = scalar_lea.sflag [#allocation3], 1
    %339 = vsyncpa %s338, 1

// kernel: res_block_forward.6
$region0: #{res_block_forward.6}
  #allocation0 [shape = 'u32[]', space=smem, size = 0x4, offset = 0x4, fixed_abs, tag = 'smem constant byte address 0x4 - core index']
  #allocation1 [shape = 'u32[144,128]{1,0:T(1,128)}', space=vmem, size = 0x12000, scoped, tag = 'internal scratch']
  %s0 = inlined_call_operand.vmem [shape: f32[2,16,16,64], index: 0, kind: input, shape index: {}]
  %s1 = inlined_call_operand.vmem [shape: f32[2,1,64], index: 1, kind: output, shape index: {0}]
  %s2 = inlined_call_operand.vmem [shape: f32[2,1,64], index: 2, kind: output, shape index: {1}]
  %3 = xla_tuple %s1, %s2
  %s4 = sld [smem:[#allocation0]]
  $region49: #{res_block_forward.6} parent=0
    _
  %s6 = ssub.s32 1, %s4
  %s7 = scalar_select 0, %s6, %s4
  loop: start=0, step=1, limit=6
  $region2: #{res_block_forward.6} parent=0 // loop_pre_header
    _
  $region3: #{res_block_forward.6} parent=0 // loop_header
    %s9 = sphi 0, %s13
    %p10 = scmp.ge.s32.totalorder %s9, 6
    %s16 = sphi 0, %s28
    %s17 = sphi 0, %s24
    %s18 = sphi 0, %s16
    %s19 = sphi 0, %s17
    %s20 = sphi 0, %s18
    %s21 = sphi 0, %s19
    %s33 = sphi 0, %s35
    %s36 = sphi 0, %s33
    %s37 = sphi 0, %s36
    %s53 = sphi 0, %s37
    %s59 = sphi 0, %s61
    %s62 = sphi 0, %s59
    %s63 = sphi 0, %s62
    %s79 = sphi 0, %s63
    %s85 = sphi 0, %s87
    %s88 = sphi 0, %s85
    %s89 = sphi 0, %s88
    %s105 = sphi 0, %s89
  $region4: #{res_block_forward.6} parent=0 // loop_header_branch
    %12 = sbr.rel (%p10) target = $region8
  $region5: #{res_block_forward.6} parent=0 // loop_body
    %s14 = ssub.s32 %s9, 1
    %s15 = ssub.s32 %s9, 2
    %s22 = sadd.s32 1, %s17
    %p23 = scmp.ge.s32.totalorder %s22, 2
    %s24 = scalar_select %p23, 0, %s22
    %s25 = sadd.s32 1, %s16
    %s26 = scalar_select %p23, %s25, %s16
    %p27 = scmp.ge.s32.totalorder %s26, 2
    %s28 = scalar_select %p27, 0, %s26
    %s29 = ssub.s32 %s16, %s28
    %s30 = ssub.s32 %s17, %s24
    %s31 = sor.u32 %s29, %s30
    %p32 = scmp.eq.s32.totalorder %s31, 0
    %s34 = sadd.s32 %s33, 1
    %s35 = scalar_select %p32, %s33, %s34
    %p38 = pneg %p32
    %p39 = scmp.eq.s32.totalorder %s9, 3
    %p40 = por %p38, %p39
    %p41 = scmp.ne.s32.totalorder %s33, %s36
    %p42 = scmp.eq.s32.totalorder %s9, 0
    %p43 = por %p41, %p42
    %p44 = scmp.ne.s32.totalorder %s33, %s36
    %p45 = scmp.eq.s32.totalorder %s14, 3
    %p46 = por %p44, %p45
    %p47 = scmp.ne.s32.totalorder %s36, %s37
    %p48 = scmp.eq.s32.totalorder %s14, 0
    %p49 = por %p47, %p48
    %p50 = scmp.ne.s32.totalorder %s36, %s37
    %p51 = scmp.eq.s32.totalorder %s15, 3
    %p52 = por %p50, %p51
    %p54 = scmp.ne.s32.totalorder %s37, %s53
    %p55 = scmp.eq.s32.totalorder %s15, 0
    %p56 = por %p54, %p55
    %s57 = ssub.s32 %s16, %s28
    %p58 = scmp.eq.s32.totalorder %s57, 0
    %s60 = sadd.s32 %s59, 1
    %s61 = scalar_select %p58, %s59, %s60
    %p64 = pneg %p58
    %p65 = scmp.eq.s32.totalorder %s9, 3
    %p66 = por %p64, %p65
    %p67 = scmp.ne.s32.totalorder %s59, %s62
    %p68 = scmp.eq.s32.totalorder %s9, 0
    %p69 = por %p67, %p68
    %p70 = scmp.ne.s32.totalorder %s59, %s62
    %p71 = scmp.eq.s32.totalorder %s14, 3
    %p72 = por %p70, %p71
    %p73 = scmp.ne.s32.totalorder %s62, %s63
    %p74 = scmp.eq.s32.totalorder %s14, 0
    %p75 = por %p73, %p74
    %p76 = scmp.ne.s32.totalorder %s62, %s63
    %p77 = scmp.eq.s32.totalorder %s15, 3
    %p78 = por %p76, %p77
    %p80 = scmp.ne.s32.totalorder %s63, %s79
    %p81 = scmp.eq.s32.totalorder %s15, 0
    %p82 = por %p80, %p81
    %s83 = ssub.s32 %s16, %s28
    %p84 = scmp.eq.s32.totalorder %s83, 0
    %s86 = sadd.s32 %s85, 1
    %s87 = scalar_select %p84, %s85, %s86
    %p90 = pneg %p84
    %p91 = scmp.eq.s32.totalorder %s9, 3
    %p92 = por %p90, %p91
    %p93 = scmp.ne.s32.totalorder %s85, %s88
    %p94 = scmp.eq.s32.totalorder %s9, 0
    %p95 = por %p93, %p94
    %p96 = scmp.ne.s32.totalorder %s85, %s88
    %p97 = scmp.eq.s32.totalorder %s14, 3
    %p98 = por %p96, %p97
    %p99 = scmp.ne.s32.totalorder %s88, %s89
    %p100 = scmp.eq.s32.totalorder %s14, 0
    %p101 = por %p99, %p100
    %p102 = scmp.ne.s32.totalorder %s88, %s89
    %p103 = scmp.eq.s32.totalorder %s15, 3
    %p104 = por %p102, %p103
    %p106 = scmp.ne.s32.totalorder %s89, %s105
    %p107 = scmp.eq.s32.totalorder %s15, 0
    %p108 = por %p106, %p107
    %p109 = scmp.le.s32.totalorder 1, %s9
    %p110 = scmp.lt.s32.totalorder %s9, 5
    %p111 = pnand %p109, %p110
    %p112 = pneg %p111
    // Predicated region
    $region9: #{res_block_forward.6} parent=5 // pred_check
      _
    $region10: #{res_block_forward.6} parent=5 // pred_check_branch
      %114 = sbr.rel (%p111) target = $region12
    $region11: #{res_block_forward.6} parent=5 // pred_region
      %s115 = ssub.s32 %s9, 1
    $region12: #{res_block_forward.6} parent=5 // pred_fallthru
      _
    %p116 = scmp.lt.s32.totalorder %s9, 4
    // Predicated region
    $region13: #{res_block_forward.6} parent=5 // pred_check
      %p117 = pneg %p116
    $region14: #{res_block_forward.6} parent=5 // pred_check_branch
      %119 = sbr.rel (%p117) target = $region16
    $region15: #{res_block_forward.6} parent=5 // pred_region
      // Predicated region
      $region17: #{res_block_forward.6} parent=15 // pred_check
        %p120 = pneg %p43
      $region18: #{res_block_forward.6} parent=15 // pred_check_branch
        %122 = sbr.rel (%p120) target = $region20
      $region19: #{res_block_forward.6} parent=15 // pred_region
        %s123 = smul.u32 8, %s17
        %p124 = scmp.lt.s32.totalorder %s16, 1
        %s125 = scalar_select %p124, %s16, 1
        %p126 = scmp.lt.s32.totalorder %s123, 15
        %s127 = scalar_select %p126, %s123, 15
        %s128 = smul.addr %s127, 2
        %s129 = smul.addr %s125, 32
        %s130 = sadd.s32 %s128, %s129
        %s131 = smul.addr %s130, 8
        %s132 = scalar_lea.vmem %s0, %s131
        %s133 = smul.u32 8, %s17
      $region20: #{res_block_forward.6} parent=15 // pred_fallthru
        _
    $region16: #{res_block_forward.6} parent=5 // pred_fallthru
      _
    %p134 = scmp.le.s32.totalorder 1, %s9
    %p135 = scmp.lt.s32.totalorder %s9, 5
    %p136 = pnand %p134, %p135
    %p137 = pneg %p136
    // Predicated region
    $region21: #{res_block_forward.6} parent=5 // pred_check
      _
    $region22: #{res_block_forward.6} parent=5 // pred_check_branch
      %139 = sbr.rel (%p136) target = $region24
    $region23: #{res_block_forward.6} parent=5 // pred_region
      %s140 = ssub.s32 %s9, 1
      %s141 = smul.u32 8, %s19
      %p142 = scmp.lt.s32.totalorder %s18, 1
      %s143 = scalar_select %p142, %s18, 1
      %p144 = scmp.lt.s32.totalorder %s141, 15
      %s145 = scalar_select %p144, %s141, 15
      %s146 = smul.addr %s145, 2
      %s147 = smul.addr %s143, 32
      %s148 = sadd.s32 %s146, %s147
      %s149 = smul.addr %s148, 8
      %s150 = scalar_lea.vmem %s0, %s149
      %p151 = pneg %p49
      %p152 = pneg %p46
      %p153 = pneg %p75
      %p154 = pneg %p72
      %p155 = scmp.lt.s32.totalorder %s18, 1
      %s156 = scalar_select %p155, %s18, 1
      %s157 = scalar_lea.vmem %s1, %s156
      %p158 = pneg %p101
      %p159 = pneg %p98
      %p160 = scmp.lt.s32.totalorder %s18, 1
      %s161 = scalar_select %p160, %s18, 1
      %s162 = scalar_lea.vmem %s2, %s161
      %s163 = smul.u32 8, %s19
      %p164 = scmp.lt.s32.totalorder %s18, 1
      %s165 = scalar_select %p164, %s18, 1
      %p166 = scmp.lt.s32.totalorder %s163, 15
      %s167 = scalar_select %p166, %s163, 15
      %s168 = smul.addr %s167, 2
      %s169 = smul.addr %s165, 32
      %s170 = sadd.s32 %s168, %s169
      %s171 = smul.addr %s170, 8
      %s172 = scalar_lea.vmem %s0, %s171
      %s173 = smul.u32 8, %s19
      %p174 = scmp.lt.s32.totalorder %s18, 1
      %s175 = scalar_select %p174, %s18, 1
      %s176 = scalar_lea.vmem %s1, %s175
      %p177 = scmp.lt.s32.totalorder %s18, 1
      %s178 = scalar_select %p177, %s18, 1
      %s179 = scalar_lea.vmem %s2, %s178
      %p180 = scmp.eq.s32.totalorder %s19, 0
      // Predicated region
      $region25: #{res_block_forward.6} parent=23 // pred_check
        %p181 = pneg %p180
      $region26: #{res_block_forward.6} parent=23 // pred_check_branch
        %183 = sbr.rel (%p181) target = $region28
      $region27: #{res_block_forward.6} parent=23 // pred_region
        %vm184 = vcmask 516096
        %185 = vst.msk [vmem:[%s176] sm:$0x1] %vm184, 0.0
        %186 = vst.msk [vmem:[%s179] sm:$0x1] %vm184, 0.0
      $region28: #{res_block_forward.6} parent=23 // pred_fallthru
        _
      %v187 = vld [vmem:[%s172] sm:$0xff]
      %v188 = vld [vmem:[%s172 + $0x8] sm:$0xff]
      %v189 = vld [vmem:[%s172 + $0x10] sm:$0xff]
      %v190 = vld [vmem:[%s172 + $0x18] sm:$0xff]
      %v191 = vld [vmem:[%s172 + $0x20] sm:$0xff]
      %v192 = vld [vmem:[%s172 + $0x28] sm:$0xff]
      %v193 = vld [vmem:[%s172 + $0x30] sm:$0xff]
      %v194 = vld [vmem:[%s172 + $0x38] sm:$0xff]
      %v195 = vld [vmem:[%s172 + $0x40] sm:$0xff]
      %v196 = vld [vmem:[%s172 + $0x48] sm:$0xff]
      %v197 = vld [vmem:[%s172 + $0x50] sm:$0xff]
      %v198 = vld [vmem:[%s172 + $0x58] sm:$0xff]
      %v199 = vld [vmem:[%s172 + $0x60] sm:$0xff]
      %v200 = vld [vmem:[%s172 + $0x68] sm:$0xff]
      %v201 = vld [vmem:[%s172 + $0x70] sm:$0xff]
      %v202 = vld [vmem:[%s172 + $0x78] sm:$0xff]
      %v203 = vld [vmem:[%s176] sm:$0x1]
      %vm204 = vcmask 523264
      %v205 = vsel %vm204, %v187, 0.0
      %v206 = vsel %vm204, %v188, 0.0
      %v207 = vadd.f32 %v205, %v206
      %v208 = vsel %vm204, %v189, 0.0
      %v209 = vadd.f32 %v207, %v208
      %v210 = vsel %vm204, %v190, 0.0
      %v211 = vadd.f32 %v209, %v210
      %v212 = vsel %vm204, %v191, 0.0
      %v213 = vadd.f32 %v211, %v212
      %v214 = vsel %vm204, %v192, 0.0
      %v215 = vadd.f32 %v213, %v214
      %v216 = vsel %vm204, %v193, 0.0
      %v217 = vadd.f32 %v215, %v216
      %v218 = vsel %vm204, %v194, 0.0
      %v219 = vadd.f32 %v217, %v218
      %v220 = vsel %vm204, %v195, 0.0
      %v221 = vadd.f32 %v219, %v220
      %v222 = vsel %vm204, %v196, 0.0
      %v223 = vadd.f32 %v221, %v222
      %v224 = vsel %vm204, %v197, 0.0
      %v225 = vadd.f32 %v223, %v224
      %v226 = vsel %vm204, %v198, 0.0
      %v227 = vadd.f32 %v225, %v226
      %v228 = vsel %vm204, %v199, 0.0
      %v229 = vadd.f32 %v227, %v228
      %v230 = vsel %vm204, %v200, 0.0
      %v231 = vadd.f32 %v229, %v230
      %v232 = vsel %vm204, %v201, 0.0
      %v233 = vadd.f32 %v231, %v232
      %v234 = vsel %vm204, %v202, 0.0
      %v235 = vadd.f32 %v233, %v234
      %v236 = vrot.slane %v235, 4
      %v237 = vadd.f32 %v235, %v236
      %v238 = vrot.slane %v237, 2
      %v239 = vadd.f32 %v237, %v238
      %v240 = vrot.slane %v239, 1
      %v241 = vadd.f32 %v239, %v240
      %v242 = vadd.f32 %v203, %v241
      %vm243 = vcmask 516096
      %244 = vst.msk [vmem:[%s176] sm:$0x1] %vm243, %v242
      %v245 = vld [vmem:[%s179] sm:$0x1]
      %v246 = vmul.f32 %v187, %v187
      %v247 = vmul.f32 %v188, %v188
      %v248 = vmul.f32 %v189, %v189
      %v249 = vmul.f32 %v190, %v190
      %v250 = vmul.f32 %v191, %v191
      %v251 = vmul.f32 %v192, %v192
      %v252 = vmul.f32 %v193, %v193
      %v253 = vmul.f32 %v194, %v194
      %v254 = vmul.f32 %v195, %v195
      %v255 = vmul.f32 %v196, %v196
      %v256 = vmul.f32 %v197, %v197
      %v257 = vmul.f32 %v198, %v198
      %v258 = vmul.f32 %v199, %v199
      %v259 = vmul.f32 %v200, %v200
      %v260 = vmul.f32 %v201, %v201
      %v261 = vmul.f32 %v202, %v202
      %v262 = vsel %vm204, %v246, 0.0
      %v263 = vsel %vm204, %v247, 0.0
      %v264 = vadd.f32 %v262, %v263
      %v265 = vsel %vm204, %v248, 0.0
      %v266 = vadd.f32 %v264, %v265
      %v267 = vsel %vm204, %v249, 0.0
      %v268 = vadd.f32 %v266, %v267
      %v269 = vsel %vm204, %v250, 0.0
      %v270 = vadd.f32 %v268, %v269
      %v271 = vsel %vm204, %v251, 0.0
      %v272 = vadd.f32 %v270, %v271
      %v273 = vsel %vm204, %v252, 0.0
      %v274 = vadd.f32 %v272, %v273
      %v275 = vsel %vm204, %v253, 0.0
      %v276 = vadd.f32 %v274, %v275
      %v277 = vsel %vm204, %v254, 0.0
      %v278 = vadd.f32 %v276, %v277
      %v279 = vsel %vm204, %v255, 0.0
      %v280 = vadd.f32 %v278, %v279
      %v281 = vsel %vm204, %v256, 0.0
      %v282 = vadd.f32 %v280, %v281
      %v283 = vsel %vm204, %v257, 0.0
      %v284 = vadd.f32 %v282, %v283
      %v285 = vsel %vm204, %v258, 0.0
      %v286 = vadd.f32 %v284, %v285
      %v287 = vsel %vm204, %v259, 0.0
      %v288 = vadd.f32 %v286, %v287
      %v289 = vsel %vm204, %v260, 0.0
      %v290 = vadd.f32 %v288, %v289
      %v291 = vsel %vm204, %v261, 0.0
      %v292 = vadd.f32 %v290, %v291
      %v293 = vrot.slane %v292, 4
      %v294 = vadd.f32 %v292, %v293
      %v295 = vrot.slane %v294, 2
      %v296 = vadd.f32 %v294, %v295
      %v297 = vrot.slane %v296, 1
      %v298 = vadd.f32 %v296, %v297
      %v299 = vadd.f32 %v245, %v298
      %300 = vst.msk [vmem:[%s179] sm:$0x1] %vm243, %v299
      %p301 = scmp.lt.s32.totalorder %s18, 1
      %s302 = scalar_select %p301, %s18, 1
      %s303 = scalar_lea.vmem %s1, %s302
      %p304 = scmp.lt.s32.totalorder %s18, 1
      %s305 = scalar_select %p304, %s18, 1
      %s306 = scalar_lea.vmem %s2, %s305
      // Predicated region
      $region29: #{res_block_forward.6} parent=23 // pred_check
        %p307 = pneg %p72
      $region30: #{res_block_forward.6} parent=23 // pred_check_branch
        %309 = sbr.rel (%p307) target = $region32
      $region31: #{res_block_forward.6} parent=23 // pred_region
        _
      $region32: #{res_block_forward.6} parent=23 // pred_fallthru
        _
      // Predicated region
      $region33: #{res_block_forward.6} parent=23 // pred_check
        %p310 = pneg %p98
      $region34: #{res_block_forward.6} parent=23 // pred_check_branch
        %312 = sbr.rel (%p310) target = $region36
      $region35: #{res_block_forward.6} parent=23 // pred_region
        _
      $region36: #{res_block_forward.6} parent=23 // pred_fallthru
        _
    $region24: #{res_block_forward.6} parent=5 // pred_fallthru
      _
    %p313 = scmp.le.s32.totalorder 2, %s9
    // Predicated region
    $region37: #{res_block_forward.6} parent=5 // pred_check
      %p314 = pneg %p313
    $region38: #{res_block_forward.6} parent=5 // pred_check_branch
      %316 = sbr.rel (%p314) target = $region40
    $region39: #{res_block_forward.6} parent=5 // pred_region
      %s317 = ssub.s32 %s9, 2
      // Predicated region
      $region41: #{res_block_forward.6} parent=39 // pred_check
        %p318 = pneg %p78
      $region42: #{res_block_forward.6} parent=39 // pred_check_branch
        %320 = sbr.rel (%p318) target = $region44
      $region43: #{res_block_forward.6} parent=39 // pred_region
        %p321 = scmp.lt.s32.totalorder %s20, 1
        %s322 = scalar_select %p321, %s20, 1
        %s323 = scalar_lea.vmem %s1, %s322
      $region44: #{res_block_forward.6} parent=39 // pred_fallthru
        _
      // Predicated region
      $region45: #{res_block_forward.6} parent=39 // pred_check
        %p324 = pneg %p104
      $region46: #{res_block_forward.6} parent=39 // pred_check_branch
        %326 = sbr.rel (%p324) target = $region48
      $region47: #{res_block_forward.6} parent=39 // pred_region
        %p327 = scmp.lt.s32.totalorder %s20, 1
        %s328 = scalar_select %p327, %s20, 1
        %s329 = scalar_lea.vmem %s2, %s328
      $region48: #{res_block_forward.6} parent=39 // pred_fallthru
        _
    $region40: #{res_block_forward.6} parent=5 // pred_fallthru
      _
  $region6: #{res_block_forward.6} parent=0 // loop_footer
    %s13 = sadd.s32 1, %s9
  $region7: #{res_block_forward.6} parent=0 // loop_footer_branch
    %8 = sbr.rel target = $region3
  $region8: #{res_block_forward.6} parent=0 // loop_exit
    _

// kernel: res_block_forward.5
$region0: #{res_block_forward.5}
  #allocation0 [shape = 'u32[]', space=smem, size = 0x4, offset = 0x4, fixed_abs, tag = 'smem constant byte address 0x4 - core index']
  #allocation1 [shape = 'u32[144,128]{1,0:T(1,128)}', space=vmem, size = 0x12000, scoped, tag = 'internal scratch']
  #allocation2 [shape = 'f32[10,18,32]{2,1,0:T(8,128)}', space=vmem, size = 0x1e000, scoped, tag = 'scratch operand']
  #allocation3 [shape = 'f32[128,288]{1,0:T(8,128)}', space=vmem, size = 0x30000, scoped, tag = 'scratch operand']
  %s0 = inlined_call_operand.vmem [shape: f32[2,1,32], index: 0, kind: input, shape index: {}]
  %s1 = inlined_call_operand.vmem [shape: f32[2,1,32], index: 1, kind: input, shape index: {}]
  %s2 = inlined_call_operand.vmem [shape: f32[2,16,16,32], index: 2, kind: input, shape index: {}, may-alias: {2,3,4}]
  %s3 = inlined_call_operand.vmem [shape: f32[2,16,16,32], index: 3, kind: input, shape index: {}, may-alias: {2,3,4}]
  %s4 = inlined_call_operand.vmem [shape: f32[2,16,16,32], index: 4, kind: input, shape index: {}, may-alias: {2,3,4}]
  %s5 = inlined_call_operand.hbm [shape: f32[288,64], index: 5, kind: input, shape index: {}]
  %s6 = inlined_call_operand.vmem [shape: f32[1,64], index: 6, kind: input, shape index: {}]
  %s7 = inlined_call_operand.vmem [shape: f32[2,16,16,64], index: 7, kind: output, shape index: {}]
  %s8 = sld [smem:[#allocation0]]
  $region65: #{res_block_forward.5} parent=0
    _
  %s10 = ssub.s32 1, %s8
  %s11 = scalar_select 0, %s10, %s8
  $region1: #{res_block_forward.5} parent=0
    #allocation4 [shape = 'u8[147456]{0}', space=vmem, size = 0x24000, scoped, tag = 'input window, operand 5, single buffered']
    #allocation5 [shape = 's32[2]{0}', space=sflag, size = 0x8, scoped, tag = 'scoped memory for res_block_forward.5']
    %12 = vsyncpa [#allocation5], 0
    loop: start=0, step=1, limit=6
    $region2: #{res_block_forward.5} parent=1 // loop_pre_header
      _
    $region3: #{res_block_forward.5} parent=1 // loop_header
      %s14 = sphi 0, %s18
      %p15 = scmp.ge.s32.totalorder %s14, 6
      %s21 = sphi 0, %s33
      %s22 = sphi 0, %s29
      %s23 = sphi 0, %s21
      %s24 = sphi 0, %s22
      %s25 = sphi 0, %s23
      %s26 = sphi 0, %s24
      %s36 = sphi 0, %s38
      %s39 = sphi 0, %s36
      %s40 = sphi 0, %s39
      %s56 = sphi 0, %s40
      %s62 = sphi 0, %s64
      %s65 = sphi 0, %s62
      %s66 = sphi 0, %s65
      %s82 = sphi 0, %s66
      %s98 = sphi 0, %s100
      %s101 = sphi 0, %s98
      %s102 = sphi 0, %s101
      %s118 = sphi 0, %s102
      %s126 = sphi 0, %s128
      %s129 = sphi 0, %s126
      %s130 = sphi 0, %s129
      %s146 = sphi 0, %s130
      %s162 = sphi 0, %s164
      %s165 = sphi 0, %s162
      %s166 = sphi 0, %s165
      %s182 = sphi 0, %s166
      %s186 = sphi 0, %s186
      %s188 = sphi 0, %s186
      %s189 = sphi 0, %s188
      %s203 = sphi 0, %s189
      %s207 = sphi 0, %s207
      %s209 = sphi 0, %s207
      %s210 = sphi 0, %s209
      %s224 = sphi 0, %s210
      %s232 = sphi 0, %s234
      %s235 = sphi 0, %s232
      %s236 = sphi 0, %s235
      %s252 = sphi 0, %s236
    $region4: #{res_block_forward.5} parent=1 // loop_header_branch
      %17 = sbr.rel (%p15) target = $region8
    $region5: #{res_block_forward.5} parent=1 // loop_body
      %s19 = ssub.s32 %s14, 1
      %s20 = ssub.s32 %s14, 2
      %s27 = sadd.s32 1, %s22
      %p28 = scmp.ge.s32.totalorder %s27, 2
      %s29 = scalar_select %p28, 0, %s27
      %s30 = sadd.s32 1, %s21
      %s31 = scalar_select %p28, %s30, %s21
      %p32 = scmp.ge.s32.totalorder %s31, 2
      %s33 = scalar_select %p32, 0, %s31
      %s34 = ssub.s32 %s21, %s33
      %p35 = scmp.eq.s32.totalorder %s34, 0
      %s37 = sadd.s32 %s36, 1
      %s38 = scalar_select %p35, %s36, %s37
      %p41 = pneg %p35
      %p42 = scmp.eq.s32.totalorder %s14, 3
      %p43 = por %p41, %p42
      %p44 = scmp.ne.s32.totalorder %s36, %s39
      %p45 = scmp.eq.s32.totalorder %s14, 0
      %p46 = por %p44, %p45
      %p47 = scmp.ne.s32.totalorder %s36, %s39
      %p48 = scmp.eq.s32.totalorder %s19, 3
      %p49 = por %p47, %p48
      %p50 = scmp.ne.s32.totalorder %s39, %s40
      %p51 = scmp.eq.s32.totalorder %s19, 0
      %p52 = por %p50, %p51
      %p53 = scmp.ne.s32.totalorder %s39, %s40
      %p54 = scmp.eq.s32.totalorder %s20, 3
      %p55 = por %p53, %p54
      %p57 = scmp.ne.s32.totalorder %s40, %s56
      %p58 = scmp.eq.s32.totalorder %s20, 0
      %p59 = por %p57, %p58
      %s60 = ssub.s32 %s21, %s33
      %p61 = scmp.eq.s32.totalorder %s60, 0
      %s63 = sadd.s32 %s62, 1
      %s64 = scalar_select %p61, %s62, %s63
      %p67 = pneg %p61
      %p68 = scmp.eq.s32.totalorder %s14, 3
      %p69 = por %p67, %p68
      %p70 = scmp.ne.s32.totalorder %s62, %s65
      %p71 = scmp.eq.s32.totalorder %s14, 0
      %p72 = por %p70, %p71
      %p73 = scmp.ne.s32.totalorder %s62, %s65
      %p74 = scmp.eq.s32.totalorder %s19, 3
      %p75 = por %p73, %p74
      %p76 = scmp.ne.s32.totalorder %s65, %s66
      %p77 = scmp.eq.s32.totalorder %s19, 0
      %p78 = por %p76, %p77
      %p79 = scmp.ne.s32.totalorder %s65, %s66
      %p80 = scmp.eq.s32.totalorder %s20, 3
      %p81 = por %p79, %p80
      %p83 = scmp.ne.s32.totalorder %s66, %s82
      %p84 = scmp.eq.s32.totalorder %s20, 0
      %p85 = por %p83, %p84
      %s86 = smul.u32 %s22, 8
      %s87 = ssub.s32 %s86, 1
      %p88 = scmp.gt.s32.totalorder %s87, 0
      %s89 = scalar_select %p88, %s87, 0
      %s90 = smul.u32 %s29, 8
      %s91 = ssub.s32 %s90, 1
      %p92 = scmp.gt.s32.totalorder %s91, 0
      %s93 = scalar_select %p92, %s91, 0
      %s94 = ssub.s32 %s21, %s33
      %s95 = ssub.s32 %s89, %s93
      %s96 = sor.u32 %s94, %s95
      %p97 = scmp.eq.s32.totalorder %s96, 0
      %s99 = sadd.s32 %s98, 1
      %s100 = scalar_select %p97, %s98, %s99
      %p103 = pneg %p97
      %p104 = scmp.eq.s32.totalorder %s14, 3
      %p105 = por %p103, %p104
      %p106 = scmp.ne.s32.totalorder %s98, %s101
      %p107 = scmp.eq.s32.totalorder %s14, 0
      %p108 = por %p106, %p107
      %p109 = scmp.ne.s32.totalorder %s98, %s101
      %p110 = scmp.eq.s32.totalorder %s19, 3
      %p111 = por %p109, %p110
      %p112 = scmp.ne.s32.totalorder %s101, %s102
      %p113 = scmp.eq.s32.totalorder %s19, 0
      %p114 = por %p112, %p113
      %p115 = scmp.ne.s32.totalorder %s101, %s102
      %p116 = scmp.eq.s32.totalorder %s20, 3
      %p117 = por %p115, %p116
      %p119 = scmp.ne.s32.totalorder %s102, %s118
      %p120 = scmp.eq.s32.totalorder %s20, 0
      %p121 = por %p119, %p120
      %s122 = ssub.s32 %s21, %s33
      %s123 = ssub.s32 %s22, %s29
      %s124 = sor.u32 %s122, %s123
      %p125 = scmp.eq.s32.totalorder %s124, 0
      %s127 = sadd.s32 %s126, 1
      %s128 = scalar_select %p125, %s126, %s127
      %p131 = pneg %p125
      %p132 = scmp.eq.s32.totalorder %s14, 3
      %p133 = por %p131, %p132
      %p134 = scmp.ne.s32.totalorder %s126, %s129
      %p135 = scmp.eq.s32.totalorder %s14, 0
      %p136 = por %p134, %p135
      %p137 = scmp.ne.s32.totalorder %s126, %s129
      %p138 = scmp.eq.s32.totalorder %s19, 3
      %p139 = por %p137, %p138
      %p140 = scmp.ne.s32.totalorder %s129, %s130
      %p141 = scmp.eq.s32.totalorder %s19, 0
      %p142 = por %p140, %p141
      %p143 = scmp.ne.s32.totalorder %s129, %s130
      %p144 = scmp.eq.s32.totalorder %s20, 3
      %p145 = por %p143, %p144
      %p147 = scmp.ne.s32.totalorder %s130, %s146
      %p148 = scmp.eq.s32.totalorder %s20, 0
      %p149 = por %p147, %p148
      %s150 = smul.u32 %s22, 8
      %s151 = sadd.s32 %s150, 8
      %p152 = scmp.lt.s32.totalorder %s151, 15
      %s153 = scalar_select %p152, %s151, 15
      %s154 = smul.u32 %s29, 8
      %s155 = sadd.s32 %s154, 8
      %p156 = scmp.lt.s32.totalorder %s155, 15
      %s157 = scalar_select %p156, %s155, 15
      %s158 = ssub.s32 %s21, %s33
      %s159 = ssub.s32 %s153, %s157
      %s160 = sor.u32 %s158, %s159
      %p161 = scmp.eq.s32.totalorder %s160, 0
      %s163 = sadd.s32 %s162, 1
      %s164 = scalar_select %p161, %s162, %s163
      %p167 = pneg %p161
      %p168 = scmp.eq.s32.totalorder %s14, 3
      %p169 = por %p167, %p168
      %p170 = scmp.ne.s32.totalorder %s162, %s165
      %p171 = scmp.eq.s32.totalorder %s14, 0
      %p172 = por %p170, %p171
      %p173 = scmp.ne.s32.totalorder %s162, %s165
      %p174 = scmp.eq.s32.totalorder %s19, 3
      %p175 = por %p173, %p174
      %p176 = scmp.ne.s32.totalorder %s165, %s166
      %p177 = scmp.eq.s32.totalorder %s19, 0
      %p178 = por %p176, %p177
      %p179 = scmp.ne.s32.totalorder %s165, %s166
      %p180 = scmp.eq.s32.totalorder %s20, 3
      %p181 = por %p179, %p180
      %p183 = scmp.ne.s32.totalorder %s166, %s182
      %p184 = scmp.eq.s32.totalorder %s20, 0
      %p185 = por %p183, %p184
      %s187 = sadd.s32 %s186, 1
      %p190 = scmp.eq.s32.totalorder %s14, 3
      %p191 = scmp.ne.s32.totalorder %s186, %s188
      %p192 = scmp.eq.s32.totalorder %s14, 0
      %p193 = por %p191, %p192
      %p194 = scmp.ne.s32.totalorder %s186, %s188
      %p195 = scmp.eq.s32.totalorder %s19, 3
      %p196 = por %p194, %p195
      %p197 = scmp.ne.s32.totalorder %s188, %s189
      %p198 = scmp.eq.s32.totalorder %s19, 0
      %p199 = por %p197, %p198
      %p200 = scmp.ne.s32.totalorder %s188, %s189
      %p201 = scmp.eq.s32.totalorder %s20, 3
      %p202 = por %p200, %p201
      %p204 = scmp.ne.s32.totalorder %s189, %s203
      %p205 = scmp.eq.s32.totalorder %s20, 0
      %p206 = por %p204, %p205
      %s208 = sadd.s32 %s207, 1
      %p211 = scmp.eq.s32.totalorder %s14, 3
      %p212 = scmp.ne.s32.totalorder %s207, %s209
      %p213 = scmp.eq.s32.totalorder %s14, 0
      %p214 = por %p212, %p213
      %p215 = scmp.ne.s32.totalorder %s207, %s209
      %p216 = scmp.eq.s32.totalorder %s19, 3
      %p217 = por %p215, %p216
      %p218 = scmp.ne.s32.totalorder %s209, %s210
      %p219 = scmp.eq.s32.totalorder %s19, 0
      %p220 = por %p218, %p219
      %p221 = scmp.ne.s32.totalorder %s209, %s210
      %p222 = scmp.eq.s32.totalorder %s20, 3
      %p223 = por %p221, %p222
      %p225 = scmp.ne.s32.totalorder %s210, %s224
      %p226 = scmp.eq.s32.totalorder %s20, 0
      %p227 = por %p225, %p226
      %s228 = ssub.s32 %s21, %s33
      %s229 = ssub.s32 %s22, %s29
      %s230 = sor.u32 %s228, %s229
      %p231 = scmp.eq.s32.totalorder %s230, 0
      %s233 = sadd.s32 %s232, 1
      %s234 = scalar_select %p231, %s232, %s233
      %p237 = pneg %p231
      %p238 = scmp.eq.s32.totalorder %s14, 3
      %p239 = por %p237, %p238
      %p240 = scmp.ne.s32.totalorder %s232, %s235
      %p241 = scmp.eq.s32.totalorder %s14, 0
      %p242 = por %p240, %p241
      %p243 = scmp.ne.s32.totalorder %s232, %s235
      %p244 = scmp.eq.s32.totalorder %s19, 3
      %p245 = por %p243, %p244
      %p246 = scmp.ne.s32.totalorder %s235, %s236
      %p247 = scmp.eq.s32.totalorder %s19, 0
      %p248 = por %p246, %p247
      %p249 = scmp.ne.s32.totalorder %s235, %s236
      %p250 = scmp.eq.s32.totalorder %s20, 3
      %p251 = por %p249, %p250
      %p253 = scmp.ne.s32.totalorder %s236, %s252
      %p254 = scmp.eq.s32.totalorder %s20, 0
      %p255 = por %p253, %p254
      %p256 = scmp.le.s32.totalorder 1, %s14
      %p257 = scmp.lt.s32.totalorder %s14, 5
      %p258 = pnand %p256, %p257
      %p259 = pneg %p258
      // Predicated region
      $region9: #{res_block_forward.5} parent=5 // pred_check
        _
      $region10: #{res_block_forward.5} parent=5 // pred_check_branch
        %261 = sbr.rel (%p258) target = $region12
      $region11: #{res_block_forward.5} parent=5 // pred_region
        %s262 = ssub.s32 %s14, 1
        // Predicated region
        $region13: #{res_block_forward.5} parent=11 // pred_check
          %p263 = pneg %p199
        $region14: #{res_block_forward.5} parent=11 // pred_check_branch
          %265 = sbr.rel (%p263) target = $region16
        $region15: #{res_block_forward.5} parent=11 // pred_region
          %s267 = ssub.s32 4608, 4608
          %268 = vsyncadd [#allocation5], %s267
          %s269 = sshll.u32 [#allocation4], 4
          %s270 = int_to_ptr.vmem [resolvable:$true] %s269
          %275 = dma.hbm_to_vmem [thread:$0]  %s5, 4608, %s270, [#allocation5], 128, 128, 8
        $region16: #{res_block_forward.5} parent=11 // pred_fallthru
          _
        // Predicated region
        $region17: #{res_block_forward.5} parent=11 // pred_check
          %p276 = pneg %p220
        $region18: #{res_block_forward.5} parent=11 // pred_check_branch
          %278 = sbr.rel (%p276) target = $region20
        $region19: #{res_block_forward.5} parent=11 // pred_region
          _
        $region20: #{res_block_forward.5} parent=11 // pred_fallthru
          _
      $region12: #{res_block_forward.5} parent=5 // pred_fallthru
        _
      %p279 = scmp.lt.s32.totalorder %s14, 4
      // Predicated region
      $region21: #{res_block_forward.5} parent=5 // pred_check
        %p280 = pneg %p279
      $region22: #{res_block_forward.5} parent=5 // pred_check_branch
        %282 = sbr.rel (%p280) target = $region24
      $region23: #{res_block_forward.5} parent=5 // pred_region
        // Predicated region
        $region25: #{res_block_forward.5} parent=23 // pred_check
          %p283 = pneg %p46
        $region26: #{res_block_forward.5} parent=23 // pred_check_branch
          %285 = sbr.rel (%p283) target = $region28
        $region27: #{res_block_forward.5} parent=23 // pred_region
          %p286 = scmp.lt.s32.totalorder %s21, 1
          %s287 = scalar_select %p286, %s21, 1
          %s288 = scalar_lea.vmem %s0, %s287
        $region28: #{res_block_forward.5} parent=23 // pred_fallthru
          _
        // Predicated region
        $region29: #{res_block_forward.5} parent=23 // pred_check
          %p289 = pneg %p72
        $region30: #{res_block_forward.5} parent=23 // pred_check_branch
          %291 = sbr.rel (%p289) target = $region32
        $region31: #{res_block_forward.5} parent=23 // pred_region
          %p292 = scmp.lt.s32.totalorder %s21, 1
          %s293 = scalar_select %p292, %s21, 1
          %s294 = scalar_lea.vmem %s1, %s293
        $region32: #{res_block_forward.5} parent=23 // pred_fallthru
          _
        // Predicated region
        $region33: #{res_block_forward.5} parent=23 // pred_check
          %p295 = pneg %p108
        $region34: #{res_block_forward.5} parent=23 // pred_check_branch
          %297 = sbr.rel (%p295) target = $region36
        $region35: #{res_block_forward.5} parent=23 // pred_region
          %s298 = smul.u32 %s22, 8
          %s299 = ssub.s32 %s298, 1
          %p300 = scmp.gt.s32.totalorder %s299, 0
          %s301 = scalar_select %p300, %s299, 0
          %p302 = scmp.lt.s32.totalorder %s21, 1
          %s303 = scalar_select %p302, %s21, 1
          %p304 = scmp.lt.s32.totalorder %s301, 15
          %s305 = scalar_select %p304, %s301, 15
          %s306 = smul.addr %s305, 2
          %s307 = smul.addr %s303, 32
          %s308 = sadd.s32 %s306, %s307
          %s309 = smul.addr %s308, 8
          %s310 = scalar_lea.vmem %s2, %s309
          %s311 = smul.u32 %s22, 8
          %s312 = ssub.s32 %s311, 1
          %p313 = scmp.gt.s32.totalorder %s312, 0
          %s314 = scalar_select %p313, %s312, 0
        $region36: #{res_block_forward.5} parent=23 // pred_fallthru
          _
        // Predicated region
        $region37: #{res_block_forward.5} parent=23 // pred_check
          %p315 = pneg %p136
        $region38: #{res_block_forward.5} parent=23 // pred_check_branch
          %317 = sbr.rel (%p315) target = $region40
        $region39: #{res_block_forward.5} parent=23 // pred_region
          %s318 = smul.u32 8, %s22
          %p319 = scmp.lt.s32.totalorder %s21, 1
          %s320 = scalar_select %p319, %s21, 1
          %p321 = scmp.lt.s32.totalorder %s318, 15
          %s322 = scalar_select %p321, %s318, 15
          %s323 = smul.addr %s322, 2
          %s324 = smul.addr %s320, 32
          %s325 = sadd.s32 %s323, %s324
          %s326 = smul.addr %s325, 8
          %s327 = scalar_lea.vmem %s3, %s326
          %s328 = smul.u32 8, %s22
        $region40: #{res_block_forward.5} parent=23 // pred_fallthru
          _
        // Predicated region
        $region41: #{res_block_forward.5} parent=23 // pred_check
          %p329 = pneg %p172
        $region42: #{res_block_forward.5} parent=23 // pred_check_branch
          %331 = sbr.rel (%p329) target = $region44
        $region43: #{res_block_forward.5} parent=23 // pred_region
          %s332 = smul.u32 %s22, 8
          %s333 = sadd.s32 %s332, 8
          %p334 = scmp.lt.s32.totalorder %s333, 15
          %s335 = scalar_select %p334, %s333, 15
          %p336 = scmp.lt.s32.totalorder %s21, 1
          %s337 = scalar_select %p336, %s21, 1
          %p338 = scmp.lt.s32.totalorder %s335, 15
          %s339 = scalar_select %p338, %s335, 15
          %s340 = smul.addr %s339, 2
          %s341 = smul.addr %s337, 32
          %s342 = sadd.s32 %s340, %s341
          %s343 = smul.addr %s342, 8
          %s344 = scalar_lea.vmem %s4, %s343
          %s345 = smul.u32 %s22, 8
          %s346 = sadd.s32 %s345, 8
          %p347 = scmp.lt.s32.totalorder %s346, 15
          %s348 = scalar_select %p347, %s346, 15
        $region44: #{res_block_forward.5} parent=23 // pred_fallthru
          _
      $region24: #{res_block_forward.5} parent=5 // pred_fallthru
        _
      %p349 = scmp.le.s32.totalorder 1, %s14
      %p350 = scmp.lt.s32.totalorder %s14, 5
      %p351 = pnand %p349, %p350
      %p352 = pneg %p351
      // Predicated region
      $region45: #{res_block_forward.5} parent=5 // pred_check
        _
      $region46: #{res_block_forward.5} parent=5 // pred_check_branch
        %354 = sbr.rel (%p351) target = $region48
      $region47: #{res_block_forward.5} parent=5 // pred_region
        %s355 = ssub.s32 %s14, 1
        // Predicated region
        $region49: #{res_block_forward.5} parent=47 // pred_check
          %p356 = pneg %p199
        $region50: #{res_block_forward.5} parent=47 // pred_check_branch
          %358 = sbr.rel (%p356) target = $region52
        $region51: #{res_block_forward.5} parent=47 // pred_region
          %359 = dma.done [#allocation5], 4608
        $region52: #{res_block_forward.5} parent=47 // pred_fallthru
          _
        %p360 = scmp.lt.s32.totalorder %s23, 1
        %s361 = scalar_select %p360, %s23, 1
        %s362 = scalar_lea.vmem %s0, %s361
        %p363 = pneg %p52
        %p364 = pneg %p49
        %p365 = scmp.lt.s32.totalorder %s23, 1
        %s366 = scalar_select %p365, %s23, 1
        %s367 = scalar_lea.vmem %s1, %s366
        %p368 = pneg %p78
        %p369 = pneg %p75
        %s370 = smul.u32 %s24, 8
        %s371 = ssub.s32 %s370, 1
        %p372 = scmp.gt.s32.totalorder %s371, 0
        %s373 = scalar_select %p372, %s371, 0
        %p374 = scmp.lt.s32.totalorder %s23, 1
        %s375 = scalar_select %p374, %s23, 1
        %p376 = scmp.lt.s32.totalorder %s373, 15
        %s377 = scalar_select %p376, %s373, 15
        %s378 = smul.addr %s377, 2
        %s379 = smul.addr %s375, 32
        %s380 = sadd.s32 %s378, %s379
        %s381 = smul.addr %s380, 8
        %s382 = scalar_lea.vmem %s2, %s381
        %p383 = pneg %p114
        %p384 = pneg %p111
        %s385 = smul.u32 8, %s24
        %p386 = scmp.lt.s32.totalorder %s23, 1
        %s387 = scalar_select %p386, %s23, 1
        %p388 = scmp.lt.s32.totalorder %s385, 15
        %s389 = scalar_select %p388, %s385, 15
        %s390 = smul.addr %s389, 2
        %s391 = smul.addr %s387, 32
        %s392 = sadd.s32 %s390, %s391
        %s393 = smul.addr %s392, 8
        %s394 = scalar_lea.vmem %s3, %s393
        %p395 = pneg %p142
        %p396 = pneg %p139
        %s397 = smul.u32 %s24, 8
        %s398 = sadd.s32 %s397, 8
        %p399 = scmp.lt.s32.totalorder %s398, 15
        %s400 = scalar_select %p399, %s398, 15
        %p401 = scmp.lt.s32.totalorder %s23, 1
        %s402 = scalar_select %p401, %s23, 1
        %p403 = scmp.lt.s32.totalorder %s400, 15
        %s404 = scalar_select %p403, %s400, 15
        %s405 = smul.addr %s404, 2
        %s406 = smul.addr %s402, 32
        %s407 = sadd.s32 %s405, %s406
        %s408 = smul.addr %s407, 8
        %s409 = scalar_lea.vmem %s4, %s408
        %p410 = pneg %p178
        %p411 = pneg %p175
        %p412 = pneg %p199
        %p413 = pneg %p196
        %p414 = pneg %p220
        %p415 = pneg %p217
        %p416 = pneg %p248
        %p417 = pneg %p245
        %s418 = smul.u32 8, %s24
        %p419 = scmp.lt.s32.totalorder %s23, 1
        %s420 = scalar_select %p419, %s23, 1
        %p421 = scmp.lt.s32.totalorder %s418, 15
        %s422 = scalar_select %p421, %s418, 15
        %s423 = smul.addr %s422, 2
        %s424 = smul.addr %s420, 32
        %s425 = sadd.s32 %s423, %s424
        %s426 = smul.addr %s425, 8
        %s427 = scalar_lea.vmem %s7, %s426
        %p428 = scmp.lt.s32.totalorder %s23, 1
        %s429 = scalar_select %p428, %s23, 1
        %s430 = scalar_lea.vmem %s0, %s429
        %p431 = scmp.lt.s32.totalorder %s23, 1
        %s432 = scalar_select %p431, %s23, 1
        %s433 = scalar_lea.vmem %s1, %s432
        %s434 = smul.u32 %s24, 8
        %s435 = ssub.s32 %s434, 1
        %p436 = scmp.gt.s32.totalorder %s435, 0
        %s437 = scalar_select %p436, %s435, 0
        %p438 = scmp.lt.s32.totalorder %s23, 1
        %s439 = scalar_select %p438, %s23, 1
        %p440 = scmp.lt.s32.totalorder %s437, 15
        %s441 = scalar_select %p440, %s437, 15
        %s442 = smul.addr %s441, 2
        %s443 = smul.addr %s439, 32
        %s444 = sadd.s32 %s442, %s443
        %s445 = smul.addr %s444, 8
        %s446 = scalar_lea.vmem %s2, %s445
        %s447 = smul.u32 %s24, 8
        %s448 = ssub.s32 %s447, 1
        %p449 = scmp.gt.s32.totalorder %s448, 0
        %s450 = scalar_select %p449, %s448, 0
        %s451 = smul.u32 8, %s24
        %p452 = scmp.lt.s32.totalorder %s23, 1
        %s453 = scalar_select %p452, %s23, 1
        %p454 = scmp.lt.s32.totalorder %s451, 15
        %s455 = scalar_select %p454, %s451, 15
        %s456 = smul.addr %s455, 2
        %s457 = smul.addr %s453, 32
        %s458 = sadd.s32 %s456, %s457
        %s459 = smul.addr %s458, 8
        %s460 = scalar_lea.vmem %s3, %s459
        %s461 = smul.u32 8, %s24
        %s462 = smul.u32 %s24, 8
        %s463 = sadd.s32 %s462, 8
        %p464 = scmp.lt.s32.totalorder %s463, 15
        %s465 = scalar_select %p464, %s463, 15
        %p466 = scmp.lt.s32.totalorder %s23, 1
        %s467 = scalar_select %p466, %s23, 1
        %p468 = scmp.lt.s32.totalorder %s465, 15
        %s469 = scalar_select %p468, %s465, 15
        %s470 = smul.addr %s469, 2
        %s471 = smul.addr %s467, 32
        %s472 = sadd.s32 %s470, %s471
        %s473 = smul.addr %s472, 8
        %s474 = scalar_lea.vmem %s4, %s473
        %s475 = smul.u32 %s24, 8
        %s476 = sadd.s32 %s475, 8
        %p477 = scmp.lt.s32.totalorder %s476, 15
        %s478 = scalar_select %p477, %s476, 15
        %s479 = smul.u32 8, %s24
        %p480 = scmp.lt.s32.totalorder %s23, 1
        %s481 = scalar_select %p480, %s23, 1
        %p482 = scmp.lt.s32.totalorder %s479, 15
        %s483 = scalar_select %p482, %s479, 15
        %s484 = smul.addr %s483, 2
        %s485 = smul.addr %s481, 32
        %s486 = sadd.s32 %s484, %s485
        %s487 = smul.addr %s486, 8
        %s488 = scalar_lea.vmem %s7, %s487
        %s489 = smul.u32 8, %s24
        %v490 = vld [vmem:[%s430] sm:$0x1]
        %v491 = vld [vmem:[%s433] sm:$0x1]
        %vm492 = vcmask 253952
        %493 = vst.msk [vmem:[#allocation2] sm:$0x1] %vm492, 0.0
        %494 = vst.msk [vmem:[#allocation2 + $0x18] sm:$0x1] %vm492, 0.0
        %495 = vst.msk [vmem:[#allocation2 + $0x30] sm:$0x1] %vm492, 0.0
        %496 = vst.msk [vmem:[#allocation2 + $0x48] sm:$0x1] %vm492, 0.0
        %497 = vst.msk [vmem:[#allocation2 + $0x60] sm:$0x1] %vm492, 0.0
        %498 = vst.msk [vmem:[#allocation2 + $0x78] sm:$0x1] %vm492, 0.0
        %499 = vst.msk [vmem:[#allocation2 + $0x90] sm:$0x1] %vm492, 0.0
        %500 = vst.msk [vmem:[#allocation2 + $0xa8] sm:$0x1] %vm492, 0.0
        %501 = vst.msk [vmem:[#allocation2 + $0xc0] sm:$0x1] %vm492, 0.0
        %502 = vst.msk [vmem:[#allocation2 + $0xd8] sm:$0x1] %vm492, 0.0
        %503 = vst.msk [vmem:[#allocation2 + $0x11] sm:$0x1] %vm492, 0.0
        %504 = vst.msk [vmem:[#allocation2 + $0x29] sm:$0x1] %vm492, 0.0
        %505 = vst.msk [vmem:[#allocation2 + $0x41] sm:$0x1] %vm492, 0.0
        %506 = vst.msk [vmem:[#allocation2 + $0x59] sm:$0x1] %vm492, 0.0
        %507 = vst.msk [vmem:[#allocation2 + $0x71] sm:$0x1] %vm492, 0.0
        %508 = vst.msk [vmem:[#allocation2 + $0x89] sm:$0x1] %vm492, 0.0
        %509 = vst.msk [vmem:[#allocation2 + $0xa1] sm:$0x1] %vm492, 0.0
        %510 = vst.msk [vmem:[#allocation2 + $0xb9] sm:$0x1] %vm492, 0.0
        %511 = vst.msk [vmem:[#allocation2 + $0xd1] sm:$0x1] %vm492, 0.0
        %512 = vst.msk [vmem:[#allocation2 + $0xe9] sm:$0x1] %vm492, 0.0
        %v513 = vld [vmem:[%s460] sm:$0xff]
        %v514 = vld [vmem:[%s460 + $0x8] sm:$0xff]
        %v515 = vld [vmem:[%s460 + $0x10] sm:$0xff]
        %v516 = vld [vmem:[%s460 + $0x18] sm:$0xff]
        %v517 = vld [vmem:[%s460 + $0x20] sm:$0xff]
        %v518 = vld [vmem:[%s460 + $0x28] sm:$0xff]
        %v519 = vld [vmem:[%s460 + $0x30] sm:$0xff]
        %v520 = vld [vmem:[%s460 + $0x38] sm:$0xff]
        %v521 = vld [vmem:[%s460 + $0x40] sm:$0xff]
        %v522 = vld [vmem:[%s460 + $0x48] sm:$0xff]
        %v523 = vld [vmem:[%s460 + $0x50] sm:$0xff]
        %v524 = vld [vmem:[%s460 + $0x58] sm:$0xff]
        %v525 = vld [vmem:[%s460 + $0x60] sm:$0xff]
        %v526 = vld [vmem:[%s460 + $0x68] sm:$0xff]
        %v527 = vld [vmem:[%s460 + $0x70] sm:$0xff]
        %v528 = vld [vmem:[%s460 + $0x78] sm:$0xff]
        %v530 = vlaneseq
        %v531 = vshrl.u32 %v530, 7
        %v532 = vsub.s32 0, %v531
        %v533 = vrot.slane %v490, %v532
        %v535 = vmul.f32 %v513, %v533
        %v536 = vmul.f32 %v514, %v533
        %v537 = vmul.f32 %v515, %v533
        %v538 = vmul.f32 %v516, %v533
        %v539 = vmul.f32 %v517, %v533
        %v540 = vmul.f32 %v518, %v533
        %v541 = vmul.f32 %v519, %v533
        %v542 = vmul.f32 %v520, %v533
        %v543 = vmul.f32 %v521, %v533
        %v544 = vmul.f32 %v522, %v533
        %v545 = vmul.f32 %v523, %v533
        %v546 = vmul.f32 %v524, %v533
        %v547 = vmul.f32 %v525, %v533
        %v548 = vmul.f32 %v526, %v533
        %v549 = vmul.f32 %v527, %v533
        %v550 = vmul.f32 %v528, %v533
        %v552 = vlaneseq
        %v553 = vshrl.u32 %v552, 7
        %v554 = vsub.s32 0, %v553
        %v555 = vrot.slane %v491, %v554
        %v557 = vadd.f32 %v535, %v555
        %v558 = vadd.f32 %v536, %v555
        %v559 = vadd.f32 %v537, %v555
        %v560 = vadd.f32 %v538, %v555
        %v561 = vadd.f32 %v539, %v555
        %v562 = vadd.f32 %v540, %v555
        %v563 = vadd.f32 %v541, %v555
        %v564 = vadd.f32 %v542, %v555
        %v565 = vadd.f32 %v543, %v555
        %v566 = vadd.f32 %v544, %v555
        %v567 = vadd.f32 %v545, %v555
        %v568 = vadd.f32 %v546, %v555
        %v569 = vadd.f32 %v547, %v555
        %v570 = vadd.f32 %v548, %v555
        %v571 = vadd.f32 %v549, %v555
        %v572 = vadd.f32 %v550, %v555
        %v573 = vxor.u32 %v557, 2147483648
        %v574 = vxor.u32 %v558, 2147483648
        %v575 = vxor.u32 %v559, 2147483648
        %v576 = vxor.u32 %v560, 2147483648
        %v577 = vxor.u32 %v561, 2147483648
        %v578 = vxor.u32 %v562, 2147483648
        %v579 = vxor.u32 %v563, 2147483648
        %v580 = vxor.u32 %v564, 2147483648
        %v581 = vxor.u32 %v565, 2147483648
        %v582 = vxor.u32 %v566, 2147483648
        %v583 = vxor.u32 %v567, 2147483648
        %v584 = vxor.u32 %v568, 2147483648
        %v585 = vxor.u32 %v569, 2147483648
        %v586 = vxor.u32 %v570, 2147483648
        %v587 = vxor.u32 %v571, 2147483648
        %v588 = vxor.u32 %v572, 2147483648
        %v589 = vmul.f32 %v573, 1.442695
        %v590 = vpow.pop %v589
        %v591 = vmul.f32 %v574, 1.442695
        %v592 = vpow.pop %v591
        %v593 = vmul.f32 %v575, 1.442695
        %v594 = vpow.pop %v593
        %v595 = vmul.f32 %v576, 1.442695
        %v596 = vpow.pop %v595
        %v597 = vmul.f32 %v577, 1.442695
        %v598 = vpow.pop %v597
        %v599 = vmul.f32 %v578, 1.442695
        %v600 = vpow.pop %v599
        %v601 = vmul.f32 %v579, 1.442695
        %v602 = vpow.pop %v601
        %v603 = vmul.f32 %v580, 1.442695
        %v604 = vpow.pop %v603
        %v605 = vmul.f32 %v581, 1.442695
        %v606 = vpow.pop %v605
        %v607 = vmul.f32 %v582, 1.442695
        %v608 = vpow.pop %v607
        %v609 = vmul.f32 %v583, 1.442695
        %v610 = vpow.pop %v609
        %v611 = vmul.f32 %v584, 1.442695
        %v612 = vpow.pop %v611
        %v613 = vmul.f32 %v585, 1.442695
        %v614 = vpow.pop %v613
        %v615 = vmul.f32 %v586, 1.442695
        %v616 = vpow.pop %v615
        %v617 = vmul.f32 %v587, 1.442695
        %v618 = vpow.pop %v617
        %v619 = vmul.f32 %v588, 1.442695
        %v620 = vpow.pop %v619
        %v621 = vadd.f32 %v590, 1.0
        %v622 = vadd.f32 %v592, 1.0
        %v623 = vadd.f32 %v594, 1.0
        %v624 = vadd.f32 %v596, 1.0
        %v625 = vadd.f32 %v598, 1.0
        %v626 = vadd.f32 %v600, 1.0
        %v627 = vadd.f32 %v602, 1.0
        %v628 = vadd.f32 %v604, 1.0
        %v629 = vadd.f32 %v606, 1.0
        %v630 = vadd.f32 %v608, 1.0
        %v631 = vadd.f32 %v610, 1.0
        %v632 = vadd.f32 %v612, 1.0
        %v633 = vadd.f32 %v614, 1.0
        %v634 = vadd.f32 %v616, 1.0
        %v635 = vadd.f32 %v618, 1.0
        %v636 = vadd.f32 %v620, 1.0
        %v637 = vrcp.pop %v621
        %v638 = vmul.f32 1.0, %v637
        %v639 = vrcp.pop %v622
        %v640 = vmul.f32 1.0, %v639
        %v641 = vrcp.pop %v623
        %v642 = vmul.f32 1.0, %v641
        %v643 = vrcp.pop %v624
        %v644 = vmul.f32 1.0, %v643
        %v645 = vrcp.pop %v625
        %v646 = vmul.f32 1.0, %v645
        %v647 = vrcp.pop %v626
        %v648 = vmul.f32 1.0, %v647
        %v649 = vrcp.pop %v627
        %v650 = vmul.f32 1.0, %v649
        %v651 = vrcp.pop %v628
        %v652 = vmul.f32 1.0, %v651
        %v653 = vrcp.pop %v629
        %v654 = vmul.f32 1.0, %v653
        %v655 = vrcp.pop %v630
        %v656 = vmul.f32 1.0, %v655
        %v657 = vrcp.pop %v631
        %v658 = vmul.f32 1.0, %v657
        %v659 = vrcp.pop %v632
        %v660 = vmul.f32 1.0, %v659
        %v661 = vrcp.pop %v633
        %v662 = vmul.f32 1.0, %v661
        %v663 = vrcp.pop %v634
        %v664 = vmul.f32 1.0, %v663
        %v665 = vrcp.pop %v635
        %v666 = vmul.f32 1.0, %v665
        %v667 = vrcp.pop %v636
        %v668 = vmul.f32 1.0, %v667
        %v669 = vmul.f32 %v557, %v638
        %v670 = vmul.f32 %v558, %v640
        %v671 = vmul.f32 %v559, %v642
        %v672 = vmul.f32 %v560, %v644
        %v673 = vmul.f32 %v561, %v646
        %v674 = vmul.f32 %v562, %v648
        %v675 = vmul.f32 %v563, %v650
        %v676 = vmul.f32 %v564, %v652
        %v677 = vmul.f32 %v565, %v654
        %v678 = vmul.f32 %v566, %v656
        %v679 = vmul.f32 %v567, %v658
        %v680 = vmul.f32 %v568, %v660
        %v681 = vmul.f32 %v569, %v662
        %v682 = vmul.f32 %v570, %v664
        %v683 = vmul.f32 %v571, %v666
        %v684 = vmul.f32 %v572, %v668
        %v685 = vld [vmem:[%s446] sm:$0xff]
        %v686 = vld [vmem:[%s446 + $0x8] sm:$0xff]
        %v687 = vmul.f32 %v685, %v533
        %v688 = vmul.f32 %v686, %v533
        %v689 = vadd.f32 %v687, %v555
        %v690 = vadd.f32 %v688, %v555
        %v691 = vxor.u32 %v689, 2147483648
        %v692 = vxor.u32 %v690, 2147483648
        %v693 = vmul.f32 %v691, 1.442695
        %v694 = vpow.pop %v693
        %v695 = vmul.f32 %v692, 1.442695
        %v696 = vpow.pop %v695
        %v697 = vadd.f32 %v694, 1.0
        %v698 = vadd.f32 %v696, 1.0
        %v699 = vrcp.pop %v697
        %v700 = vmul.f32 1.0, %v699
        %v701 = vrcp.pop %v698
        %v702 = vmul.f32 1.0, %v701
        %v703 = vmul.f32 %v689, %v700
        %v704 = vmul.f32 %v690, %v702
        %v705 = vld [vmem:[%s474] sm:$0xff]
        %v706 = vld [vmem:[%s474 + $0x8] sm:$0xff]
        %v707 = vmul.f32 %v705, %v533
        %v708 = vmul.f32 %v706, %v533
        %v709 = vadd.f32 %v707, %v555
        %v710 = vadd.f32 %v708, %v555
        %v711 = vxor.u32 %v709, 2147483648
        %v712 = vxor.u32 %v710, 2147483648
        %v713 = vmul.f32 %v711, 1.442695
        %v714 = vpow.pop %v713
        %v715 = vmul.f32 %v712, 1.442695
        %v716 = vpow.pop %v715
        %v717 = vadd.f32 %v714, 1.0
        %v718 = vadd.f32 %v716, 1.0
        %v719 = vrcp.pop %v717
        %v720 = vmul.f32 1.0, %v719
        %v721 = vrcp.pop %v718
        %v722 = vmul.f32 1.0, %v721
        %v723 = vmul.f32 %v709, %v720
        %v724 = vmul.f32 %v710, %v722
        %p725 = scmp.gt.s32.totalorder %s24, 0
        %s726 = scalar_select %p725, 1, 0
        %v727 = vstv %s726
        %vm728 = vcmp.eq.s32.totalorder %v727, 1
        %v729 = vsel %vm728, %v703, 0.0
        %v730 = vsel %vm728, %v704, 0.0
        %p731 = scmp.lt.s32.totalorder %s24, 1
        %s732 = scalar_select %p731, 1, 0
        %v733 = vstv %s732
        %vm734 = vcmp.eq.s32.totalorder %v733, 1
        %v735 = vsel %vm734, %v723, 0.0
        %v736 = vsel %vm734, %v724, 0.0
        %s737 = scalar_lea.vmem [#allocation2], 24
        %vm738 = vcmask 261120
        %739 = vst.msk [vmem:[%s737 + $0x1] sm:$0xff] %vm738, %v669
        %740 = vst.msk [vmem:[%s737 + $0x9] sm:$0xff] %vm738, %v670
        %741 = vst.msk [vmem:[%s737 + $0x19] sm:$0xff] %vm738, %v671
        %742 = vst.msk [vmem:[%s737 + $0x21] sm:$0xff] %vm738, %v672
        %743 = vst.msk [vmem:[%s737 + $0x31] sm:$0xff] %vm738, %v673
        %744 = vst.msk [vmem:[%s737 + $0x39] sm:$0xff] %vm738, %v674
        %745 = vst.msk [vmem:[%s737 + $0x49] sm:$0xff] %vm738, %v675
        %746 = vst.msk [vmem:[%s737 + $0x51] sm:$0xff] %vm738, %v676
        %747 = vst.msk [vmem:[%s737 + $0x61] sm:$0xff] %vm738, %v677
        %748 = vst.msk [vmem:[%s737 + $0x69] sm:$0xff] %vm738, %v678
        %749 = vst.msk [vmem:[%s737 + $0x79] sm:$0xff] %vm738, %v679
        %750 = vst.msk [vmem:[%s737 + $0x81] sm:$0xff] %vm738, %v680
        %751 = vst.msk [vmem:[%s737 + $0x91] sm:$0xff] %vm738, %v681
        %752 = vst.msk [vmem:[%s737 + $0x99] sm:$0xff] %vm738, %v682
        %753 = vst.msk [vmem:[%s737 + $0xa9] sm:$0xff] %vm738, %v683
        %754 = vst.msk [vmem:[%s737 + $0xb1] sm:$0xff] %vm738, %v684
        %755 = vst.msk [vmem:[#allocation2 + $0x1] sm:$0xff] %vm738, %v729
        %756 = vst.msk [vmem:[#allocation2 + $0x9] sm:$0xff] %vm738, %v730
        %s757 = scalar_lea.vmem [#allocation2], 216
        %758 = vst.msk [vmem:[%s757 + $0x1] sm:$0xff] %vm738, %v735
        %759 = vst.msk [vmem:[%s757 + $0x9] sm:$0xff] %vm738, %v736
        %v760 = vld [vmem:[#allocation2] sm:$0xff]
        %v761 = vld [vmem:[#allocation2 + $0x8] sm:$0xff]
        %v762 = vld [vmem:[#allocation2 + $0x18] sm:$0xff]
        %v763 = vld [vmem:[#allocation2 + $0x20] sm:$0xff]
        %v764 = vld [vmem:[#allocation2 + $0x30] sm:$0xff]
        %v765 = vld [vmem:[#allocation2 + $0x38] sm:$0xff]
        %v766 = vld [vmem:[#allocation2 + $0x48] sm:$0xff]
        %v767 = vld [vmem:[#allocation2 + $0x50] sm:$0xff]
        %v768 = vld [vmem:[#allocation2 + $0x60] sm:$0xff]
        %v769 = vld [vmem:[#allocation2 + $0x68] sm:$0xff]
        %v770 = vld [vmem:[#allocation2 + $0x78] sm:$0xff]
        %v771 = vld [vmem:[#allocation2 + $0x80] sm:$0xff]
        %v772 = vld [vmem:[#allocation2 + $0x90] sm:$0xff]
        %v773 = vld [vmem:[#allocation2 + $0x98] sm:$0xff]
        %v774 = vld [vmem:[#allocation2 + $0xa8] sm:$0xff]
        %v775 = vld [vmem:[#allocation2 + $0xb0] sm:$0xff]
        %776 = vst.msk [vmem:[#allocation3] sm:$0xff] %vm738, %v760
        %777 = vst.msk [vmem:[#allocation3 + $0x18] sm:$0xff] %vm738, %v761
        %778 = vst.msk [vmem:[#allocation3 + $0x30] sm:$0xff] %vm738, %v762
        %779 = vst.msk [vmem:[#allocation3 + $0x48] sm:$0xff] %vm738, %v763
        %780 = vst.msk [vmem:[#allocation3 + $0x60] sm:$0xff] %vm738, %v764
        %781 = vst.msk [vmem:[#allocation3 + $0x78] sm:$0xff] %vm738, %v765
        %782 = vst.msk [vmem:[#allocation3 + $0x90] sm:$0xff] %vm738, %v766
        %783 = vst.msk [vmem:[#allocation3 + $0xa8] sm:$0xff] %vm738, %v767
        %784 = vst.msk [vmem:[#allocation3 + $0xc0] sm:$0xff] %vm738, %v768
        %785 = vst.msk [vmem:[#allocation3 + $0xd8] sm:$0xff] %vm738, %v769
        %786 = vst.msk [vmem:[#allocation3 + $0xf0] sm:$0xff] %vm738, %v770
        %787 = vst.msk [vmem:[#allocation3 + $0x108] sm:$0xff] %vm738, %v771
        %788 = vst.msk [vmem:[#allocation3 + $0x120] sm:$0xff] %vm738, %v772
        %789 = vst.msk [vmem:[#allocation3 + $0x138] sm:$0xff] %vm738, %v773
        %790 = vst.msk [vmem:[#allocation3 + $0x150] sm:$0xff] %vm738, %v774
        %791 = vst.msk [vmem:[#allocation3 + $0x168] sm:$0xff] %vm738, %v775
        %v792 = vld [vmem:[#allocation2 + $0x1] sm:$0xff]
        %v793 = vld [vmem:[#allocation2 + $0x9] sm:$0xff]
        %v794 = vld [vmem:[#allocation2 + $0x19] sm:$0xff]
        %v795 = vld [vmem:[#allocation2 + $0x21] sm:$0xff]
        %v796 = vld [vmem:[#allocation2 + $0x31] sm:$0xff]
        %v797 = vld [vmem:[#allocation2 + $0x39] sm:$0xff]
        %v798 = vld [vmem:[#allocation2 + $0x49] sm:$0xff]
        %v799 = vld [vmem:[#allocation2 + $0x51] sm:$0xff]
        %v800 = vld [vmem:[#allocation2 + $0x61] sm:$0xff]
        %v801 = vld [vmem:[#allocation2 + $0x69] sm:$0xff]
        %v802 = vld [vmem:[#allocation2 + $0x79] sm:$0xff]
        %v803 = vld [vmem:[#allocation2 + $0x81] sm:$0xff]
        %v804 = vld [vmem:[#allocation2 + $0x91] sm:$0xff]
        %v805 = vld [vmem:[#allocation2 + $0x99] sm:$0xff]
        %v806 = vld [vmem:[#allocation2 + $0xa9] sm:$0xff]
        %v807 = vld [vmem:[#allocation2 + $0xb1] sm:$0xff]
        %824 = vrot.lane.b32.xlu0 %v792, 32
        %v825 = vpop.permute.xlu0 %824
        %826 = vrot.lane.b32.xlu0 %v793, 32
        %v827 = vpop.permute.xlu0 %826
        %828 = vrot.lane.b32.xlu0 %v794, 32
        %v829 = vpop.permute.xlu0 %828
        %830 = vrot.lane.b32.xlu0 %v795, 32
        %v831 = vpop.permute.xlu0 %830
        %832 = vrot.lane.b32.xlu0 %v796, 32
        %v833 = vpop.permute.xlu0 %832
        %834 = vrot.lane.b32.xlu0 %v797, 32
        %v835 = vpop.permute.xlu0 %834
        %836 = vrot.lane.b32.xlu0 %v798, 32
        %v837 = vpop.permute.xlu0 %836
        %838 = vrot.lane.b32.xlu0 %v799, 32
        %v839 = vpop.permute.xlu0 %838
        %840 = vrot.lane.b32.xlu0 %v800, 32
        %v841 = vpop.permute.xlu0 %840
        %842 = vrot.lane.b32.xlu0 %v801, 32
        %v843 = vpop.permute.xlu0 %842
        %844 = vrot.lane.b32.xlu0 %v802, 32
        %v845 = vpop.permute.xlu0 %844
        %846 = vrot.lane.b32.xlu0 %v803, 32
        %v847 = vpop.permute.xlu0 %846
        %848 = vrot.lane.b32.xlu0 %v804, 32
        %v849 = vpop.permute.xlu0 %848
        %850 = vrot.lane.b32.xlu0 %v805, 32
        %v851 = vpop.permute.xlu0 %850
        %852 = vrot.lane.b32.xlu0 %v806, 32
        %v853 = vpop.permute.xlu0 %852
        %854 = vrot.lane.b32.xlu0 %v807, 32
        %v855 = vpop.permute.xlu0 %854
        %vm872 = vcmask 523520
        %873 = vst.msk [vmem:[#allocation3] sm:$0xff] %vm872, %v825
        %874 = vst.msk [vmem:[#allocation3 + $0x18] sm:$0xff] %vm872, %v827
        %875 = vst.msk [vmem:[#allocation3 + $0x30] sm:$0xff] %vm872, %v829
        %876 = vst.msk [vmem:[#allocation3 + $0x48] sm:$0xff] %vm872, %v831
        %877 = vst.msk [vmem:[#allocation3 + $0x60] sm:$0xff] %vm872, %v833
        %878 = vst.msk [vmem:[#allocation3 + $0x78] sm:$0xff] %vm872, %v835
        %879 = vst.msk [vmem:[#allocation3 + $0x90] sm:$0xff] %vm872, %v837
        %880 = vst.msk [vmem:[#allocation3 + $0xa8] sm:$0xff] %vm872, %v839
        %881 = vst.msk [vmem:[#allocation3 + $0xc0] sm:$0xff] %vm872, %v841
        %882 = vst.msk [vmem:[#allocation3 + $0xd8] sm:$0xff] %vm872, %v843
        %883 = vst.msk [vmem:[#allocation3 + $0xf0] sm:$0xff] %vm872, %v845
        %884 = vst.msk [vmem:[#allocation3 + $0x108] sm:$0xff] %vm872, %v847
        %885 = vst.msk [vmem:[#allocation3 + $0x120] sm:$0xff] %vm872, %v849
        %886 = vst.msk [vmem:[#allocation3 + $0x138] sm:$0xff] %vm872, %v851
        %887 = vst.msk [vmem:[#allocation3 + $0x150] sm:$0xff] %vm872, %v853
        %888 = vst.msk [vmem:[#allocation3 + $0x168] sm:$0xff] %vm872, %v855
        %v889 = vld [vmem:[#allocation2 + $0x2] sm:$0xff]
        %v890 = vld [vmem:[#allocation2 + $0xa] sm:$0xff]
        %v891 = vld [vmem:[#allocation2 + $0x1a] sm:$0xff]
        %v892 = vld [vmem:[#allocation2 + $0x22] sm:$0xff]
        %v893 = vld [vmem:[#allocation2 + $0x32] sm:$0xff]
        %v894 = vld [vmem:[#allocation2 + $0x3a] sm:$0xff]
        %v895 = vld [vmem:[#allocation2 + $0x4a] sm:$0xff]
        %v896 = vld [vmem:[#allocation2 + $0x52] sm:$0xff]
        %v897 = vld [vmem:[#allocation2 + $0x62] sm:$0xff]
        %v898 = vld [vmem:[#allocation2 + $0x6a] sm:$0xff]
        %v899 = vld [vmem:[#allocation2 + $0x7a] sm:$0xff]
        %v900 = vld [vmem:[#allocation2 + $0x82] sm:$0xff]
        %v901 = vld [vmem:[#allocation2 + $0x92] sm:$0xff]
        %v902 = vld [vmem:[#allocation2 + $0x9a] sm:$0xff]
        %v903 = vld [vmem:[#allocation2 + $0xaa] sm:$0xff]
        %v904 = vld [vmem:[#allocation2 + $0xb2] sm:$0xff]
        %921 = vrot.lane.b32.xlu0 %v889, 64
        %v922 = vpop.permute.xlu0 %921
        %923 = vrot.lane.b32.xlu0 %v890, 64
        %v924 = vpop.permute.xlu0 %923
        %925 = vrot.lane.b32.xlu0 %v891, 64
        %v926 = vpop.permute.xlu0 %925
        %927 = vrot.lane.b32.xlu0 %v892, 64
        %v928 = vpop.permute.xlu0 %927
        %929 = vrot.lane.b32.xlu0 %v893, 64
        %v930 = vpop.permute.xlu0 %929
        %931 = vrot.lane.b32.xlu0 %v894, 64
        %v932 = vpop.permute.xlu0 %931
        %933 = vrot.lane.b32.xlu0 %v895, 64
        %v934 = vpop.permute.xlu0 %933
        %935 = vrot.lane.b32.xlu0 %v896, 64
        %v936 = vpop.permute.xlu0 %935
        %937 = vrot.lane.b32.xlu0 %v897, 64
        %v938 = vpop.permute.xlu0 %937
        %939 = vrot.lane.b32.xlu0 %v898, 64
        %v940 = vpop.permute.xlu0 %939
        %941 = vrot.lane.b32.xlu0 %v899, 64
        %v942 = vpop.permute.xlu0 %941
        %943 = vrot.lane.b32.xlu0 %v900, 64
        %v944 = vpop.permute.xlu0 %943
        %945 = vrot.lane.b32.xlu0 %v901, 64
        %v946 = vpop.permute.xlu0 %945
        %947 = vrot.lane.b32.xlu0 %v902, 64
        %v948 = vpop.permute.xlu0 %947
        %949 = vrot.lane.b32.xlu0 %v903, 64
        %v950 = vpop.permute.xlu0 %949
        %951 = vrot.lane.b32.xlu0 %v904, 64
        %v952 = vpop.permute.xlu0 %951
        %vm969 = vcmask 785920
        %970 = vst.msk [vmem:[#allocation3] sm:$0xff] %vm969, %v922
        %971 = vst.msk [vmem:[#allocation3 + $0x18] sm:$0xff] %vm969, %v924
        %972 = vst.msk [vmem:[#allocation3 + $0x30] sm:$0xff] %vm969, %v926
        %973 = vst.msk [vmem:[#allocation3 + $0x48] sm:$0xff] %vm969, %v928
        %974 = vst.msk [vmem:[#allocation3 + $0x60] sm:$0xff] %vm969, %v930
        %975 = vst.msk [vmem:[#allocation3 + $0x78] sm:$0xff] %vm969, %v932
        %976 = vst.msk [vmem:[#allocation3 + $0x90] sm:$0xff] %vm969, %v934
        %977 = vst.msk [vmem:[#allocation3 + $0xa8] sm:$0xff] %vm969, %v936
        %978 = vst.msk [vmem:[#allocation3 + $0xc0] sm:$0xff] %vm969, %v938
        %979 = vst.msk [vmem:[#allocation3 + $0xd8] sm:$0xff] %vm969, %v940
        %980 = vst.msk [vmem:[#allocation3 + $0xf0] sm:$0xff] %vm969, %v942
        %981 = vst.msk [vmem:[#allocation3 + $0x108] sm:$0xff] %vm969, %v944
        %982 = vst.msk [vmem:[#allocation3 + $0x120] sm:$0xff] %vm969, %v946
        %983 = vst.msk [vmem:[#allocation3 + $0x138] sm:$0xff] %vm969, %v948
        %984 = vst.msk [vmem:[#allocation3 + $0x150] sm:$0xff] %vm969, %v950
        %985 = vst.msk [vmem:[#allocation3 + $0x168] sm:$0xff] %vm969, %v952
        %v986 = vld [vmem:[%s737] sm:$0xff]
        %v987 = vld [vmem:[%s737 + $0x8] sm:$0xff]
        %v988 = vld [vmem:[%s737 + $0x18] sm:$0xff]
        %v989 = vld [vmem:[%s737 + $0x20] sm:$0xff]
        %v990 = vld [vmem:[%s737 + $0x30] sm:$0xff]
        %v991 = vld [vmem:[%s737 + $0x38] sm:$0xff]
        %v992 = vld [vmem:[%s737 + $0x48] sm:$0xff]
        %v993 = vld [vmem:[%s737 + $0x50] sm:$0xff]
        %v994 = vld [vmem:[%s737 + $0x60] sm:$0xff]
        %v995 = vld [vmem:[%s737 + $0x68] sm:$0xff]
        %v996 = vld [vmem:[%s737 + $0x78] sm:$0xff]
        %v997 = vld [vmem:[%s737 + $0x80] sm:$0xff]
        %v998 = vld [vmem:[%s737 + $0x90] sm:$0xff]
        %v999 = vld [vmem:[%s737 + $0x98] sm:$0xff]
        %v1000 = vld [vmem:[%s737 + $0xa8] sm:$0xff]
        %v1001 = vld [vmem:[%s737 + $0xb0] sm:$0xff]
        %1018 = vrot.lane.b32.xlu0 %v986, 96
        %v1019 = vpop.permute.xlu0 %1018
        %1020 = vrot.lane.b32.xlu0 %v987, 96
        %v1021 = vpop.permute.xlu0 %1020
        %1022 = vrot.lane.b32.xlu0 %v988, 96
        %v1023 = vpop.permute.xlu0 %1022
        %1024 = vrot.lane.b32.xlu0 %v989, 96
        %v1025 = vpop.permute.xlu0 %1024
        %1026 = vrot.lane.b32.xlu0 %v990, 96
        %v1027 = vpop.permute.xlu0 %1026
        %1028 = vrot.lane.b32.xlu0 %v991, 96
        %v1029 = vpop.permute.xlu0 %1028
        %1030 = vrot.lane.b32.xlu0 %v992, 96
        %v1031 = vpop.permute.xlu0 %1030
        %1032 = vrot.lane.b32.xlu0 %v993, 96
        %v1033 = vpop.permute.xlu0 %1032
        %1034 = vrot.lane.b32.xlu0 %v994, 96
        %v1035 = vpop.permute.xlu0 %1034
        %1036 = vrot.lane.b32.xlu0 %v995, 96
        %v1037 = vpop.permute.xlu0 %1036
        %1038 = vrot.lane.b32.xlu0 %v996, 96
        %v1039 = vpop.permute.xlu0 %1038
        %1040 = vrot.lane.b32.xlu0 %v997, 96
        %v1041 = vpop.permute.xlu0 %1040
        %1042 = vrot.lane.b32.xlu0 %v998, 96
        %v1043 = vpop.permute.xlu0 %1042
        %1044 = vrot.lane.b32.xlu0 %v999, 96
        %v1045 = vpop.permute.xlu0 %1044
        %1046 = vrot.lane.b32.xlu0 %v1000, 96
        %v1047 = vpop.permute.xlu0 %1046
        %1048 = vrot.lane.b32.xlu0 %v1001, 96
        %v1049 = vpop.permute.xlu0 %1048
        %vm1066 = vcmask 1048320
        %1067 = vst.msk [vmem:[#allocation3] sm:$0xff] %vm1066, %v1019
        %1068 = vst.msk [vmem:[#allocation3 + $0x18] sm:$0xff] %vm1066, %v1021
        %1069 = vst.msk [vmem:[#allocation3 + $0x30] sm:$0xff] %vm1066, %v1023
        %1070 = vst.msk [vmem:[#allocation3 + $0x48] sm:$0xff] %vm1066, %v1025
        %1071 = vst.msk [vmem:[#allocation3 + $0x60] sm:$0xff] %vm1066, %v1027
        %1072 = vst.msk [vmem:[#allocation3 + $0x78] sm:$0xff] %vm1066, %v1029
        %1073 = vst.msk [vmem:[#allocation3 + $0x90] sm:$0xff] %vm1066, %v1031
        %1074 = vst.msk [vmem:[#allocation3 + $0xa8] sm:$0xff] %vm1066, %v1033
        %1075 = vst.msk [vmem:[#allocation3 + $0xc0] sm:$0xff] %vm1066, %v1035
        %1076 = vst.msk [vmem:[#allocation3 + $0xd8] sm:$0xff] %vm1066, %v1037
        %1077 = vst.msk [vmem:[#allocation3 + $0xf0] sm:$0xff] %vm1066, %v1039
        %1078 = vst.msk [vmem:[#allocation3 + $0x108] sm:$0xff] %vm1066, %v1041
        %1079 = vst.msk [vmem:[#allocation3 + $0x120] sm:$0xff] %vm1066, %v1043
        %1080 = vst.msk [vmem:[#allocation3 + $0x138] sm:$0xff] %vm1066, %v1045
        %1081 = vst.msk [vmem:[#allocation3 + $0x150] sm:$0xff] %vm1066, %v1047
        %1082 = vst.msk [vmem:[#allocation3 + $0x168] sm:$0xff] %vm1066, %v1049
        %v1083 = vld [vmem:[%s737 + $0x1] sm:$0xff]
        %v1084 = vld [vmem:[%s737 + $0x9] sm:$0xff]
        %v1085 = vld [vmem:[%s737 + $0x19] sm:$0xff]
        %v1086 = vld [vmem:[%s737 + $0x21] sm:$0xff]
        %v1087 = vld [vmem:[%s737 + $0x31] sm:$0xff]
        %v1088 = vld [vmem:[%s737 + $0x39] sm:$0xff]
        %v1089 = vld [vmem:[%s737 + $0x49] sm:$0xff]
        %v1090 = vld [vmem:[%s737 + $0x51] sm:$0xff]
        %v1091 = vld [vmem:[%s737 + $0x61] sm:$0xff]
        %v1092 = vld [vmem:[%s737 + $0x69] sm:$0xff]
        %v1093 = vld [vmem:[%s737 + $0x79] sm:$0xff]
        %v1094 = vld [vmem:[%s737 + $0x81] sm:$0xff]
        %v1095 = vld [vmem:[%s737 + $0x91] sm:$0xff]
        %v1096 = vld [vmem:[%s737 + $0x99] sm:$0xff]
        %v1097 = vld [vmem:[%s737 + $0xa9] sm:$0xff]
        %v1098 = vld [vmem:[%s737 + $0xb1] sm:$0xff]
        %1099 = vst.msk [vmem:[#allocation3 + $0x8] sm:$0xff] %vm738, %v1083
        %1100 = vst.msk [vmem:[#allocation3 + $0x20] sm:$0xff] %vm738, %v1084
        %1101 = vst.msk [vmem:[#allocation3 + $0x38] sm:$0xff] %vm738, %v1085
        %1102 = vst.msk [vmem:[#allocation3 + $0x50] sm:$0xff] %vm738, %v1086
        %1103 = vst.msk [vmem:[#allocation3 + $0x68] sm:$0xff] %vm738, %v1087
        %1104 = vst.msk [vmem:[#allocation3 + $0x80] sm:$0xff] %vm738, %v1088
        %1105 = vst.msk [vmem:[#allocation3 + $0x98] sm:$0xff] %vm738, %v1089
        %1106 = vst.msk [vmem:[#allocation3 + $0xb0] sm:$0xff] %vm738, %v1090
        %1107 = vst.msk [vmem:[#allocation3 + $0xc8] sm:$0xff] %vm738, %v1091
        %1108 = vst.msk [vmem:[#allocation3 + $0xe0] sm:$0xff] %vm738, %v1092
        %1109 = vst.msk [vmem:[#allocation3 + $0xf8] sm:$0xff] %vm738, %v1093
        %1110 = vst.msk [vmem:[#allocation3 + $0x110] sm:$0xff] %vm738, %v1094
        %1111 = vst.msk [vmem:[#allocation3 + $0x128] sm:$0xff] %vm738, %v1095
        %1112 = vst.msk [vmem:[#allocation3 + $0x140] sm:$0xff] %vm738, %v1096
        %1113 = vst.msk [vmem:[#allocation3 + $0x158] sm:$0xff] %vm738, %v1097
        %1114 = vst.msk [vmem:[#allocation3 + $0x170] sm:$0xff] %vm738, %v1098
        %v1115 = vld [vmem:[%s737 + $0x2] sm:$0xff]
        %v1116 = vld [vmem:[%s737 + $0xa] sm:$0xff]
        %v1117 = vld [vmem:[%s737 + $0x1a] sm:$0xff]
        %v1118 = vld [vmem:[%s737 + $0x22] sm:$0xff]
        %v1119 = vld [vmem:[%s737 + $0x32] sm:$0xff]
        %v1120 = vld [vmem:[%s737 + $0x3a] sm:$0xff]
        %v1121 = vld [vmem:[%s737 + $0x4a] sm:$0xff]
        %v1122 = vld [vmem:[%s737 + $0x52] sm:$0xff]
        %v1123 = vld [vmem:[%s737 + $0x62] sm:$0xff]
        %v1124 = vld [vmem:[%s737 + $0x6a] sm:$0xff]
        %v1125 = vld [vmem:[%s737 + $0x7a] sm:$0xff]
        %v1126 = vld [vmem:[%s737 + $0x82] sm:$0xff]
        %v1127 = vld [vmem:[%s737 + $0x92] sm:$0xff]
        %v1128 = vld [vmem:[%s737 + $0x9a] sm:$0xff]
        %v1129 = vld [vmem:[%s737 + $0xaa] sm:$0xff]
        %v1130 = vld [vmem:[%s737 + $0xb2] sm:$0xff]
        %1147 = vrot.lane.b32.xlu0 %v1115, 32
        %v1148 = vpop.permute.xlu0 %1147
        %1149 = vrot.lane.b32.xlu0 %v1116, 32
        %v1150 = vpop.permute.xlu0 %1149
        %1151 = vrot.lane.b32.xlu0 %v1117, 32
        %v1152 = vpop.permute.xlu0 %1151
        %1153 = vrot.lane.b32.xlu0 %v1118, 32
        %v1154 = vpop.permute.xlu0 %1153
        %1155 = vrot.lane.b32.xlu0 %v1119, 32
        %v1156 = vpop.permute.xlu0 %1155
        %1157 = vrot.lane.b32.xlu0 %v1120, 32
        %v1158 = vpop.permute.xlu0 %1157
        %1159 = vrot.lane.b32.xlu0 %v1121, 32
        %v1160 = vpop.permute.xlu0 %1159
        %1161 = vrot.lane.b32.xlu0 %v1122, 32
        %v1162 = vpop.permute.xlu0 %1161
        %1163 = vrot.lane.b32.xlu0 %v1123, 32
        %v1164 = vpop.permute.xlu0 %1163
        %1165 = vrot.lane.b32.xlu0 %v1124, 32
        %v1166 = vpop.permute.xlu0 %1165
        %1167 = vrot.lane.b32.xlu0 %v1125, 32
        %v1168 = vpop.permute.xlu0 %1167
        %1169 = vrot.lane.b32.xlu0 %v1126, 32
        %v1170 = vpop.permute.xlu0 %1169
        %1171 = vrot.lane.b32.xlu0 %v1127, 32
        %v1172 = vpop.permute.xlu0 %1171
        %1173 = vrot.lane.b32.xlu0 %v1128, 32
        %v1174 = vpop.permute.xlu0 %1173
        %1175 = vrot.lane.b32.xlu0 %v1129, 32
        %v1176 = vpop.permute.xlu0 %1175
        %1177 = vrot.lane.b32.xlu0 %v1130, 32
        %v1178 = vpop.permute.xlu0 %1177
        %1195 = vst.msk [vmem:[#allocation3 + $0x8] sm:$0xff] %vm872, %v1148
        %1196 = vst.msk [vmem:[#allocation3 + $0x20] sm:$0xff] %vm872, %v1150
        %1197 = vst.msk [vmem:[#allocation3 + $0x38] sm:$0xff] %vm872, %v1152
        %1198 = vst.msk [vmem:[#allocation3 + $0x50] sm:$0xff] %vm872, %v1154
        %1199 = vst.msk [vmem:[#allocation3 + $0x68] sm:$0xff] %vm872, %v1156
        %1200 = vst.msk [vmem:[#allocation3 + $0x80] sm:$0xff] %vm872, %v1158
        %1201 = vst.msk [vmem:[#allocation3 + $0x98] sm:$0xff] %vm872, %v1160
        %1202 = vst.msk [vmem:[#allocation3 + $0xb0] sm:$0xff] %vm872, %v1162
        %1203 = vst.msk [vmem:[#allocation3 + $0xc8] sm:$0xff] %vm872, %v1164
        %1204 = vst.msk [vmem:[#allocation3 + $0xe0] sm:$0xff] %vm872, %v1166
        %1205 = vst.msk [vmem:[#allocation3 + $0xf8] sm:$0xff] %vm872, %v1168
        %1206 = vst.msk [vmem:[#allocation3 + $0x110] sm:$0xff] %vm872, %v1170
        %1207 = vst.msk [vmem:[#allocation3 + $0x128] sm:$0xff] %vm872, %v1172
        %1208 = vst.msk [vmem:[#allocation3 + $0x140] sm:$0xff] %vm872, %v1174
        %1209 = vst.msk [vmem:[#allocation3 + $0x158] sm:$0xff] %vm872, %v1176
        %1210 = vst.msk [vmem:[#allocation3 + $0x170] sm:$0xff] %vm872, %v1178
        %s1211 = scalar_lea.vmem [#allocation2], 48
        %v1212 = vld [vmem:[%s1211] sm:$0xff]
        %v1213 = vld [vmem:[%s1211 + $0x8] sm:$0xff]
        %v1214 = vld [vmem:[%s1211 + $0x18] sm:$0xff]
        %v1215 = vld [vmem:[%s1211 + $0x20] sm:$0xff]
        %v1216 = vld [vmem:[%s1211 + $0x30] sm:$0xff]
        %v1217 = vld [vmem:[%s1211 + $0x38] sm:$0xff]
        %v1218 = vld [vmem:[%s1211 + $0x48] sm:$0xff]
        %v1219 = vld [vmem:[%s1211 + $0x50] sm:$0xff]
        %v1220 = vld [vmem:[%s1211 + $0x60] sm:$0xff]
        %v1221 = vld [vmem:[%s1211 + $0x68] sm:$0xff]
        %v1222 = vld [vmem:[%s1211 + $0x78] sm:$0xff]
        %v1223 = vld [vmem:[%s1211 + $0x80] sm:$0xff]
        %v1224 = vld [vmem:[%s1211 + $0x90] sm:$0xff]
        %v1225 = vld [vmem:[%s1211 + $0x98] sm:$0xff]
        %v1226 = vld [vmem:[%s1211 + $0xa8] sm:$0xff]
        %v1227 = vld [vmem:[%s1211 + $0xb0] sm:$0xff]
        %1244 = vrot.lane.b32.xlu0 %v1212, 64
        %v1245 = vpop.permute.xlu0 %1244
        %1246 = vrot.lane.b32.xlu0 %v1213, 64
        %v1247 = vpop.permute.xlu0 %1246
        %1248 = vrot.lane.b32.xlu0 %v1214, 64
        %v1249 = vpop.permute.xlu0 %1248
        %1250 = vrot.lane.b32.xlu0 %v1215, 64
        %v1251 = vpop.permute.xlu0 %1250
        %1252 = vrot.lane.b32.xlu0 %v1216, 64
        %v1253 = vpop.permute.xlu0 %1252
        %1254 = vrot.lane.b32.xlu0 %v1217, 64
        %v1255 = vpop.permute.xlu0 %1254
        %1256 = vrot.lane.b32.xlu0 %v1218, 64
        %v1257 = vpop.permute.xlu0 %1256
        %1258 = vrot.lane.b32.xlu0 %v1219, 64
        %v1259 = vpop.permute.xlu0 %1258
        %1260 = vrot.lane.b32.xlu0 %v1220, 64
        %v1261 = vpop.permute.xlu0 %1260
        %1262 = vrot.lane.b32.xlu0 %v1221, 64
        %v1263 = vpop.permute.xlu0 %1262
        %1264 = vrot.lane.b32.xlu0 %v1222, 64
        %v1265 = vpop.permute.xlu0 %1264
        %1266 = vrot.lane.b32.xlu0 %v1223, 64
        %v1267 = vpop.permute.xlu0 %1266
        %1268 = vrot.lane.b32.xlu0 %v1224, 64
        %v1269 = vpop.permute.xlu0 %1268
        %1270 = vrot.lane.b32.xlu0 %v1225, 64
        %v1271 = vpop.permute.xlu0 %1270
        %1272 = vrot.lane.b32.xlu0 %v1226, 64
        %v1273 = vpop.permute.xlu0 %1272
        %1274 = vrot.lane.b32.xlu0 %v1227, 64
        %v1275 = vpop.permute.xlu0 %1274
        %1292 = vst.msk [vmem:[#allocation3 + $0x8] sm:$0xff] %vm969, %v1245
        %1293 = vst.msk [vmem:[#allocation3 + $0x20] sm:$0xff] %vm969, %v1247
        %1294 = vst.msk [vmem:[#allocation3 + $0x38] sm:$0xff] %vm969, %v1249
        %1295 = vst.msk [vmem:[#allocation3 + $0x50] sm:$0xff] %vm969, %v1251
        %1296 = vst.msk [vmem:[#allocation3 + $0x68] sm:$0xff] %vm969, %v1253
        %1297 = vst.msk [vmem:[#allocation3 + $0x80] sm:$0xff] %vm969, %v1255
        %1298 = vst.msk [vmem:[#allocation3 + $0x98] sm:$0xff] %vm969, %v1257
        %1299 = vst.msk [vmem:[#allocation3 + $0xb0] sm:$0xff] %vm969, %v1259
        %1300 = vst.msk [vmem:[#allocation3 + $0xc8] sm:$0xff] %vm969, %v1261
        %1301 = vst.msk [vmem:[#allocation3 + $0xe0] sm:$0xff] %vm969, %v1263
        %1302 = vst.msk [vmem:[#allocation3 + $0xf8] sm:$0xff] %vm969, %v1265
        %1303 = vst.msk [vmem:[#allocation3 + $0x110] sm:$0xff] %vm969, %v1267
        %1304 = vst.msk [vmem:[#allocation3 + $0x128] sm:$0xff] %vm969, %v1269
        %1305 = vst.msk [vmem:[#allocation3 + $0x140] sm:$0xff] %vm969, %v1271
        %1306 = vst.msk [vmem:[#allocation3 + $0x158] sm:$0xff] %vm969, %v1273
        %1307 = vst.msk [vmem:[#allocation3 + $0x170] sm:$0xff] %vm969, %v1275
        %v1308 = vld [vmem:[%s1211 + $0x1] sm:$0xff]
        %v1309 = vld [vmem:[%s1211 + $0x9] sm:$0xff]
        %v1310 = vld [vmem:[%s1211 + $0x19] sm:$0xff]
        %v1311 = vld [vmem:[%s1211 + $0x21] sm:$0xff]
        %v1312 = vld [vmem:[%s1211 + $0x31] sm:$0xff]
        %v1313 = vld [vmem:[%s1211 + $0x39] sm:$0xff]
        %v1314 = vld [vmem:[%s1211 + $0x49] sm:$0xff]
        %v1315 = vld [vmem:[%s1211 + $0x51] sm:$0xff]
        %v1316 = vld [vmem:[%s1211 + $0x61] sm:$0xff]
        %v1317 = vld [vmem:[%s1211 + $0x69] sm:$0xff]
        %v1318 = vld [vmem:[%s1211 + $0x79] sm:$0xff]
        %v1319 = vld [vmem:[%s1211 + $0x81] sm:$0xff]
        %v1320 = vld [vmem:[%s1211 + $0x91] sm:$0xff]
        %v1321 = vld [vmem:[%s1211 + $0x99] sm:$0xff]
        %v1322 = vld [vmem:[%s1211 + $0xa9] sm:$0xff]
        %v1323 = vld [vmem:[%s1211 + $0xb1] sm:$0xff]
        %1340 = vrot.lane.b32.xlu0 %v1308, 96
        %v1341 = vpop.permute.xlu0 %1340
        %1342 = vrot.lane.b32.xlu0 %v1309, 96
        %v1343 = vpop.permute.xlu0 %1342
        %1344 = vrot.lane.b32.xlu0 %v1310, 96
        %v1345 = vpop.permute.xlu0 %1344
        %1346 = vrot.lane.b32.xlu0 %v1311, 96
        %v1347 = vpop.permute.xlu0 %1346
        %1348 = vrot.lane.b32.xlu0 %v1312, 96
        %v1349 = vpop.permute.xlu0 %1348
        %1350 = vrot.lane.b32.xlu0 %v1313, 96
        %v1351 = vpop.permute.xlu0 %1350
        %1352 = vrot.lane.b32.xlu0 %v1314, 96
        %v1353 = vpop.permute.xlu0 %1352
        %1354 = vrot.lane.b32.xlu0 %v1315, 96
        %v1355 = vpop.permute.xlu0 %1354
        %1356 = vrot.lane.b32.xlu0 %v1316, 96
        %v1357 = vpop.permute.xlu0 %1356
        %1358 = vrot.lane.b32.xlu0 %v1317, 96
        %v1359 = vpop.permute.xlu0 %1358
        %1360 = vrot.lane.b32.xlu0 %v1318, 96
        %v1361 = vpop.permute.xlu0 %1360
        %1362 = vrot.lane.b32.xlu0 %v1319, 96
        %v1363 = vpop.permute.xlu0 %1362
        %1364 = vrot.lane.b32.xlu0 %v1320, 96
        %v1365 = vpop.permute.xlu0 %1364
        %1366 = vrot.lane.b32.xlu0 %v1321, 96
        %v1367 = vpop.permute.xlu0 %1366
        %1368 = vrot.lane.b32.xlu0 %v1322, 96
        %v1369 = vpop.permute.xlu0 %1368
        %1370 = vrot.lane.b32.xlu0 %v1323, 96
        %v1371 = vpop.permute.xlu0 %1370
        %1388 = vst.msk [vmem:[#allocation3 + $0x8] sm:$0xff] %vm1066, %v1341
        %1389 = vst.msk [vmem:[#allocation3 + $0x20] sm:$0xff] %vm1066, %v1343
        %1390 = vst.msk [vmem:[#allocation3 + $0x38] sm:$0xff] %vm1066, %v1345
        %1391 = vst.msk [vmem:[#allocation3 + $0x50] sm:$0xff] %vm1066, %v1347
        %1392 = vst.msk [vmem:[#allocation3 + $0x68] sm:$0xff] %vm1066, %v1349
        %1393 = vst.msk [vmem:[#allocation3 + $0x80] sm:$0xff] %vm1066, %v1351
        %1394 = vst.msk [vmem:[#allocation3 + $0x98] sm:$0xff] %vm1066, %v1353
        %1395 = vst.msk [vmem:[#allocation3 + $0xb0] sm:$0xff] %vm1066, %v1355
        %1396 = vst.msk [vmem:[#allocation3 + $0xc8] sm:$0xff] %vm1066, %v1357
        %1397 = vst.msk [vmem:[#allocation3 + $0xe0] sm:$0xff] %vm1066, %v1359
        %1398 = vst.msk [vmem:[#allocation3 + $0xf8] sm:$0xff] %vm1066, %v1361
        %1399 = vst.msk [vmem:[#allocation3 + $0x110] sm:$0xff] %vm1066, %v1363
        %1400 = vst.msk [vmem:[#allocation3 + $0x128] sm:$0xff] %vm1066, %v1365
        %1401 = vst.msk [vmem:[#allocation3 + $0x140] sm:$0xff] %vm1066, %v1367
        %1402 = vst.msk [vmem:[#allocation3 + $0x158] sm:$0xff] %vm1066, %v1369
        %1403 = vst.msk [vmem:[#allocation3 + $0x170] sm:$0xff] %vm1066, %v1371
        %v1404 = vld [vmem:[%s1211 + $0x2] sm:$0xff]
        %v1405 = vld [vmem:[%s1211 + $0xa] sm:$0xff]
        %v1406 = vld [vmem:[%s1211 + $0x1a] sm:$0xff]
        %v1407 = vld [vmem:[%s1211 + $0x22] sm:$0xff]
        %v1408 = vld [vmem:[%s1211 + $0x32] sm:$0xff]
        %v1409 = vld [vmem:[%s1211 + $0x3a] sm:$0xff]
        %v1410 = vld [vmem:[%s1211 + $0x4a] sm:$0xff]
        %v1411 = vld [vmem:[%s1211 + $0x52] sm:$0xff]
        %v1412 = vld [vmem:[%s1211 + $0x62] sm:$0xff]
        %v1413 = vld [vmem:[%s1211 + $0x6a] sm:$0xff]
        %v1414 = vld [vmem:[%s1211 + $0x7a] sm:$0xff]
        %v1415 = vld [vmem:[%s1211 + $0x82] sm:$0xff]
        %v1416 = vld [vmem:[%s1211 + $0x92] sm:$0xff]
        %v1417 = vld [vmem:[%s1211 + $0x9a] sm:$0xff]
        %v1418 = vld [vmem:[%s1211 + $0xaa] sm:$0xff]
        %v1419 = vld [vmem:[%s1211 + $0xb2] sm:$0xff]
        %1420 = vst.msk [vmem:[#allocation3 + $0x10] sm:$0xff] %vm738, %v1404
        %1421 = vst.msk [vmem:[#allocation3 + $0x28] sm:$0xff] %vm738, %v1405
        %1422 = vst.msk [vmem:[#allocation3 + $0x40] sm:$0xff] %vm738, %v1406
        %1423 = vst.msk [vmem:[#allocation3 + $0x58] sm:$0xff] %vm738, %v1407
        %1424 = vst.msk [vmem:[#allocation3 + $0x70] sm:$0xff] %vm738, %v1408
        %1425 = vst.msk [vmem:[#allocation3 + $0x88] sm:$0xff] %vm738, %v1409
        %1426 = vst.msk [vmem:[#allocation3 + $0xa0] sm:$0xff] %vm738, %v1410
        %1427 = vst.msk [vmem:[#allocation3 + $0xb8] sm:$0xff] %vm738, %v1411
        %1428 = vst.msk [vmem:[#allocation3 + $0xd0] sm:$0xff] %vm738, %v1412
        %1429 = vst.msk [vmem:[#allocation3 + $0xe8] sm:$0xff] %vm738, %v1413
        %1430 = vst.msk [vmem:[#allocation3 + $0x100] sm:$0xff] %vm738, %v1414
        %1431 = vst.msk [vmem:[#allocation3 + $0x118] sm:$0xff] %vm738, %v1415
        %1432 = vst.msk [vmem:[#allocation3 + $0x130] sm:$0xff] %vm738, %v1416
        %1433 = vst.msk [vmem:[#allocation3 + $0x148] sm:$0xff] %vm738, %v1417
        %1434 = vst.msk [vmem:[#allocation3 + $0x160] sm:$0xff] %vm738, %v1418
        %1435 = vst.msk [vmem:[#allocation3 + $0x178] sm:$0xff] %vm738, %v1419
        %v1436 = vld [vmem:[#allocation3] sm:$0xff]
        %v1437 = vld [vmem:[#allocation3 + $0x8] sm:$0xff]
        %v1438 = vld [vmem:[#allocation3 + $0x10] sm:$0xff]
        %v1439 = vld [vmem:[#allocation3 + $0x18] sm:$0xff]
        %v1440 = vld [vmem:[#allocation3 + $0x20] sm:$0xff]
        %v1441 = vld [vmem:[#allocation3 + $0x28] sm:$0xff]
        %v1442 = vld [vmem:[#allocation3 + $0x30] sm:$0xff]
        %v1443 = vld [vmem:[#allocation3 + $0x38] sm:$0xff]
        %v1444 = vld [vmem:[#allocation3 + $0x40] sm:$0xff]
        %v1445 = vld [vmem:[#allocation3 + $0x48] sm:$0xff]
        %v1446 = vld [vmem:[#allocation3 + $0x50] sm:$0xff]
        %v1447 = vld [vmem:[#allocation3 + $0x58] sm:$0xff]
        %v1448 = vld [vmem:[#allocation3 + $0x60] sm:$0xff]
        %v1449 = vld [vmem:[#allocation3 + $0x68] sm:$0xff]
        %v1450 = vld [vmem:[#allocation3 + $0x70] sm:$0xff]
        %v1451 = vld [vmem:[#allocation3 + $0x78] sm:$0xff]
        %v1452 = vld [vmem:[#allocation3 + $0x80] sm:$0xff]
        %v1453 = vld [vmem:[#allocation3 + $0x88] sm:$0xff]
        %v1454 = vld [vmem:[#allocation3 + $0x90] sm:$0xff]
        %v1455 = vld [vmem:[#allocation3 + $0x98] sm:$0xff]
        %v1456 = vld [vmem:[#allocation3 + $0xa0] sm:$0xff]
        %v1457 = vld [vmem:[#allocation3 + $0xa8] sm:$0xff]
        %v1458 = vld [vmem:[#allocation3 + $0xb0] sm:$0xff]
        %v1459 = vld [vmem:[#allocation3 + $0xb8] sm:$0xff]
        %v1460 = vld [vmem:[#allocation3 + $0xc0] sm:$0xff]
        %v1461 = vld [vmem:[#allocation3 + $0xc8] sm:$0xff]
        %v1462 = vld [vmem:[#allocation3 + $0xd0] sm:$0xff]
        %v1463 = vld [vmem:[#allocation3 + $0xd8] sm:$0xff]
        %v1464 = vld [vmem:[#allocation3 + $0xe0] sm:$0xff]
        %v1465 = vld [vmem:[#allocation3 + $0xe8] sm:$0xff]
        %v1466 = vld [vmem:[#allocation3 + $0xf0] sm:$0xff]
        %v1467 = vld [vmem:[#allocation3 + $0xf8] sm:$0xff]
        %v1468 = vld [vmem:[#allocation3 + $0x100] sm:$0xff]
        %v1469 = vld [vmem:[#allocation3 + $0x108] sm:$0xff]
        %v1470 = vld [vmem:[#allocation3 + $0x110] sm:$0xff]
        %v1471 = vld [vmem:[#allocation3 + $0x118] sm:$0xff]
        %v1472 = vld [vmem:[#allocation3 + $0x120] sm:$0xff]
        %v1473 = vld [vmem:[#allocation3 + $0x128] sm:$0xff]
        %v1474 = vld [vmem:[#allocation3 + $0x130] sm:$0xff]
        %v1475 = vld [vmem:[#allocation3 + $0x138] sm:$0xff]
        %v1476 = vld [vmem:[#allocation3 + $0x140] sm:$0xff]
        %v1477 = vld [vmem:[#allocation3 + $0x148] sm:$0xff]
        %v1478 = vld [vmem:[#allocation3 + $0x150] sm:$0xff]
        %v1479 = vld [vmem:[#allocation3 + $0x158] sm:$0xff]
        %v1480 = vld [vmem:[#allocation3 + $0x160] sm:$0xff]
        %v1481 = vld [vmem:[#allocation3 + $0x168] sm:$0xff]
        %v1482 = vld [vmem:[#allocation3 + $0x170] sm:$0xff]
        %v1483 = vld [vmem:[#allocation3 + $0x178] sm:$0xff]
        %v1484 = vld [vmem:[#allocation4] sm:$0xff]
        %v1485 = vld [vmem:[#allocation4 + $0x8] sm:$0xff]
        %v1486 = vld [vmem:[#allocation4 + $0x10] sm:$0xff]
        %v1487 = vld [vmem:[#allocation4 + $0x18] sm:$0xff]
        %v1488 = vld [vmem:[#allocation4 + $0x20] sm:$0xff]
        %v1489 = vld [vmem:[#allocation4 + $0x28] sm:$0xff]
        %v1490 = vld [vmem:[#allocation4 + $0x30] sm:$0xff]
        %v1491 = vld [vmem:[#allocation4 + $0x38] sm:$0xff]
        %v1492 = vld [vmem:[#allocation4 + $0x40] sm:$0xff]
        %v1493 = vld [vmem:[#allocation4 + $0x48] sm:$0xff]
        %v1494 = vld [vmem:[#allocation4 + $0x50] sm:$0xff]
        %v1495 = vld [vmem:[#allocation4 + $0x58] sm:$0xff]
        %v1496 = vld [vmem:[#allocation4 + $0x60] sm:$0xff]
        %v1497 = vld [vmem:[#allocation4 + $0x68] sm:$0xff]
        %v1498 = vld [vmem:[#allocation4 + $0x70] sm:$0xff]
        %v1499 = vld [vmem:[#allocation4 + $0x78] sm:$0xff]
        %v1500 = vld [vmem:[#allocation4 + $0x80] sm:$0xff]
        %v1501 = vld [vmem:[#allocation4 + $0x88] sm:$0xff]
        %v1502 = vld [vmem:[#allocation4 + $0x90] sm:$0xff]
        %v1503 = vld [vmem:[#allocation4 + $0x98] sm:$0xff]
        %v1504 = vld [vmem:[#allocation4 + $0xa0] sm:$0xff]
        %v1505 = vld [vmem:[#allocation4 + $0xa8] sm:$0xff]
        %v1506 = vld [vmem:[#allocation4 + $0xb0] sm:$0xff]
        %v1507 = vld [vmem:[#allocation4 + $0xb8] sm:$0xff]
        %v1508 = vld [vmem:[#allocation4 + $0xc0] sm:$0xff]
        %v1509 = vld [vmem:[#allocation4 + $0xc8] sm:$0xff]
        %v1510 = vld [vmem:[#allocation4 + $0xd0] sm:$0xff]
        %v1511 = vld [vmem:[#allocation4 + $0xd8] sm:$0xff]
        %v1512 = vld [vmem:[#allocation4 + $0xe0] sm:$0xff]
        %v1513 = vld [vmem:[#allocation4 + $0xe8] sm:$0xff]
        %v1514 = vld [vmem:[#allocation4 + $0xf0] sm:$0xff]
        %v1515 = vld [vmem:[#allocation4 + $0xf8] sm:$0xff]
        %v1516 = vld [vmem:[#allocation4 + $0x100] sm:$0xff]
        %v1517 = vld [vmem:[#allocation4 + $0x108] sm:$0xff]
        %v1518 = vld [vmem:[#allocation4 + $0x110] sm:$0xff]
        %v1519 = vld [vmem:[#allocation4 + $0x118] sm:$0xff]
        %v1520 = vld [vmem:[%s6] sm:$0x1]
        %v1522 = vlaneseq
        %v1523 = vshrl.u32 %v1522, 7
        %v1524 = vsub.s32 0, %v1523
        %v1525 = vrot.slane %v1520, %v1524
        %v1528 = vsel %vm738, %v1438, 0
        %v1531 = vsel %vm738, %v1441, 0
        %v1534 = vsel %vm738, %v1444, 0
        %v1537 = vsel %vm738, %v1447, 0
        %v1540 = vsel %vm738, %v1450, 0
        %v1543 = vsel %vm738, %v1453, 0
        %v1546 = vsel %vm738, %v1456, 0
        %v1549 = vsel %vm738, %v1459, 0
        %v1552 = vsel %vm738, %v1462, 0
        %v1555 = vsel %vm738, %v1465, 0
        %v1558 = vsel %vm738, %v1468, 0
        %v1561 = vsel %vm738, %v1471, 0
        %v1564 = vsel %vm738, %v1474, 0
        %v1567 = vsel %vm738, %v1477, 0
        %v1570 = vsel %vm738, %v1480, 0
        %v1573 = vsel %vm738, %v1483, 0
        %1575 = vmatprep.subr.mxu0 0.0
        %1576 = vmatpush1.msra.mxu0 %v1484
        %1577 = vmatprep.subr.mxu0 0.0
        %1578 = vmatpush1.msra.mxu0 %v1485
        %1579 = vmatprep.subr.mxu0 0.0
        %1580 = vmatpush1.msra.mxu0 %v1486
        %1581 = vmatprep.subr.mxu0 0.0
        %1582 = vmatpush1.msra.mxu0 %v1487
        %1583 = vmatprep.subr.mxu0 0.0
        %1584 = vmatpush1.msra.mxu0 %v1488
        %1585 = vmatprep.subr.mxu0 0.0
        %1586 = vmatpush1.msra.mxu0 %v1489
        %1587 = vmatprep.subr.mxu0 0.0
        %1588 = vmatpush1.msra.mxu0 %v1490
        %1589 = vmatprep.subr.mxu0 0.0
        %1590 = vmatpush1.msra.mxu0 %v1491
        %1591 = vmatprep.subr.mxu0 0.0
        %1592 = vmatpush1.msra.mxu0 %v1492
        %1593 = vmatprep.subr.mxu0 0.0
        %1594 = vmatpush1.msra.mxu0 %v1493
        %1595 = vmatprep.subr.mxu0 0.0
        %1596 = vmatpush1.msra.mxu0 %v1494
        %1597 = vmatprep.subr.mxu0 0.0
        %1598 = vmatpush1.msra.mxu0 %v1495
        %1599 = vmatprep.subr.mxu0 0.0
        %1600 = vmatpush1.msra.mxu0 %v1496
        %1601 = vmatprep.subr.mxu0 0.0
        %1602 = vmatpush1.msra.mxu0 %v1497
        %1603 = vmatprep.subr.mxu0 0.0
        %1604 = vmatpush1.msra.mxu0 %v1498
        %1605 = vmatprep.subr.mxu0 0.0
        %1606 = vmatpush1.msra.mxu0 %v1499
        %1607 = vmatprep.subr.mxu0 0.0
        %1608 = vmatpush1.msra.mxu0 %v1500
        %1609 = vmatprep.subr.mxu0 0.0
        %1610 = vmatpush1.msra.mxu0 %v1501
        %1611 = vmatprep.subr.mxu0 0.0
        %1612 = vmatpush1.msra.mxu0 %v1502
        %1613 = vmatprep.subr.mxu0 0.0
        %1614 = vmatpush1.msra.mxu0 %v1503
        %1615 = vmatprep.subr.mxu0 0.0
        %1616 = vmatpush1.msra.mxu0 %v1504
        %1617 = vmatprep.subr.mxu0 0.0
        %1618 = vmatpush1.msra.mxu0 %v1505
        %1619 = vmatprep.subr.mxu0 0.0
        %1620 = vmatpush1.msra.mxu0 %v1506
        %1621 = vmatprep.subr.mxu0 0.0
        %1622 = vmatpush1.msra.mxu0 %v1507
        %1623 = vmatprep.subr.mxu0 0.0
        %1624 = vmatpush1.msra.mxu0 %v1508
        %1625 = vmatprep.subr.mxu0 0.0
        %1626 = vmatpush1.msra.mxu0 %v1509
        %1627 = vmatprep.subr.mxu0 0.0
        %1628 = vmatpush1.msra.mxu0 %v1510
        %1629 = vmatprep.subr.mxu0 0.0
        %1630 = vmatpush1.msra.mxu0 %v1511
        %1631 = vmatprep.subr.mxu0 0.0
        %1632 = vmatpush1.msra.mxu0 %v1512
        %1633 = vmatprep.subr.mxu0 0.0
        %1634 = vmatpush1.msra.mxu0 %v1513
        %1635 = vmatprep.subr.mxu0 0.0
        %1636 = vmatpush1.msra.mxu0 %v1514
        %1637 = vmatprep.subr.mxu0 0.0
        %1638 = vmatpush1.msra.mxu0 %v1515
        %1639 = vmatprep.mubr.f32.mxu0 %v1437
        %1640 = vmatmul.mubr.f32.gmra.mrb[0].mxu0 %v1436
        %v1641 = vpop.f32.mrb[0].mxu0
        %v1642 = vadd.f32 %v1525, %v1641
        %v1643 = vpop.f32.mrb[0].mxu0
        %1644 = vmatprep.mubr.f32.mxu0 %v1440
        %1645 = vmatmul.mubr.f32.gmra.mrb[0].mxu0 %v1439
        %v1646 = vpop.f32.mrb[0].mxu0
        %v1647 = vadd.f32 %v1525, %v1646
        %v1648 = vpop.f32.mrb[0].mxu0
        %1649 = vmatprep.mubr.f32.mxu0 %v1443
        %1650 = vmatmul.mubr.f32.gmra.mrb[0].mxu0 %v1442
        %v1651 = vpop.f32.mrb[0].mxu0
        %v1652 = vadd.f32 %v1525, %v1651
        %v1653 = vpop.f32.mrb[0].mxu0
        %1654 = vmatprep.mubr.f32.mxu0 %v1446
        %1655 = vmatmul.mubr.f32.gmra.mrb[0].mxu0 %v1445
        %v1656 = vpop.f32.mrb[0].mxu0
        %v1657 = vadd.f32 %v1525, %v1656
        %v1658 = vpop.f32.mrb[0].mxu0
        %1659 = vmatprep.mubr.f32.mxu0 %v1449
        %1660 = vmatmul.mubr.f32.gmra.mrb[0].mxu0 %v1448
        %v1661 = vpop.f32.mrb[0].mxu0
        %v1662 = vadd.f32 %v1525, %v1661
        %v1663 = vpop.f32.mrb[0].mxu0
        %1664 = vmatprep.mubr.f32.mxu0 %v1452
        %1665 = vmatmul.mubr.f32.gmra.mrb[0].mxu0 %v1451
        %v1666 = vpop.f32.mrb[0].mxu0
        %v1667 = vadd.f32 %v1525, %v1666
        %v1668 = vpop.f32.mrb[0].mxu0
        %1669 = vmatprep.mubr.f32.mxu0 %v1455
        %1670 = vmatmul.mubr.f32.gmra.mrb[0].mxu0 %v1454
        %v1671 = vpop.f32.mrb[0].mxu0
        %v1672 = vadd.f32 %v1525, %v1671
        %v1673 = vpop.f32.mrb[0].mxu0
        %1674 = vmatprep.mubr.f32.mxu0 %v1458
        %1675 = vmatmul.mubr.f32.gmra.mrb[0].mxu0 %v1457
        %v1676 = vpop.f32.mrb[0].mxu0
        %v1677 = vadd.f32 %v1525, %v1676
        %v1678 = vpop.f32.mrb[0].mxu0
        %1679 = vmatprep.mubr.f32.mxu0 %v1461
        %1680 = vmatmul.mubr.f32.gmra.mrb[0].mxu0 %v1460
        %v1681 = vpop.f32.mrb[0].mxu0
        %v1682 = vadd.f32 %v1525, %v1681
        %v1683 = vpop.f32.mrb[0].mxu0
        %1684 = vmatprep.mubr.f32.mxu0 %v1464
        %1685 = vmatmul.mubr.f32.gmra.mrb[0].mxu0 %v1463
        %v1686 = vpop.f32.mrb[0].mxu0
        %v1687 = vadd.f32 %v1525, %v1686
        %v1688 = vpop.f32.mrb[0].mxu0
        %1689 = vmatprep.mubr.f32.mxu0 %v1467
        %1690 = vmatmul.mubr.f32.gmra.mrb[0].mxu0 %v1466
        %v1691 = vpop.f32.mrb[0].mxu0
        %v1692 = vadd.f32 %v1525, %v1691
        %v1693 = vpop.f32.mrb[0].mxu0
        %1694 = vmatprep.mubr.f32.mxu0 %v1470
        %1695 = vmatmul.mubr.f32.gmra.mrb[0].mxu0 %v1469
        %v1696 = vpop.f32.mrb[0].mxu0
        %v1697 = vadd.f32 %v1525, %v1696
        %v1698 = vpop.f32.mrb[0].mxu0
        %1699 = vmatprep.mubr.f32.mxu0 %v1473
        %1700 = vmatmul.mubr.f32.gmra.mrb[0].mxu0 %v1472
        %v1701 = vpop.f32.mrb[0].mxu0
        %v1702 = vadd.f32 %v1525, %v1701
        %v1703 = vpop.f32.mrb[0].mxu0
        %1704 = vmatprep.mubr.f32.mxu0 %v1476
        %1705 = vmatmul.mubr.f32.gmra.mrb[0].mxu0 %v1475
        %v1706 = vpop.f32.mrb[0].mxu0
        %v1707 = vadd.f32 %v1525, %v1706
        %v1708 = vpop.f32.mrb[0].mxu0
        %1709 = vmatprep.mubr.f32.mxu0 %v1479
        %1710 = vmatmul.mubr.f32.gmra.mrb[0].mxu0 %v1478
        %v1711 = vpop.f32.mrb[0].mxu0
        %v1712 = vadd.f32 %v1525, %v1711
        %v1713 = vpop.f32.mrb[0].mxu0
        %1714 = vmatprep.mubr.f32.mxu0 %v1482
        %1715 = vmatmul.mubr.f32.gmra.mrb[0].mxu0 %v1481
        %v1716 = vpop.f32.mrb[0].mxu0
        %v1717 = vadd.f32 %v1525, %v1716
        %v1718 = vpop.f32.mrb[0].mxu0
        %1719 = vdwg.mxu0
        %1720 = vmatprep.subr.mxu0 0.0
        %1721 = vmatpush1.msra.mxu0 %v1516
        %1722 = vmatprep.subr.mxu0 0.0
        %1723 = vmatpush1.msra.mxu0 %v1517
        %1724 = vmatprep.subr.mxu0 0.0
        %1725 = vmatpush1.msra.mxu0 %v1518
        %1726 = vmatprep.subr.mxu0 0.0
        %1727 = vmatpush1.msra.mxu0 %v1519
        %1728 = vmatprep.subr.mxu0 0.0
        %1729 = vmatpush1.msra.mxu0 0.0
        %1730 = vmatprep.subr.mxu0 0.0
        %1731 = vmatpush1.msra.mxu0 0.0
        %1732 = vmatprep.subr.mxu0 0.0
        %1733 = vmatpush1.msra.mxu0 0.0
        %1734 = vmatprep.subr.mxu0 0.0
        %1735 = vmatpush1.msra.mxu0 0.0
        %1736 = vmatprep.subr.mxu0 0.0
        %1737 = vmatpush1.msra.mxu0 0.0
        %1738 = vmatprep.subr.mxu0 0.0
        %1739 = vmatpush1.msra.mxu0 0.0
        %1740 = vmatprep.subr.mxu0 0.0
        %1741 = vmatpush1.msra.mxu0 0.0
        %1742 = vmatprep.subr.mxu0 0.0
        %1743 = vmatpush1.msra.mxu0 0.0
        %1744 = vmatprep.subr.mxu0 0.0
        %1745 = vmatpush1.msra.mxu0 0.0
        %1746 = vmatprep.subr.mxu0 0.0
        %1747 = vmatpush1.msra.mxu0 0.0
        %1748 = vmatprep.subr.mxu0 0.0
        %1749 = vmatpush1.msra.mxu0 0.0
        %1750 = vmatprep.subr.mxu0 0.0
        %1751 = vmatpush1.msra.mxu0 0.0
        %1752 = vmatprep.subr.mxu0 0.0
        %1753 = vmatpush1.msra.mxu0 0.0
        %1754 = vmatprep.subr.mxu0 0.0
        %1755 = vmatpush1.msra.mxu0 0.0
        %1756 = vmatprep.subr.mxu0 0.0
        %1757 = vmatpush1.msra.mxu0 0.0
        %1758 = vmatprep.subr.mxu0 0.0
        %1759 = vmatpush1.msra.mxu0 0.0
        %1760 = vmatprep.subr.mxu0 0.0
        %1761 = vmatpush1.msra.mxu0 0.0
        %1762 = vmatprep.subr.mxu0 0.0
        %1763 = vmatpush1.msra.mxu0 0.0
        %1764 = vmatprep.subr.mxu0 0.0
        %1765 = vmatpush1.msra.mxu0 0.0
        %1766 = vmatprep.subr.mxu0 0.0
        %1767 = vmatpush1.msra.mxu0 0.0
        %1768 = vmatprep.subr.mxu0 0.0
        %1769 = vmatpush1.msra.mxu0 0.0
        %1770 = vmatprep.subr.mxu0 0.0
        %1771 = vmatpush1.msra.mxu0 0.0
        %1772 = vmatprep.subr.mxu0 0.0
        %1773 = vmatpush1.msra.mxu0 0.0
        %1774 = vmatprep.subr.mxu0 0.0
        %1775 = vmatpush1.msra.mxu0 0.0
        %1776 = vmatprep.subr.mxu0 0.0
        %1777 = vmatpush1.msra.mxu0 0.0
        %1778 = vmatprep.subr.mxu0 0.0
        %1779 = vmatpush1.msra.mxu0 0.0
        %1780 = vmatprep.subr.mxu0 0.0
        %1781 = vmatpush1.msra.mxu0 0.0
        %1782 = vmatprep.subr.mxu0 0.0
        %1783 = vmatpush1.msra.mxu0 0.0
        %1784 = vmatprep.mubr.f32.mxu0 0.0
        %1785 = vmatmul.mubr.f32.gmra.mrb[0].mxu0 %v1528
        %v1786 = vpop.f32.mrb[0].mxu0
        %v1787 = vadd.f32 %v1642, %v1786
        %v1788 = vpop.f32.mrb[0].mxu0
        %1789 = vmatprep.mubr.f32.mxu0 0.0
        %1790 = vmatmul.mubr.f32.gmra.mrb[0].mxu0 %v1531
        %v1791 = vpop.f32.mrb[0].mxu0
        %v1792 = vadd.f32 %v1647, %v1791
        %v1793 = vpop.f32.mrb[0].mxu0
        %1794 = vmatprep.mubr.f32.mxu0 0.0
        %1795 = vmatmul.mubr.f32.gmra.mrb[0].mxu0 %v1534
        %v1796 = vpop.f32.mrb[0].mxu0
        %v1797 = vadd.f32 %v1652, %v1796
        %v1798 = vpop.f32.mrb[0].mxu0
        %1799 = vmatprep.mubr.f32.mxu0 0.0
        %1800 = vmatmul.mubr.f32.gmra.mrb[0].mxu0 %v1537
        %v1801 = vpop.f32.mrb[0].mxu0
        %v1802 = vadd.f32 %v1657, %v1801
        %v1803 = vpop.f32.mrb[0].mxu0
        %1804 = vmatprep.mubr.f32.mxu0 0.0
        %1805 = vmatmul.mubr.f32.gmra.mrb[0].mxu0 %v1540
        %v1806 = vpop.f32.mrb[0].mxu0
        %v1807 = vadd.f32 %v1662, %v1806
        %v1808 = vpop.f32.mrb[0].mxu0
        %1809 = vmatprep.mubr.f32.mxu0 0.0
        %1810 = vmatmul.mubr.f32.gmra.mrb[0].mxu0 %v1543
        %v1811 = vpop.f32.mrb[0].mxu0
        %v1812 = vadd.f32 %v1667, %v1811
        %v1813 = vpop.f32.mrb[0].mxu0
        %1814 = vmatprep.mubr.f32.mxu0 0.0
        %1815 = vmatmul.mubr.f32.gmra.mrb[0].mxu0 %v1546
        %v1816 = vpop.f32.mrb[0].mxu0
        %v1817 = vadd.f32 %v1672, %v1816
        %v1818 = vpop.f32.mrb[0].mxu0
        %1819 = vmatprep.mubr.f32.mxu0 0.0
        %1820 = vmatmul.mubr.f32.gmra.mrb[0].mxu0 %v1549
        %v1821 = vpop.f32.mrb[0].mxu0
        %v1822 = vadd.f32 %v1677, %v1821
        %v1823 = vpop.f32.mrb[0].mxu0
        %1824 = vmatprep.mubr.f32.mxu0 0.0
        %1825 = vmatmul.mubr.f32.gmra.mrb[0].mxu0 %v1552
        %v1826 = vpop.f32.mrb[0].mxu0
        %v1827 = vadd.f32 %v1682, %v1826
        %v1828 = vpop.f32.mrb[0].mxu0
        %1829 = vmatprep.mubr.f32.mxu0 0.0
        %1830 = vmatmul.mubr.f32.gmra.mrb[0].mxu0 %v1555
        %v1831 = vpop.f32.mrb[0].mxu0
        %v1832 = vadd.f32 %v1687, %v1831
        %v1833 = vpop.f32.mrb[0].mxu0
        %1834 = vmatprep.mubr.f32.mxu0 0.0
        %1835 = vmatmul.mubr.f32.gmra.mrb[0].mxu0 %v1558
        %v1836 = vpop.f32.mrb[0].mxu0
        %v1837 = vadd.f32 %v1692, %v1836
        %v1838 = vpop.f32.mrb[0].mxu0
        %1839 = vmatprep.mubr.f32.mxu0 0.0
        %1840 = vmatmul.mubr.f32.gmra.mrb[0].mxu0 %v1561
        %v1841 = vpop.f32.mrb[0].mxu0
        %v1842 = vadd.f32 %v1697, %v1841
        %v1843 = vpop.f32.mrb[0].mxu0
        %1844 = vmatprep.mubr.f32.mxu0 0.0
        %1845 = vmatmul.mubr.f32.gmra.mrb[0].mxu0 %v1564
        %v1846 = vpop.f32.mrb[0].mxu0
        %v1847 = vadd.f32 %v1702, %v1846
        %v1848 = vpop.f32.mrb[0].mxu0
        %1849 = vmatprep.mubr.f32.mxu0 0.0
        %1850 = vmatmul.mubr.f32.gmra.mrb[0].mxu0 %v1567
        %v1851 = vpop.f32.mrb[0].mxu0
        %v1852 = vadd.f32 %v1707, %v1851
        %v1853 = vpop.f32.mrb[0].mxu0
        %1854 = vmatprep.mubr.f32.mxu0 0.0
        %1855 = vmatmul.mubr.f32.gmra.mrb[0].mxu0 %v1570
        %v1856 = vpop.f32.mrb[0].mxu0
        %v1857 = vadd.f32 %v1712, %v1856
        %v1858 = vpop.f32.mrb[0].mxu0
        %1859 = vmatprep.mubr.f32.mxu0 0.0
        %1860 = vmatmul.mubr.f32.gmra.mrb[0].mxu0 %v1573
        %v1861 = vpop.f32.mrb[0].mxu0
        %v1862 = vadd.f32 %v1717, %v1861
        %v1863 = vpop.f32.mrb[0].mxu0
        %1864 = vdwg.mxu0
        %vm1865 = vcmask 523264
        %1866 = vst.msk [vmem:[%s488] sm:$0xff] %vm1865, %v1787
        %1867 = vst.msk [vmem:[%s488 + $0x8] sm:$0xff] %vm1865, %v1792
        %1868 = vst.msk [vmem:[%s488 + $0x10] sm:$0xff] %vm1865, %v1797
        %1869 = vst.msk [vmem:[%s488 + $0x18] sm:$0xff] %vm1865, %v1802
        %1870 = vst.msk [vmem:[%s488 + $0x20] sm:$0xff] %vm1865, %v1807
        %1871 = vst.msk [vmem:[%s488 + $0x28] sm:$0xff] %vm1865, %v1812
        %1872 = vst.msk [vmem:[%s488 + $0x30] sm:$0xff] %vm1865, %v1817
        %1873 = vst.msk [vmem:[%s488 + $0x38] sm:$0xff] %vm1865, %v1822
        %1874 = vst.msk [vmem:[%s488 + $0x40] sm:$0xff] %vm1865, %v1827
        %1875 = vst.msk [vmem:[%s488 + $0x48] sm:$0xff] %vm1865, %v1832
        %1876 = vst.msk [vmem:[%s488 + $0x50] sm:$0xff] %vm1865, %v1837
        %1877 = vst.msk [vmem:[%s488 + $0x58] sm:$0xff] %vm1865, %v1842
        %1878 = vst.msk [vmem:[%s488 + $0x60] sm:$0xff] %vm1865, %v1847
        %1879 = vst.msk [vmem:[%s488 + $0x68] sm:$0xff] %vm1865, %v1852
        %1880 = vst.msk [vmem:[%s488 + $0x70] sm:$0xff] %vm1865, %v1857
        %1881 = vst.msk [vmem:[%s488 + $0x78] sm:$0xff] %vm1865, %v1862
        %s1882 = smul.u32 8, %s24
        %p1883 = scmp.lt.s32.totalorder %s23, 1
        %s1884 = scalar_select %p1883, %s23, 1
        %p1885 = scmp.lt.s32.totalorder %s1882, 15
        %s1886 = scalar_select %p1885, %s1882, 15
        %s1887 = smul.addr %s1886, 2
        %s1888 = smul.addr %s1884, 32
        %s1889 = sadd.s32 %s1887, %s1888
        %s1890 = smul.addr %s1889, 8
        %s1891 = scalar_lea.vmem %s7, %s1890
        // Predicated region
        $region53: #{res_block_forward.5} parent=47 // pred_check
          %p1892 = pneg %p245
        $region54: #{res_block_forward.5} parent=47 // pred_check_branch
          %1894 = sbr.rel (%p1892) target = $region56
        $region55: #{res_block_forward.5} parent=47 // pred_region
          %s1895 = smul.u32 8, %s24
        $region56: #{res_block_forward.5} parent=47 // pred_fallthru
          _
      $region48: #{res_block_forward.5} parent=5 // pred_fallthru
        _
      %p1896 = scmp.le.s32.totalorder 2, %s14
      // Predicated region
      $region57: #{res_block_forward.5} parent=5 // pred_check
        %p1897 = pneg %p1896
      $region58: #{res_block_forward.5} parent=5 // pred_check_branch
        %1899 = sbr.rel (%p1897) target = $region60
      $region59: #{res_block_forward.5} parent=5 // pred_region
        %s1900 = ssub.s32 %s14, 2
        // Predicated region
        $region61: #{res_block_forward.5} parent=59 // pred_check
          %p1901 = pneg %p251
        $region62: #{res_block_forward.5} parent=59 // pred_check_branch
          %1903 = sbr.rel (%p1901) target = $region64
        $region63: #{res_block_forward.5} parent=59 // pred_region
          %s1904 = smul.u32 8, %s26
          %p1905 = scmp.lt.s32.totalorder %s25, 1
          %s1906 = scalar_select %p1905, %s25, 1
          %p1907 = scmp.lt.s32.totalorder %s1904, 15
          %s1908 = scalar_select %p1907, %s1904, 15
          %s1909 = smul.addr %s1908, 2
          %s1910 = smul.addr %s1906, 32
          %s1911 = sadd.s32 %s1909, %s1910
          %s1912 = smul.addr %s1911, 8
          %s1913 = scalar_lea.vmem %s7, %s1912
        $region64: #{res_block_forward.5} parent=59 // pred_fallthru
          _
      $region60: #{res_block_forward.5} parent=5 // pred_fallthru
        _
    $region6: #{res_block_forward.5} parent=1 // loop_footer
      %s18 = sadd.s32 1, %s14
    $region7: #{res_block_forward.5} parent=1 // loop_footer_branch
      %13 = sbr.rel target = $region3
    $region8: #{res_block_forward.5} parent=1 // loop_exit
      _
    %1914 = vsyncpa [#allocation5], 1
    %s1915 = scalar_lea.sflag [#allocation5], 1
    %1916 = vsyncpa %s1915, 1

// kernel: res_block_forward.7
$region0: #{res_block_forward.7}
  #allocation0 [shape = 'u32[]', space=smem, size = 0x4, offset = 0x4, fixed_abs, tag = 'smem constant byte address 0x4 - core index']
  #allocation1 [shape = 'u32[144,128]{1,0:T(1,128)}', space=vmem, size = 0x12000, scoped, tag = 'internal scratch']
  #allocation2 [shape = 'f32[10,18,64]{2,1,0:T(8,128)}', space=vmem, size = 0x1e000, scoped, tag = 'scratch operand']
  #allocation3 [shape = 'f32[128,576]{1,0:T(8,128)}', space=vmem, size = 0x50000, scoped, tag = 'scratch operand']
  %s0 = inlined_call_operand.vmem [shape: f32[2,1,64], index: 0, kind: input, shape index: {}]
  %s1 = inlined_call_operand.vmem [shape: f32[2,1,64], index: 1, kind: input, shape index: {}]
  %s2 = inlined_call_operand.vmem [shape: f32[2,16,16,64], index: 2, kind: input, shape index: {}, may-alias: {2,3,4}]
  %s3 = inlined_call_operand.vmem [shape: f32[2,16,16,64], index: 3, kind: input, shape index: {}, may-alias: {2,3,4}]
  %s4 = inlined_call_operand.vmem [shape: f32[2,16,16,64], index: 4, kind: input, shape index: {}, may-alias: {2,3,4}]
  %s5 = inlined_call_operand.vmem [shape: f32[576,64], index: 5, kind: input, shape index: {}]
  %s6 = inlined_call_operand.vmem [shape: f32[1,64], index: 6, kind: input, shape index: {}]
  %s7 = inlined_call_operand.vmem [shape: f32[2,16,16,32], index: 7, kind: input, shape index: {}]
  %s8 = inlined_call_operand.vmem [shape: f32[32,64], index: 8, kind: input, shape index: {}]
  %s9 = inlined_call_operand.vmem [shape: f32[1,64], index: 9, kind: input, shape index: {}]
  %s10 = inlined_call_operand.hbm [shape: f32[2,16,16,64], index: 10, kind: output, shape index: {}]
  %s11 = sld [smem:[#allocation0]]
  $region73: #{res_block_forward.7} parent=0
    _
  %s13 = ssub.s32 1, %s11
  %s14 = scalar_select 0, %s13, %s11
  $region1: #{res_block_forward.7} parent=0
    #allocation4 [shape = 'u8[131072]{0}', space=vmem, size = 0x20000, scoped, tag = 'output window, operand 0']
    #allocation5 [shape = 's32[2]{0}', space=sflag, size = 0x8, scoped, tag = 'scoped memory for res_block_forward.7']
    %15 = vsyncpa [#allocation5], 0
    %s16 = scalar_lea.sflag [#allocation5], 1
    %17 = vsyncpa %s16, 0
    loop: start=0, step=1, limit=6
    $region2: #{res_block_forward.7} parent=1 // loop_pre_header
      _
    $region3: #{res_block_forward.7} parent=1 // loop_header
      %s19 = sphi 0, %s23
      %p20 = scmp.ge.s32.totalorder %s19, 6
      %s26 = sphi 0, %s38
      %s27 = sphi 0, %s34
      %s28 = sphi 0, %s26
      %s29 = sphi 0, %s27
      %s30 = sphi 0, %s28
      %s31 = sphi 0, %s29
      %s41 = sphi 0, %s43
      %s44 = sphi 0, %s41
      %s45 = sphi 0, %s44
      %s61 = sphi 0, %s45
      %s67 = sphi 0, %s69
      %s70 = sphi 0, %s67
      %s71 = sphi 0, %s70
      %s87 = sphi 0, %s71
      %s103 = sphi 0, %s105
      %s106 = sphi 0, %s103
      %s107 = sphi 0, %s106
      %s123 = sphi 0, %s107
      %s131 = sphi 0, %s133
      %s134 = sphi 0, %s131
      %s135 = sphi 0, %s134
      %s151 = sphi 0, %s135
      %s167 = sphi 0, %s169
      %s170 = sphi 0, %s167
      %s171 = sphi 0, %s170
      %s187 = sphi 0, %s171
      %s191 = sphi 0, %s191
      %s193 = sphi 0, %s191
      %s194 = sphi 0, %s193
      %s208 = sphi 0, %s194
      %s212 = sphi 0, %s212
      %s214 = sphi 0, %s212
      %s215 = sphi 0, %s214
      %s229 = sphi 0, %s215
      %s237 = sphi 0, %s239
      %s240 = sphi 0, %s237
      %s241 = sphi 0, %s240
      %s257 = sphi 0, %s241
      %s261 = sphi 0, %s261
      %s263 = sphi 0, %s261
      %s264 = sphi 0, %s263
      %s278 = sphi 0, %s264
      %s282 = sphi 0, %s282
      %s284 = sphi 0, %s282
      %s285 = sphi 0, %s284
      %s299 = sphi 0, %s285
      %s307 = sphi 0, %s309
      %s310 = sphi 0, %s307
      %s311 = sphi 0, %s310
      %s327 = sphi 0, %s311
    $region4: #{res_block_forward.7} parent=1 // loop_header_branch
      %22 = sbr.rel (%p20) target = $region8
    $region5: #{res_block_forward.7} parent=1 // loop_body
      %s24 = ssub.s32 %s19, 1
      %s25 = ssub.s32 %s19, 2
      %s32 = sadd.s32 1, %s27
      %p33 = scmp.ge.s32.totalorder %s32, 2
      %s34 = scalar_select %p33, 0, %s32
      %s35 = sadd.s32 1, %s26
      %s36 = scalar_select %p33, %s35, %s26
      %p37 = scmp.ge.s32.totalorder %s36, 2
      %s38 = scalar_select %p37, 0, %s36
      %s39 = ssub.s32 %s26, %s38
      %p40 = scmp.eq.s32.totalorder %s39, 0
      %s42 = sadd.s32 %s41, 1
      %s43 = scalar_select %p40, %s41, %s42
      %p46 = pneg %p40
      %p47 = scmp.eq.s32.totalorder %s19, 3
      %p48 = por %p46, %p47
      %p49 = scmp.ne.s32.totalorder %s41, %s44
      %p50 = scmp.eq.s32.totalorder %s19, 0
      %p51 = por %p49, %p50
      %p52 = scmp.ne.s32.totalorder %s41, %s44
      %p53 = scmp.eq.s32.totalorder %s24, 3
      %p54 = por %p52, %p53
      %p55 = scmp.ne.s32.totalorder %s44, %s45
      %p56 = scmp.eq.s32.totalorder %s24, 0
      %p57 = por %p55, %p56
      %p58 = scmp.ne.s32.totalorder %s44, %s45
      %p59 = scmp.eq.s32.totalorder %s25, 3
      %p60 = por %p58, %p59
      %p62 = scmp.ne.s32.totalorder %s45, %s61
      %p63 = scmp.eq.s32.totalorder %s25, 0
      %p64 = por %p62, %p63
      %s65 = ssub.s32 %s26, %s38
      %p66 = scmp.eq.s32.totalorder %s65, 0
      %s68 = sadd.s32 %s67, 1
      %s69 = scalar_select %p66, %s67, %s68
      %p72 = pneg %p66
      %p73 = scmp.eq.s32.totalorder %s19, 3
      %p74 = por %p72, %p73
      %p75 = scmp.ne.s32.totalorder %s67, %s70
      %p76 = scmp.eq.s32.totalorder %s19, 0
      %p77 = por %p75, %p76
      %p78 = scmp.ne.s32.totalorder %s67, %s70
      %p79 = scmp.eq.s32.totalorder %s24, 3
      %p80 = por %p78, %p79
      %p81 = scmp.ne.s32.totalorder %s70, %s71
      %p82 = scmp.eq.s32.totalorder %s24, 0
      %p83 = por %p81, %p82
      %p84 = scmp.ne.s32.totalorder %s70, %s71
      %p85 = scmp.eq.s32.totalorder %s25, 3
      %p86 = por %p84, %p85
      %p88 = scmp.ne.s32.totalorder %s71, %s87
      %p89 = scmp.eq.s32.totalorder %s25, 0
      %p90 = por %p88, %p89
      %s91 = smul.u32 %s27, 8
      %s92 = ssub.s32 %s91, 1
      %p93 = scmp.gt.s32.totalorder %s92, 0
      %s94 = scalar_select %p93, %s92, 0
      %s95 = smul.u32 %s34, 8
      %s96 = ssub.s32 %s95, 1
      %p97 = scmp.gt.s32.totalorder %s96, 0
      %s98 = scalar_select %p97, %s96, 0
      %s99 = ssub.s32 %s26, %s38
      %s100 = ssub.s32 %s94, %s98
      %s101 = sor.u32 %s99, %s100
      %p102 = scmp.eq.s32.totalorder %s101, 0
      %s104 = sadd.s32 %s103, 1
      %s105 = scalar_select %p102, %s103, %s104
      %p108 = pneg %p102
      %p109 = scmp.eq.s32.totalorder %s19, 3
      %p110 = por %p108, %p109
      %p111 = scmp.ne.s32.totalorder %s103, %s106
      %p112 = scmp.eq.s32.totalorder %s19, 0
      %p113 = por %p111, %p112
      %p114 = scmp.ne.s32.totalorder %s103, %s106
      %p115 = scmp.eq.s32.totalorder %s24, 3
      %p116 = por %p114, %p115
      %p117 = scmp.ne.s32.totalorder %s106, %s107
      %p118 = scmp.eq.s32.totalorder %s24, 0
      %p119 = por %p117, %p118
      %p120 = scmp.ne.s32.totalorder %s106, %s107
      %p121 = scmp.eq.s32.totalorder %s25, 3
      %p122 = por %p120, %p121
      %p124 = scmp.ne.s32.totalorder %s107, %s123
      %p125 = scmp.eq.s32.totalorder %s25, 0
      %p126 = por %p124, %p125
      %s127 = ssub.s32 %s26, %s38
      %s128 = ssub.s32 %s27, %s34
      %s129 = sor.u32 %s127, %s128
      %p130 = scmp.eq.s32.totalorder %s129, 0
      %s132 = sadd.s32 %s131, 1
      %s133 = scalar_select %p130, %s131, %s132
      %p136 = pneg %p130
      %p137 = scmp.eq.s32.totalorder %s19, 3
      %p138 = por %p136, %p137
      %p139 = scmp.ne.s32.totalorder %s131, %s134
      %p140 = scmp.eq.s32.totalorder %s19, 0
      %p141 = por %p139, %p140
      %p142 = scmp.ne.s32.totalorder %s131, %s134
      %p143 = scmp.eq.s32.totalorder %s24, 3
      %p144 = por %p142, %p143
      %p145 = scmp.ne.s32.totalorder %s134, %s135
      %p146 = scmp.eq.s32.totalorder %s24, 0
      %p147 = por %p145, %p146
      %p148 = scmp.ne.s32.totalorder %s134, %s135
      %p149 = scmp.eq.s32.totalorder %s25, 3
      %p150 = por %p148, %p149
      %p152 = scmp.ne.s32.totalorder %s135, %s151
      %p153 = scmp.eq.s32.totalorder %s25, 0
      %p154 = por %p152, %p153
      %s155 = smul.u32 %s27, 8
      %s156 = sadd.s32 %s155, 8
      %p157 = scmp.lt.s32.totalorder %s156, 15
      %s158 = scalar_select %p157, %s156, 15
      %s159 = smul.u32 %s34, 8
      %s160 = sadd.s32 %s159, 8
      %p161 = scmp.lt.s32.totalorder %s160, 15
      %s162 = scalar_select %p161, %s160, 15
      %s163 = ssub.s32 %s26, %s38
      %s164 = ssub.s32 %s158, %s162
      %s165 = sor.u32 %s163, %s164
      %p166 = scmp.eq.s32.totalorder %s165, 0
      %s168 = sadd.s32 %s167, 1
      %s169 = scalar_select %p166, %s167, %s168
      %p172 = pneg %p166
      %p173 = scmp.eq.s32.totalorder %s19, 3
      %p174 = por %p172, %p173
      %p175 = scmp.ne.s32.totalorder %s167, %s170
      %p176 = scmp.eq.s32.totalorder %s19, 0
      %p177 = por %p175, %p176
      %p178 = scmp.ne.s32.totalorder %s167, %s170
      %p179 = scmp.eq.s32.totalorder %s24, 3
      %p180 = por %p178, %p179
      %p181 = scmp.ne.s32.totalorder %s170, %s171
      %p182 = scmp.eq.s32.totalorder %s24, 0
      %p183 = por %p181, %p182
      %p184 = scmp.ne.s32.totalorder %s170, %s171
      %p185 = scmp.eq.s32.totalorder %s25, 3
      %p186 = por %p184, %p185
      %p188 = scmp.ne.s32.totalorder %s171, %s187
      %p189 = scmp.eq.s32.totalorder %s25, 0
      %p190 = por %p188, %p189
      %s192 = sadd.s32 %s191, 1
      %p195 = scmp.eq.s32.totalorder %s19, 3
      %p196 = scmp.ne.s32.totalorder %s191, %s193
      %p197 = scmp.eq.s32.totalorder %s19, 0
      %p198 = por %p196, %p197
      %p199 = scmp.ne.s32.totalorder %s191, %s193
      %p200 = scmp.eq.s32.totalorder %s24, 3
      %p201 = por %p199, %p200
      %p202 = scmp.ne.s32.totalorder %s193, %s194
      %p203 = scmp.eq.s32.totalorder %s24, 0
      %p204 = por %p202, %p203
      %p205 = scmp.ne.s32.totalorder %s193, %s194
      %p206 = scmp.eq.s32.totalorder %s25, 3
      %p207 = por %p205, %p206
      %p209 = scmp.ne.s32.totalorder %s194, %s208
      %p210 = scmp.eq.s32.totalorder %s25, 0
      %p211 = por %p209, %p210
      %s213 = sadd.s32 %s212, 1
      %p216 = scmp.eq.s32.totalorder %s19, 3
      %p217 = scmp.ne.s32.totalorder %s212, %s214
      %p218 = scmp.eq.s32.totalorder %s19, 0
      %p219 = por %p217, %p218
      %p220 = scmp.ne.s32.totalorder %s212, %s214
      %p221 = scmp.eq.s32.totalorder %s24, 3
      %p222 = por %p220, %p221
      %p223 = scmp.ne.s32.totalorder %s214, %s215
      %p224 = scmp.eq.s32.totalorder %s24, 0
      %p225 = por %p223, %p224
      %p226 = scmp.ne.s32.totalorder %s214, %s215
      %p227 = scmp.eq.s32.totalorder %s25, 3
      %p228 = por %p226, %p227
      %p230 = scmp.ne.s32.totalorder %s215, %s229
      %p231 = scmp.eq.s32.totalorder %s25, 0
      %p232 = por %p230, %p231
      %s233 = ssub.s32 %s26, %s38
      %s234 = ssub.s32 %s27, %s34
      %s235 = sor.u32 %s233, %s234
      %p236 = scmp.eq.s32.totalorder %s235, 0
      %s238 = sadd.s32 %s237, 1
      %s239 = scalar_select %p236, %s237, %s238
      %p242 = pneg %p236
      %p243 = scmp.eq.s32.totalorder %s19, 3
      %p244 = por %p242, %p243
      %p245 = scmp.ne.s32.totalorder %s237, %s240
      %p246 = scmp.eq.s32.totalorder %s19, 0
      %p247 = por %p245, %p246
      %p248 = scmp.ne.s32.totalorder %s237, %s240
      %p249 = scmp.eq.s32.totalorder %s24, 3
      %p250 = por %p248, %p249
      %p251 = scmp.ne.s32.totalorder %s240, %s241
      %p252 = scmp.eq.s32.totalorder %s24, 0
      %p253 = por %p251, %p252
      %p254 = scmp.ne.s32.totalorder %s240, %s241
      %p255 = scmp.eq.s32.totalorder %s25, 3
      %p256 = por %p254, %p255
      %p258 = scmp.ne.s32.totalorder %s241, %s257
      %p259 = scmp.eq.s32.totalorder %s25, 0
      %p260 = por %p258, %p259
      %s262 = sadd.s32 %s261, 1
      %p265 = scmp.eq.s32.totalorder %s19, 3
      %p266 = scmp.ne.s32.totalorder %s261, %s263
      %p267 = scmp.eq.s32.totalorder %s19, 0
      %p268 = por %p266, %p267
      %p269 = scmp.ne.s32.totalorder %s261, %s263
      %p270 = scmp.eq.s32.totalorder %s24, 3
      %p271 = por %p269, %p270
      %p272 = scmp.ne.s32.totalorder %s263, %s264
      %p273 = scmp.eq.s32.totalorder %s24, 0
      %p274 = por %p272, %p273
      %p275 = scmp.ne.s32.totalorder %s263, %s264
      %p276 = scmp.eq.s32.totalorder %s25, 3
      %p277 = por %p275, %p276
      %p279 = scmp.ne.s32.totalorder %s264, %s278
      %p280 = scmp.eq.s32.totalorder %s25, 0
      %p281 = por %p279, %p280
      %s283 = sadd.s32 %s282, 1
      %p286 = scmp.eq.s32.totalorder %s19, 3
      %p287 = scmp.ne.s32.totalorder %s282, %s284
      %p288 = scmp.eq.s32.totalorder %s19, 0
      %p289 = por %p287, %p288
      %p290 = scmp.ne.s32.totalorder %s282, %s284
      %p291 = scmp.eq.s32.totalorder %s24, 3
      %p292 = por %p290, %p291
      %p293 = scmp.ne.s32.totalorder %s284, %s285
      %p294 = scmp.eq.s32.totalorder %s24, 0
      %p295 = por %p293, %p294
      %p296 = scmp.ne.s32.totalorder %s284, %s285
      %p297 = scmp.eq.s32.totalorder %s25, 3
      %p298 = por %p296, %p297
      %p300 = scmp.ne.s32.totalorder %s285, %s299
      %p301 = scmp.eq.s32.totalorder %s25, 0
      %p302 = por %p300, %p301
      %s303 = ssub.s32 %s26, %s38
      %s304 = ssub.s32 %s27, %s34
      %s305 = sor.u32 %s303, %s304
      %p306 = scmp.eq.s32.totalorder %s305, 0
      %s308 = sadd.s32 %s307, 1
      %s309 = scalar_select %p306, %s307, %s308
      %p312 = pneg %p306
      %p313 = scmp.eq.s32.totalorder %s19, 3
      %p314 = por %p312, %p313
      %p315 = scmp.ne.s32.totalorder %s307, %s310
      %p316 = scmp.eq.s32.totalorder %s19, 0
      %p317 = por %p315, %p316
      %p318 = scmp.ne.s32.totalorder %s307, %s310
      %p319 = scmp.eq.s32.totalorder %s24, 3
      %p320 = por %p318, %p319
      %p321 = scmp.ne.s32.totalorder %s310, %s311
      %p322 = scmp.eq.s32.totalorder %s24, 0
      %p323 = por %p321, %p322
      %p324 = scmp.ne.s32.totalorder %s310, %s311
      %p325 = scmp.eq.s32.totalorder %s25, 3
      %p326 = por %p324, %p325
      %p328 = scmp.ne.s32.totalorder %s311, %s327
      %p329 = scmp.eq.s32.totalorder %s25, 0
      %p330 = por %p328, %p329
      %p331 = scmp.le.s32.totalorder 1, %s19
      %p332 = scmp.lt.s32.totalorder %s19, 5
      %p333 = pnand %p331, %p332
      %p334 = pneg %p333
      // Predicated region
      $region9: #{res_block_forward.7} parent=5 // pred_check
        _
      $region10: #{res_block_forward.7} parent=5 // pred_check_branch
        %336 = sbr.rel (%p333) target = $region12
      $region11: #{res_block_forward.7} parent=5 // pred_region
        %s337 = ssub.s32 %s19, 1
        // Predicated region
        $region13: #{res_block_forward.7} parent=11 // pred_check
          %p338 = pneg %p204
        $region14: #{res_block_forward.7} parent=11 // pred_check_branch
          %340 = sbr.rel (%p338) target = $region16
        $region15: #{res_block_forward.7} parent=11 // pred_region
          _
        $region16: #{res_block_forward.7} parent=11 // pred_fallthru
          _
        // Predicated region
        $region17: #{res_block_forward.7} parent=11 // pred_check
          %p341 = pneg %p225
        $region18: #{res_block_forward.7} parent=11 // pred_check_branch
          %343 = sbr.rel (%p341) target = $region20
        $region19: #{res_block_forward.7} parent=11 // pred_region
          _
        $region20: #{res_block_forward.7} parent=11 // pred_fallthru
          _
        // Predicated region
        $region21: #{res_block_forward.7} parent=11 // pred_check
          %p344 = pneg %p274
        $region22: #{res_block_forward.7} parent=11 // pred_check_branch
          %346 = sbr.rel (%p344) target = $region24
        $region23: #{res_block_forward.7} parent=11 // pred_region
          _
        $region24: #{res_block_forward.7} parent=11 // pred_fallthru
          _
        // Predicated region
        $region25: #{res_block_forward.7} parent=11 // pred_check
          %p347 = pneg %p295
        $region26: #{res_block_forward.7} parent=11 // pred_check_branch
          %349 = sbr.rel (%p347) target = $region28
        $region27: #{res_block_forward.7} parent=11 // pred_region
          _
        $region28: #{res_block_forward.7} parent=11 // pred_fallthru
          _
      $region12: #{res_block_forward.7} parent=5 // pred_fallthru
        _
      %p350 = scmp.lt.s32.totalorder %s19, 4
      // Predicated region
      $region29: #{res_block_forward.7} parent=5 // pred_check
        %p351 = pneg %p350
      $region30: #{res_block_forward.7} parent=5 // pred_check_branch
        %353 = sbr.rel (%p351) target = $region32
      $region31: #{res_block_forward.7} parent=5 // pred_region
        // Predicated region
        $region33: #{res_block_forward.7} parent=31 // pred_check
          %p354 = pneg %p51
        $region34: #{res_block_forward.7} parent=31 // pred_check_branch
          %356 = sbr.rel (%p354) target = $region36
        $region35: #{res_block_forward.7} parent=31 // pred_region
          %p357 = scmp.lt.s32.totalorder %s26, 1
          %s358 = scalar_select %p357, %s26, 1
          %s359 = scalar_lea.vmem %s0, %s358
        $region36: #{res_block_forward.7} parent=31 // pred_fallthru
          _
        // Predicated region
        $region37: #{res_block_forward.7} parent=31 // pred_check
          %p360 = pneg %p77
        $region38: #{res_block_forward.7} parent=31 // pred_check_branch
          %362 = sbr.rel (%p360) target = $region40
        $region39: #{res_block_forward.7} parent=31 // pred_region
          %p363 = scmp.lt.s32.totalorder %s26, 1
          %s364 = scalar_select %p363, %s26, 1
          %s365 = scalar_lea.vmem %s1, %s364
        $region40: #{res_block_forward.7} parent=31 // pred_fallthru
          _
        // Predicated region
        $region41: #{res_block_forward.7} parent=31 // pred_check
          %p366 = pneg %p113
        $region42: #{res_block_forward.7} parent=31 // pred_check_branch
          %368 = sbr.rel (%p366) target = $region44
        $region43: #{res_block_forward.7} parent=31 // pred_region
          %s369 = smul.u32 %s27, 8
          %s370 = ssub.s32 %s369, 1
          %p371 = scmp.gt.s32.totalorder %s370, 0
          %s372 = scalar_select %p371, %s370, 0
          %p373 = scmp.lt.s32.totalorder %s26, 1
          %s374 = scalar_select %p373, %s26, 1
          %p375 = scmp.lt.s32.totalorder %s372, 15
          %s376 = scalar_select %p375, %s372, 15
          %s377 = smul.addr %s376, 2
          %s378 = smul.addr %s374, 32
          %s379 = sadd.s32 %s377, %s378
          %s380 = smul.addr %s379, 8
          %s381 = scalar_lea.vmem %s2, %s380
          %s382 = smul.u32 %s27, 8
          %s383 = ssub.s32 %s382, 1
          %p384 = scmp.gt.s32.totalorder %s383, 0
          %s385 = scalar_select %p384, %s383, 0
        $region44: #{res_block_forward.7} parent=31 // pred_fallthru
          _
        // Predicated region
        $region45: #{res_block_forward.7} parent=31 // pred_check
          %p386 = pneg %p141
        $region46: #{res_block_forward.7} parent=31 // pred_check_branch
          %388 = sbr.rel (%p386) target = $region48
        $region47: #{res_block_forward.7} parent=31 // pred_region
          %s389 = smul.u32 8, %s27
          %p390 = scmp.lt.s32.totalorder %s26, 1
          %s391 = scalar_select %p390, %s26, 1
          %p392 = scmp.lt.s32.totalorder %s389, 15
          %s393 = scalar_select %p392, %s389, 15
          %s394 = smul.addr %s393, 2
          %s395 = smul.addr %s391, 32
          %s396 = sadd.s32 %s394, %s395
          %s397 = smul.addr %s396, 8
          %s398 = scalar_lea.vmem %s3, %s397
          %s399 = smul.u32 8, %s27
        $region48: #{res_block_forward.7} parent=31 // pred_fallthru
          _
        // Predicated region
        $region49: #{res_block_forward.7} parent=31 // pred_check
          %p400 = pneg %p177
        $region50: #{res_block_forward.7} parent=31 // pred_check_branch
          %402 = sbr.rel (%p400) target = $region52
        $region51: #{res_block_forward.7} parent=31 // pred_region
          %s403 = smul.u32 %s27, 8
          %s404 = sadd.s32 %s403, 8
          %p405 = scmp.lt.s32.totalorder %s404, 15
          %s406 = scalar_select %p405, %s404, 15
          %p407 = scmp.lt.s32.totalorder %s26, 1
          %s408 = scalar_select %p407, %s26, 1
          %p409 = scmp.lt.s32.totalorder %s406, 15
          %s410 = scalar_select %p409, %s406, 15
          %s411 = smul.addr %s410, 2
          %s412 = smul.addr %s408, 32
          %s413 = sadd.s32 %s411, %s412
          %s414 = smul.addr %s413, 8
          %s415 = scalar_lea.vmem %s4, %s414
          %s416 = smul.u32 %s27, 8
          %s417 = sadd.s32 %s416, 8
          %p418 = scmp.lt.s32.totalorder %s417, 15
          %s419 = scalar_select %p418, %s417, 15
        $region52: #{res_block_forward.7} parent=31 // pred_fallthru
          _
        // Predicated region
        $region53: #{res_block_forward.7} parent=31 // pred_check
          %p420 = pneg %p247
        $region54: #{res_block_forward.7} parent=31 // pred_check_branch
          %422 = sbr.rel (%p420) target = $region56
        $region55: #{res_block_forward.7} parent=31 // pred_region
          %s423 = smul.u32 8, %s27
          %p424 = scmp.lt.s32.totalorder %s26, 1
          %s425 = scalar_select %p424, %s26, 1
          %p426 = scmp.lt.s32.totalorder %s423, 15
          %s427 = scalar_select %p426, %s423, 15
          %s428 = smul.addr %s427, 2
          %s429 = smul.addr %s425, 32
          %s430 = sadd.s32 %s428, %s429
          %s431 = smul.addr %s430, 8
          %s432 = scalar_lea.vmem %s7, %s431
          %s433 = smul.u32 8, %s27
        $region56: #{res_block_forward.7} parent=31 // pred_fallthru
          _
      $region32: #{res_block_forward.7} parent=5 // pred_fallthru
        _
      %p434 = scmp.le.s32.totalorder 1, %s19
      %p435 = scmp.lt.s32.totalorder %s19, 5
      %p436 = pnand %p434, %p435
      %p437 = pneg %p436
      // Predicated region
      $region57: #{res_block_forward.7} parent=5 // pred_check
        _
      $region58: #{res_block_forward.7} parent=5 // pred_check_branch
        %439 = sbr.rel (%p436) target = $region60
      $region59: #{res_block_forward.7} parent=5 // pred_region
        %s440 = ssub.s32 %s19, 1
        %p441 = scmp.lt.s32.totalorder %s28, 1
        %s442 = scalar_select %p441, %s28, 1
        %s443 = scalar_lea.vmem %s0, %s442
        %p444 = pneg %p57
        %p445 = pneg %p54
        %p446 = scmp.lt.s32.totalorder %s28, 1
        %s447 = scalar_select %p446, %s28, 1
        %s448 = scalar_lea.vmem %s1, %s447
        %p449 = pneg %p83
        %p450 = pneg %p80
        %s451 = smul.u32 %s29, 8
        %s452 = ssub.s32 %s451, 1
        %p453 = scmp.gt.s32.totalorder %s452, 0
        %s454 = scalar_select %p453, %s452, 0
        %p455 = scmp.lt.s32.totalorder %s28, 1
        %s456 = scalar_select %p455, %s28, 1
        %p457 = scmp.lt.s32.totalorder %s454, 15
        %s458 = scalar_select %p457, %s454, 15
        %s459 = smul.addr %s458, 2
        %s460 = smul.addr %s456, 32
        %s461 = sadd.s32 %s459, %s460
        %s462 = smul.addr %s461, 8
        %s463 = scalar_lea.vmem %s2, %s462
        %p464 = pneg %p119
        %p465 = pneg %p116
        %s466 = smul.u32 8, %s29
        %p467 = scmp.lt.s32.totalorder %s28, 1
        %s468 = scalar_select %p467, %s28, 1
        %p469 = scmp.lt.s32.totalorder %s466, 15
        %s470 = scalar_select %p469, %s466, 15
        %s471 = smul.addr %s470, 2
        %s472 = smul.addr %s468, 32
        %s473 = sadd.s32 %s471, %s472
        %s474 = smul.addr %s473, 8
        %s475 = scalar_lea.vmem %s3, %s474
        %p476 = pneg %p147
        %p477 = pneg %p144
        %s478 = smul.u32 %s29, 8
        %s479 = sadd.s32 %s478, 8
        %p480 = scmp.lt.s32.totalorder %s479, 15
        %s481 = scalar_select %p480, %s479, 15
        %p482 = scmp.lt.s32.totalorder %s28, 1
        %s483 = scalar_select %p482, %s28, 1
        %p484 = scmp.lt.s32.totalorder %s481, 15
        %s485 = scalar_select %p484, %s481, 15
        %s486 = smul.addr %s485, 2
        %s487 = smul.addr %s483, 32
        %s488 = sadd.s32 %s486, %s487
        %s489 = smul.addr %s488, 8
        %s490 = scalar_lea.vmem %s4, %s489
        %p491 = pneg %p183
        %p492 = pneg %p180
        %p493 = pneg %p204
        %p494 = pneg %p201
        %p495 = pneg %p225
        %p496 = pneg %p222
        %s497 = smul.u32 8, %s29
        %p498 = scmp.lt.s32.totalorder %s28, 1
        %s499 = scalar_select %p498, %s28, 1
        %p500 = scmp.lt.s32.totalorder %s497, 15
        %s501 = scalar_select %p500, %s497, 15
        %s502 = smul.addr %s501, 2
        %s503 = smul.addr %s499, 32
        %s504 = sadd.s32 %s502, %s503
        %s505 = smul.addr %s504, 8
        %s506 = scalar_lea.vmem %s7, %s505
        %p507 = pneg %p253
        %p508 = pneg %p250
        %p509 = pneg %p274
        %p510 = pneg %p271
        %p511 = pneg %p295
        %p512 = pneg %p292
        %p513 = pneg %p323
        %p514 = pneg %p320
        %s515 = sand.u32 %s310, 1
        %s516 = scalar_lea.sflag [#allocation5], %s515
        %s517 = sand.u32 %s310, 1
        %s518 = smul.addr %s517, 128
        %s519 = scalar_lea.vmem [#allocation4], %s518
        %p520 = scmp.lt.s32.totalorder %s28, 1
        %s521 = scalar_select %p520, %s28, 1
        %s522 = scalar_lea.vmem %s0, %s521
        %p523 = scmp.lt.s32.totalorder %s28, 1
        %s524 = scalar_select %p523, %s28, 1
        %s525 = scalar_lea.vmem %s1, %s524
        %s526 = smul.u32 %s29, 8
        %s527 = ssub.s32 %s526, 1
        %p528 = scmp.gt.s32.totalorder %s527, 0
        %s529 = scalar_select %p528, %s527, 0
        %p530 = scmp.lt.s32.totalorder %s28, 1
        %s531 = scalar_select %p530, %s28, 1
        %p532 = scmp.lt.s32.totalorder %s529, 15
        %s533 = scalar_select %p532, %s529, 15
        %s534 = smul.addr %s533, 2
        %s535 = smul.addr %s531, 32
        %s536 = sadd.s32 %s534, %s535
        %s537 = smul.addr %s536, 8
        %s538 = scalar_lea.vmem %s2, %s537
        %s539 = smul.u32 %s29, 8
        %s540 = ssub.s32 %s539, 1
        %p541 = scmp.gt.s32.totalorder %s540, 0
        %s542 = scalar_select %p541, %s540, 0
        %s543 = smul.u32 8, %s29
        %p544 = scmp.lt.s32.totalorder %s28, 1
        %s545 = scalar_select %p544, %s28, 1
        %p546 = scmp.lt.s32.totalorder %s543, 15
        %s547 = scalar_select %p546, %s543, 15
        %s548 = smul.addr %s547, 2
        %s549 = smul.addr %s545, 32
        %s550 = sadd.s32 %s548, %s549
        %s551 = smul.addr %s550, 8
        %s552 = scalar_lea.vmem %s3, %s551
        %s553 = smul.u32 8, %s29
        %s554 = smul.u32 %s29, 8
        %s555 = sadd.s32 %s554, 8
        %p556 = scmp.lt.s32.totalorder %s555, 15
        %s557 = scalar_select %p556, %s555, 15
        %p558 = scmp.lt.s32.totalorder %s28, 1
        %s559 = scalar_select %p558, %s28, 1
        %p560 = scmp.lt.s32.totalorder %s557, 15
        %s561 = scalar_select %p560, %s557, 15
        %s562 = smul.addr %s561, 2
        %s563 = smul.addr %s559, 32
        %s564 = sadd.s32 %s562, %s563
        %s565 = smul.addr %s564, 8
        %s566 = scalar_lea.vmem %s4, %s565
        %s567 = smul.u32 %s29, 8
        %s568 = sadd.s32 %s567, 8
        %p569 = scmp.lt.s32.totalorder %s568, 15
        %s570 = scalar_select %p569, %s568, 15
        %s571 = smul.u32 8, %s29
        %p572 = scmp.lt.s32.totalorder %s28, 1
        %s573 = scalar_select %p572, %s28, 1
        %p574 = scmp.lt.s32.totalorder %s571, 15
        %s575 = scalar_select %p574, %s571, 15
        %s576 = smul.addr %s575, 2
        %s577 = smul.addr %s573, 32
        %s578 = sadd.s32 %s576, %s577
        %s579 = smul.addr %s578, 8
        %s580 = scalar_lea.vmem %s7, %s579
        %s581 = smul.u32 8, %s29
        %s582 = smul.u32 8, %s29
        %v583 = vld [vmem:[%s522] sm:$0x1]
        %v584 = vld [vmem:[%s525] sm:$0x1]
        %vm585 = vcmask 516096
        %586 = vst.msk [vmem:[#allocation2] sm:$0x1] %vm585, 0.0
        %587 = vst.msk [vmem:[#allocation2 + $0x18] sm:$0x1] %vm585, 0.0
        %588 = vst.msk [vmem:[#allocation2 + $0x30] sm:$0x1] %vm585, 0.0
        %589 = vst.msk [vmem:[#allocation2 + $0x48] sm:$0x1] %vm585, 0.0
        %590 = vst.msk [vmem:[#allocation2 + $0x60] sm:$0x1] %vm585, 0.0
        %591 = vst.msk [vmem:[#allocation2 + $0x78] sm:$0x1] %vm585, 0.0
        %592 = vst.msk [vmem:[#allocation2 + $0x90] sm:$0x1] %vm585, 0.0
        %593 = vst.msk [vmem:[#allocation2 + $0xa8] sm:$0x1] %vm585, 0.0
        %594 = vst.msk [vmem:[#allocation2 + $0xc0] sm:$0x1] %vm585, 0.0
        %595 = vst.msk [vmem:[#allocation2 + $0xd8] sm:$0x1] %vm585, 0.0
        %596 = vst.msk [vmem:[#allocation2 + $0x11] sm:$0x1] %vm585, 0.0
        %597 = vst.msk [vmem:[#allocation2 + $0x29] sm:$0x1] %vm585, 0.0
        %598 = vst.msk [vmem:[#allocation2 + $0x41] sm:$0x1] %vm585, 0.0
        %599 = vst.msk [vmem:[#allocation2 + $0x59] sm:$0x1] %vm585, 0.0
        %600 = vst.msk [vmem:[#allocation2 + $0x71] sm:$0x1] %vm585, 0.0
        %601 = vst.msk [vmem:[#allocation2 + $0x89] sm:$0x1] %vm585, 0.0
        %602 = vst.msk [vmem:[#allocation2 + $0xa1] sm:$0x1] %vm585, 0.0
        %603 = vst.msk [vmem:[#allocation2 + $0xb9] sm:$0x1] %vm585, 0.0
        %604 = vst.msk [vmem:[#allocation2 + $0xd1] sm:$0x1] %vm585, 0.0
        %605 = vst.msk [vmem:[#allocation2 + $0xe9] sm:$0x1] %vm585, 0.0
        %v606 = vld [vmem:[%s552] sm:$0xff]
        %v607 = vld [vmem:[%s552 + $0x8] sm:$0xff]
        %v608 = vld [vmem:[%s552 + $0x10] sm:$0xff]
        %v609 = vld [vmem:[%s552 + $0x18] sm:$0xff]
        %v610 = vld [vmem:[%s552 + $0x20] sm:$0xff]
        %v611 = vld [vmem:[%s552 + $0x28] sm:$0xff]
        %v612 = vld [vmem:[%s552 + $0x30] sm:$0xff]
        %v613 = vld [vmem:[%s552 + $0x38] sm:$0xff]
        %v614 = vld [vmem:[%s552 + $0x40] sm:$0xff]
        %v615 = vld [vmem:[%s552 + $0x48] sm:$0xff]
        %v616 = vld [vmem:[%s552 + $0x50] sm:$0xff]
        %v617 = vld [vmem:[%s552 + $0x58] sm:$0xff]
        %v618 = vld [vmem:[%s552 + $0x60] sm:$0xff]
        %v619 = vld [vmem:[%s552 + $0x68] sm:$0xff]
        %v620 = vld [vmem:[%s552 + $0x70] sm:$0xff]
        %v621 = vld [vmem:[%s552 + $0x78] sm:$0xff]
        %v623 = vlaneseq
        %v624 = vshrl.u32 %v623, 7
        %v625 = vsub.s32 0, %v624
        %v626 = vrot.slane %v583, %v625
        %v628 = vmul.f32 %v606, %v626
        %v629 = vmul.f32 %v607, %v626
        %v630 = vmul.f32 %v608, %v626
        %v631 = vmul.f32 %v609, %v626
        %v632 = vmul.f32 %v610, %v626
        %v633 = vmul.f32 %v611, %v626
        %v634 = vmul.f32 %v612, %v626
        %v635 = vmul.f32 %v613, %v626
        %v636 = vmul.f32 %v614, %v626
        %v637 = vmul.f32 %v615, %v626
        %v638 = vmul.f32 %v616, %v626
        %v639 = vmul.f32 %v617, %v626
        %v640 = vmul.f32 %v618, %v626
        %v641 = vmul.f32 %v619, %v626
        %v642 = vmul.f32 %v620, %v626
        %v643 = vmul.f32 %v621, %v626
        %v645 = vlaneseq
        %v646 = vshrl.u32 %v645, 7
        %v647 = vsub.s32 0, %v646
        %v648 = vrot.slane %v584, %v647
        %v650 = vadd.f32 %v628, %v648
        %v651 = vadd.f32 %v629, %v648
        %v652 = vadd.f32 %v630, %v648
        %v653 = vadd.f32 %v631, %v648
        %v654 = vadd.f32 %v632, %v648
        %v655 = vadd.f32 %v633, %v648
        %v656 = vadd.f32 %v634, %v648
        %v657 = vadd.f32 %v635, %v648
        %v658 = vadd.f32 %v636, %v648
        %v659 = vadd.f32 %v637, %v648
        %v660 = vadd.f32 %v638, %v648
        %v661 = vadd.f32 %v639, %v648
        %v662 = vadd.f32 %v640, %v648
        %v663 = vadd.f32 %v641, %v648
        %v664 = vadd.f32 %v642, %v648
        %v665 = vadd.f32 %v643, %v648
        %v666 = vxor.u32 %v650, 2147483648
        %v667 = vxor.u32 %v651, 2147483648
        %v668 = vxor.u32 %v652, 2147483648
        %v669 = vxor.u32 %v653, 2147483648
        %v670 = vxor.u32 %v654, 2147483648
        %v671 = vxor.u32 %v655, 2147483648
        %v672 = vxor.u32 %v656, 2147483648
        %v673 = vxor.u32 %v657, 2147483648
        %v674 = vxor.u32 %v658, 2147483648
        %v675 = vxor.u32 %v659, 2147483648
        %v676 = vxor.u32 %v660, 2147483648
        %v677 = vxor.u32 %v661, 2147483648
        %v678 = vxor.u32 %v662, 2147483648
        %v679 = vxor.u32 %v663, 2147483648
        %v680 = vxor.u32 %v664, 2147483648
        %v681 = vxor.u32 %v665, 2147483648
        %v682 = vmul.f32 %v666, 1.442695
        %v683 = vpow.pop %v682
        %v684 = vmul.f32 %v667, 1.442695
        %v685 = vpow.pop %v684
        %v686 = vmul.f32 %v668, 1.442695
        %v687 = vpow.pop %v686
        %v688 = vmul.f32 %v669, 1.442695
        %v689 = vpow.pop %v688
        %v690 = vmul.f32 %v670, 1.442695
        %v691 = vpow.pop %v690
        %v692 = vmul.f32 %v671, 1.442695
        %v693 = vpow.pop %v692
        %v694 = vmul.f32 %v672, 1.442695
        %v695 = vpow.pop %v694
        %v696 = vmul.f32 %v673, 1.442695
        %v697 = vpow.pop %v696
        %v698 = vmul.f32 %v674, 1.442695
        %v699 = vpow.pop %v698
        %v700 = vmul.f32 %v675, 1.442695
        %v701 = vpow.pop %v700
        %v702 = vmul.f32 %v676, 1.442695
        %v703 = vpow.pop %v702
        %v704 = vmul.f32 %v677, 1.442695
        %v705 = vpow.pop %v704
        %v706 = vmul.f32 %v678, 1.442695
        %v707 = vpow.pop %v706
        %v708 = vmul.f32 %v679, 1.442695
        %v709 = vpow.pop %v708
        %v710 = vmul.f32 %v680, 1.442695
        %v711 = vpow.pop %v710
        %v712 = vmul.f32 %v681, 1.442695
        %v713 = vpow.pop %v712
        %v714 = vadd.f32 %v683, 1.0
        %v715 = vadd.f32 %v685, 1.0
        %v716 = vadd.f32 %v687, 1.0
        %v717 = vadd.f32 %v689, 1.0
        %v718 = vadd.f32 %v691, 1.0
        %v719 = vadd.f32 %v693, 1.0
        %v720 = vadd.f32 %v695, 1.0
        %v721 = vadd.f32 %v697, 1.0
        %v722 = vadd.f32 %v699, 1.0
        %v723 = vadd.f32 %v701, 1.0
        %v724 = vadd.f32 %v703, 1.0
        %v725 = vadd.f32 %v705, 1.0
        %v726 = vadd.f32 %v707, 1.0
        %v727 = vadd.f32 %v709, 1.0
        %v728 = vadd.f32 %v711, 1.0
        %v729 = vadd.f32 %v713, 1.0
        %v730 = vrcp.pop %v714
        %v731 = vmul.f32 1.0, %v730
        %v732 = vrcp.pop %v715
        %v733 = vmul.f32 1.0, %v732
        %v734 = vrcp.pop %v716
        %v735 = vmul.f32 1.0, %v734
        %v736 = vrcp.pop %v717
        %v737 = vmul.f32 1.0, %v736
        %v738 = vrcp.pop %v718
        %v739 = vmul.f32 1.0, %v738
        %v740 = vrcp.pop %v719
        %v741 = vmul.f32 1.0, %v740
        %v742 = vrcp.pop %v720
        %v743 = vmul.f32 1.0, %v742
        %v744 = vrcp.pop %v721
        %v745 = vmul.f32 1.0, %v744
        %v746 = vrcp.pop %v722
        %v747 = vmul.f32 1.0, %v746
        %v748 = vrcp.pop %v723
        %v749 = vmul.f32 1.0, %v748
        %v750 = vrcp.pop %v724
        %v751 = vmul.f32 1.0, %v750
        %v752 = vrcp.pop %v725
        %v753 = vmul.f32 1.0, %v752
        %v754 = vrcp.pop %v726
        %v755 = vmul.f32 1.0, %v754
        %v756 = vrcp.pop %v727
        %v757 = vmul.f32 1.0, %v756
        %v758 = vrcp.pop %v728
        %v759 = vmul.f32 1.0, %v758
        %v760 = vrcp.pop %v729
        %v761 = vmul.f32 1.0, %v760
        %v762 = vmul.f32 %v650, %v731
        %v763 = vmul.f32 %v651, %v733
        %v764 = vmul.f32 %v652, %v735
        %v765 = vmul.f32 %v653, %v737
        %v766 = vmul.f32 %v654, %v739
        %v767 = vmul.f32 %v655, %v741
        %v768 = vmul.f32 %v656, %v743
        %v769 = vmul.f32 %v657, %v745
        %v770 = vmul.f32 %v658, %v747
        %v771 = vmul.f32 %v659, %v749
        %v772 = vmul.f32 %v660, %v751
        %v773 = vmul.f32 %v661, %v753
        %v774 = vmul.f32 %v662, %v755
        %v775 = vmul.f32 %v663, %v757
        %v776 = vmul.f32 %v664, %v759
        %v777 = vmul.f32 %v665, %v761
        %v778 = vld [vmem:[%s538] sm:$0xff]
        %v779 = vld [vmem:[%s538 + $0x8] sm:$0xff]
        %v780 = vmul.f32 %v778, %v626
        %v781 = vmul.f32 %v779, %v626
        %v782 = vadd.f32 %v780, %v648
        %v783 = vadd.f32 %v781, %v648
        %v784 = vxor.u32 %v782, 2147483648
        %v785 = vxor.u32 %v783, 2147483648
        %v786 = vmul.f32 %v784, 1.442695
        %v787 = vpow.pop %v786
        %v788 = vmul.f32 %v785, 1.442695
        %v789 = vpow.pop %v788
        %v790 = vadd.f32 %v787, 1.0
        %v791 = vadd.f32 %v789, 1.0
        %v792 = vrcp.pop %v790
        %v793 = vmul.f32 1.0, %v792
        %v794 = vrcp.pop %v791
        %v795 = vmul.f32 1.0, %v794
        %v796 = vmul.f32 %v782, %v793
        %v797 = vmul.f32 %v783, %v795
        %v798 = vld [vmem:[%s566] sm:$0xff]
        %v799 = vld [vmem:[%s566 + $0x8] sm:$0xff]
        %v800 = vmul.f32 %v798, %v626
        %v801 = vmul.f32 %v799, %v626
        %v802 = vadd.f32 %v800, %v648
        %v803 = vadd.f32 %v801, %v648
        %v804 = vxor.u32 %v802, 2147483648
        %v805 = vxor.u32 %v803, 2147483648
        %v806 = vmul.f32 %v804, 1.442695
        %v807 = vpow.pop %v806
        %v808 = vmul.f32 %v805, 1.442695
        %v809 = vpow.pop %v808
        %v810 = vadd.f32 %v807, 1.0
        %v811 = vadd.f32 %v809, 1.0
        %v812 = vrcp.pop %v810
        %v813 = vmul.f32 1.0, %v812
        %v814 = vrcp.pop %v811
        %v815 = vmul.f32 1.0, %v814
        %v816 = vmul.f32 %v802, %v813
        %v817 = vmul.f32 %v803, %v815
        %p818 = scmp.gt.s32.totalorder %s29, 0
        %s819 = scalar_select %p818, 1, 0
        %v820 = vstv %s819
        %vm821 = vcmp.eq.s32.totalorder %v820, 1
        %v822 = vsel %vm821, %v796, 0.0
        %v823 = vsel %vm821, %v797, 0.0
        %p824 = scmp.lt.s32.totalorder %s29, 1
        %s825 = scalar_select %p824, 1, 0
        %v826 = vstv %s825
        %vm827 = vcmp.eq.s32.totalorder %v826, 1
        %v828 = vsel %vm827, %v816, 0.0
        %v829 = vsel %vm827, %v817, 0.0
        %s830 = scalar_lea.vmem [#allocation2], 24
        %vm831 = vcmask 523264
        %832 = vst.msk [vmem:[%s830 + $0x1] sm:$0xff] %vm831, %v762
        %833 = vst.msk [vmem:[%s830 + $0x9] sm:$0xff] %vm831, %v763
        %834 = vst.msk [vmem:[%s830 + $0x19] sm:$0xff] %vm831, %v764
        %835 = vst.msk [vmem:[%s830 + $0x21] sm:$0xff] %vm831, %v765
        %836 = vst.msk [vmem:[%s830 + $0x31] sm:$0xff] %vm831, %v766
        %837 = vst.msk [vmem:[%s830 + $0x39] sm:$0xff] %vm831, %v767
        %838 = vst.msk [vmem:[%s830 + $0x49] sm:$0xff] %vm831, %v768
        %839 = vst.msk [vmem:[%s830 + $0x51] sm:$0xff] %vm831, %v769
        %840 = vst.msk [vmem:[%s830 + $0x61] sm:$0xff] %vm831, %v770
        %841 = vst.msk [vmem:[%s830 + $0x69] sm:$0xff] %vm831, %v771
        %842 = vst.msk [vmem:[%s830 + $0x79] sm:$0xff] %vm831, %v772
        %843 = vst.msk [vmem:[%s830 + $0x81] sm:$0xff] %vm831, %v773
        %844 = vst.msk [vmem:[%s830 + $0x91] sm:$0xff] %vm831, %v774
        %845 = vst.msk [vmem:[%s830 + $0x99] sm:$0xff] %vm831, %v775
        %846 = vst.msk [vmem:[%s830 + $0xa9] sm:$0xff] %vm831, %v776
        %847 = vst.msk [vmem:[%s830 + $0xb1] sm:$0xff] %vm831, %v777
        %848 = vst.msk [vmem:[#allocation2 + $0x1] sm:$0xff] %vm831, %v822
        %849 = vst.msk [vmem:[#allocation2 + $0x9] sm:$0xff] %vm831, %v823
        %s850 = scalar_lea.vmem [#allocation2], 216
        %851 = vst.msk [vmem:[%s850 + $0x1] sm:$0xff] %vm831, %v828
        %852 = vst.msk [vmem:[%s850 + $0x9] sm:$0xff] %vm831, %v829
        %v853 = vld [vmem:[#allocation2] sm:$0xff]
        %v854 = vld [vmem:[#allocation2 + $0x8] sm:$0xff]
        %v855 = vld [vmem:[#allocation2 + $0x18] sm:$0xff]
        %v856 = vld [vmem:[#allocation2 + $0x20] sm:$0xff]
        %v857 = vld [vmem:[#allocation2 + $0x30] sm:$0xff]
        %v858 = vld [vmem:[#allocation2 + $0x38] sm:$0xff]
        %v859 = vld [vmem:[#allocation2 + $0x48] sm:$0xff]
        %v860 = vld [vmem:[#allocation2 + $0x50] sm:$0xff]
        %v861 = vld [vmem:[#allocation2 + $0x60] sm:$0xff]
        %v862 = vld [vmem:[#allocation2 + $0x68] sm:$0xff]
        %v863 = vld [vmem:[#allocation2 + $0x78] sm:$0xff]
        %v864 = vld [vmem:[#allocation2 + $0x80] sm:$0xff]
        %v865 = vld [vmem:[#allocation2 + $0x90] sm:$0xff]
        %v866 = vld [vmem:[#allocation2 + $0x98] sm:$0xff]
        %v867 = vld [vmem:[#allocation2 + $0xa8] sm:$0xff]
        %v868 = vld [vmem:[#allocation2 + $0xb0] sm:$0xff]
        %869 = vst.msk [vmem:[#allocation3] sm:$0xff] %vm831, %v853
        %870 = vst.msk [vmem:[#allocation3 + $0x28] sm:$0xff] %vm831, %v854
        %871 = vst.msk [vmem:[#allocation3 + $0x50] sm:$0xff] %vm831, %v855
        %872 = vst.msk [vmem:[#allocation3 + $0x78] sm:$0xff] %vm831, %v856
        %873 = vst.msk [vmem:[#allocation3 + $0xa0] sm:$0xff] %vm831, %v857
        %874 = vst.msk [vmem:[#allocation3 + $0xc8] sm:$0xff] %vm831, %v858
        %875 = vst.msk [vmem:[#allocation3 + $0xf0] sm:$0xff] %vm831, %v859
        %876 = vst.msk [vmem:[#allocation3 + $0x118] sm:$0xff] %vm831, %v860
        %877 = vst.msk [vmem:[#allocation3 + $0x140] sm:$0xff] %vm831, %v861
        %878 = vst.msk [vmem:[#allocation3 + $0x168] sm:$0xff] %vm831, %v862
        %879 = vst.msk [vmem:[#allocation3 + $0x190] sm:$0xff] %vm831, %v863
        %880 = vst.msk [vmem:[#allocation3 + $0x1b8] sm:$0xff] %vm831, %v864
        %881 = vst.msk [vmem:[#allocation3 + $0x1e0] sm:$0xff] %vm831, %v865
        %882 = vst.msk [vmem:[#allocation3 + $0x208] sm:$0xff] %vm831, %v866
        %883 = vst.msk [vmem:[#allocation3 + $0x230] sm:$0xff] %vm831, %v867
        %884 = vst.msk [vmem:[#allocation3 + $0x258] sm:$0xff] %vm831, %v868
        %v885 = vld [vmem:[#allocation2 + $0x1] sm:$0xff]
        %v886 = vld [vmem:[#allocation2 + $0x9] sm:$0xff]
        %v887 = vld [vmem:[#allocation2 + $0x19] sm:$0xff]
        %v888 = vld [vmem:[#allocation2 + $0x21] sm:$0xff]
        %v889 = vld [vmem:[#allocation2 + $0x31] sm:$0xff]
        %v890 = vld [vmem:[#allocation2 + $0x39] sm:$0xff]
        %v891 = vld [vmem:[#allocation2 + $0x49] sm:$0xff]
        %v892 = vld [vmem:[#allocation2 + $0x51] sm:$0xff]
        %v893 = vld [vmem:[#allocation2 + $0x61] sm:$0xff]
        %v894 = vld [vmem:[#allocation2 + $0x69] sm:$0xff]
        %v895 = vld [vmem:[#allocation2 + $0x79] sm:$0xff]
        %v896 = vld [vmem:[#allocation2 + $0x81] sm:$0xff]
        %v897 = vld [vmem:[#allocation2 + $0x91] sm:$0xff]
        %v898 = vld [vmem:[#allocation2 + $0x99] sm:$0xff]
        %v899 = vld [vmem:[#allocation2 + $0xa9] sm:$0xff]
        %v900 = vld [vmem:[#allocation2 + $0xb1] sm:$0xff]
        %917 = vrot.lane.b32.xlu0 %v885, 64
        %v918 = vpop.permute.xlu0 %917
        %919 = vrot.lane.b32.xlu0 %v886, 64
        %v920 = vpop.permute.xlu0 %919
        %921 = vrot.lane.b32.xlu0 %v887, 64
        %v922 = vpop.permute.xlu0 %921
        %923 = vrot.lane.b32.xlu0 %v888, 64
        %v924 = vpop.permute.xlu0 %923
        %925 = vrot.lane.b32.xlu0 %v889, 64
        %v926 = vpop.permute.xlu0 %925
        %927 = vrot.lane.b32.xlu0 %v890, 64
        %v928 = vpop.permute.xlu0 %927
        %929 = vrot.lane.b32.xlu0 %v891, 64
        %v930 = vpop.permute.xlu0 %929
        %931 = vrot.lane.b32.xlu0 %v892, 64
        %v932 = vpop.permute.xlu0 %931
        %933 = vrot.lane.b32.xlu0 %v893, 64
        %v934 = vpop.permute.xlu0 %933
        %935 = vrot.lane.b32.xlu0 %v894, 64
        %v936 = vpop.permute.xlu0 %935
        %937 = vrot.lane.b32.xlu0 %v895, 64
        %v938 = vpop.permute.xlu0 %937
        %939 = vrot.lane.b32.xlu0 %v896, 64
        %v940 = vpop.permute.xlu0 %939
        %941 = vrot.lane.b32.xlu0 %v897, 64
        %v942 = vpop.permute.xlu0 %941
        %943 = vrot.lane.b32.xlu0 %v898, 64
        %v944 = vpop.permute.xlu0 %943
        %945 = vrot.lane.b32.xlu0 %v899, 64
        %v946 = vpop.permute.xlu0 %945
        %947 = vrot.lane.b32.xlu0 %v900, 64
        %v948 = vpop.permute.xlu0 %947
        %vm965 = vcmask 1048064
        %966 = vst.msk [vmem:[#allocation3] sm:$0xff] %vm965, %v918
        %967 = vst.msk [vmem:[#allocation3 + $0x28] sm:$0xff] %vm965, %v920
        %968 = vst.msk [vmem:[#allocation3 + $0x50] sm:$0xff] %vm965, %v922
        %969 = vst.msk [vmem:[#allocation3 + $0x78] sm:$0xff] %vm965, %v924
        %970 = vst.msk [vmem:[#allocation3 + $0xa0] sm:$0xff] %vm965, %v926
        %971 = vst.msk [vmem:[#allocation3 + $0xc8] sm:$0xff] %vm965, %v928
        %972 = vst.msk [vmem:[#allocation3 + $0xf0] sm:$0xff] %vm965, %v930
        %973 = vst.msk [vmem:[#allocation3 + $0x118] sm:$0xff] %vm965, %v932
        %974 = vst.msk [vmem:[#allocation3 + $0x140] sm:$0xff] %vm965, %v934
        %975 = vst.msk [vmem:[#allocation3 + $0x168] sm:$0xff] %vm965, %v936
        %976 = vst.msk [vmem:[#allocation3 + $0x190] sm:$0xff] %vm965, %v938
        %977 = vst.msk [vmem:[#allocation3 + $0x1b8] sm:$0xff] %vm965, %v940
        %978 = vst.msk [vmem:[#allocation3 + $0x1e0] sm:$0xff] %vm965, %v942
        %979 = vst.msk [vmem:[#allocation3 + $0x208] sm:$0xff] %vm965, %v944
        %980 = vst.msk [vmem:[#allocation3 + $0x230] sm:$0xff] %vm965, %v946
        %981 = vst.msk [vmem:[#allocation3 + $0x258] sm:$0xff] %vm965, %v948
        %v982 = vld [vmem:[#allocation2 + $0x2] sm:$0xff]
        %v983 = vld [vmem:[#allocation2 + $0xa] sm:$0xff]
        %v984 = vld [vmem:[#allocation2 + $0x1a] sm:$0xff]
        %v985 = vld [vmem:[#allocation2 + $0x22] sm:$0xff]
        %v986 = vld [vmem:[#allocation2 + $0x32] sm:$0xff]
        %v987 = vld [vmem:[#allocation2 + $0x3a] sm:$0xff]
        %v988 = vld [vmem:[#allocation2 + $0x4a] sm:$0xff]
        %v989 = vld [vmem:[#allocation2 + $0x52] sm:$0xff]
        %v990 = vld [vmem:[#allocation2 + $0x62] sm:$0xff]
        %v991 = vld [vmem:[#allocation2 + $0x6a] sm:$0xff]
        %v992 = vld [vmem:[#allocation2 + $0x7a] sm:$0xff]
        %v993 = vld [vmem:[#allocation2 + $0x82] sm:$0xff]
        %v994 = vld [vmem:[#allocation2 + $0x92] sm:$0xff]
        %v995 = vld [vmem:[#allocation2 + $0x9a] sm:$0xff]
        %v996 = vld [vmem:[#allocation2 + $0xaa] sm:$0xff]
        %v997 = vld [vmem:[#allocation2 + $0xb2] sm:$0xff]
        %998 = vst.msk [vmem:[#allocation3 + $0x8] sm:$0xff] %vm831, %v982
        %999 = vst.msk [vmem:[#allocation3 + $0x30] sm:$0xff] %vm831, %v983
        %1000 = vst.msk [vmem:[#allocation3 + $0x58] sm:$0xff] %vm831, %v984
        %1001 = vst.msk [vmem:[#allocation3 + $0x80] sm:$0xff] %vm831, %v985
        %1002 = vst.msk [vmem:[#allocation3 + $0xa8] sm:$0xff] %vm831, %v986
        %1003 = vst.msk [vmem:[#allocation3 + $0xd0] sm:$0xff] %vm831, %v987
        %1004 = vst.msk [vmem:[#allocation3 + $0xf8] sm:$0xff] %vm831, %v988
        %1005 = vst.msk [vmem:[#allocation3 + $0x120] sm:$0xff] %vm831, %v989
        %1006 = vst.msk [vmem:[#allocation3 + $0x148] sm:$0xff] %vm831, %v990
        %1007 = vst.msk [vmem:[#allocation3 + $0x170] sm:$0xff] %vm831, %v991
        %1008 = vst.msk [vmem:[#allocation3 + $0x198] sm:$0xff] %vm831, %v992
        %1009 = vst.msk [vmem:[#allocation3 + $0x1c0] sm:$0xff] %vm831, %v993
        %1010 = vst.msk [vmem:[#allocation3 + $0x1e8] sm:$0xff] %vm831, %v994
        %1011 = vst.msk [vmem:[#allocation3 + $0x210] sm:$0xff] %vm831, %v995
        %1012 = vst.msk [vmem:[#allocation3 + $0x238] sm:$0xff] %vm831, %v996
        %1013 = vst.msk [vmem:[#allocation3 + $0x260] sm:$0xff] %vm831, %v997
        %v1014 = vld [vmem:[%s830] sm:$0xff]
        %v1015 = vld [vmem:[%s830 + $0x8] sm:$0xff]
        %v1016 = vld [vmem:[%s830 + $0x18] sm:$0xff]
        %v1017 = vld [vmem:[%s830 + $0x20] sm:$0xff]
        %v1018 = vld [vmem:[%s830 + $0x30] sm:$0xff]
        %v1019 = vld [vmem:[%s830 + $0x38] sm:$0xff]
        %v1020 = vld [vmem:[%s830 + $0x48] sm:$0xff]
        %v1021 = vld [vmem:[%s830 + $0x50] sm:$0xff]
        %v1022 = vld [vmem:[%s830 + $0x60] sm:$0xff]
        %v1023 = vld [vmem:[%s830 + $0x68] sm:$0xff]
        %v1024 = vld [vmem:[%s830 + $0x78] sm:$0xff]
        %v1025 = vld [vmem:[%s830 + $0x80] sm:$0xff]
        %v1026 = vld [vmem:[%s830 + $0x90] sm:$0xff]
        %v1027 = vld [vmem:[%s830 + $0x98] sm:$0xff]
        %v1028 = vld [vmem:[%s830 + $0xa8] sm:$0xff]
        %v1029 = vld [vmem:[%s830 + $0xb0] sm:$0xff]
        %1046 = vrot.lane.b32.xlu0 %v1014, 64
        %v1047 = vpop.permute.xlu0 %1046
        %1048 = vrot.lane.b32.xlu0 %v1015, 64
        %v1049 = vpop.permute.xlu0 %1048
        %1050 = vrot.lane.b32.xlu0 %v1016, 64
        %v1051 = vpop.permute.xlu0 %1050
        %1052 = vrot.lane.b32.xlu0 %v1017, 64
        %v1053 = vpop.permute.xlu0 %1052
        %1054 = vrot.lane.b32.xlu0 %v1018, 64
        %v1055 = vpop.permute.xlu0 %1054
        %1056 = vrot.lane.b32.xlu0 %v1019, 64
        %v1057 = vpop.permute.xlu0 %1056
        %1058 = vrot.lane.b32.xlu0 %v1020, 64
        %v1059 = vpop.permute.xlu0 %1058
        %1060 = vrot.lane.b32.xlu0 %v1021, 64
        %v1061 = vpop.permute.xlu0 %1060
        %1062 = vrot.lane.b32.xlu0 %v1022, 64
        %v1063 = vpop.permute.xlu0 %1062
        %1064 = vrot.lane.b32.xlu0 %v1023, 64
        %v1065 = vpop.permute.xlu0 %1064
        %1066 = vrot.lane.b32.xlu0 %v1024, 64
        %v1067 = vpop.permute.xlu0 %1066
        %1068 = vrot.lane.b32.xlu0 %v1025, 64
        %v1069 = vpop.permute.xlu0 %1068
        %1070 = vrot.lane.b32.xlu0 %v1026, 64
        %v1071 = vpop.permute.xlu0 %1070
        %1072 = vrot.lane.b32.xlu0 %v1027, 64
        %v1073 = vpop.permute.xlu0 %1072
        %1074 = vrot.lane.b32.xlu0 %v1028, 64
        %v1075 = vpop.permute.xlu0 %1074
        %1076 = vrot.lane.b32.xlu0 %v1029, 64
        %v1077 = vpop.permute.xlu0 %1076
        %1094 = vst.msk [vmem:[#allocation3 + $0x8] sm:$0xff] %vm965, %v1047
        %1095 = vst.msk [vmem:[#allocation3 + $0x30] sm:$0xff] %vm965, %v1049
        %1096 = vst.msk [vmem:[#allocation3 + $0x58] sm:$0xff] %vm965, %v1051
        %1097 = vst.msk [vmem:[#allocation3 + $0x80] sm:$0xff] %vm965, %v1053
        %1098 = vst.msk [vmem:[#allocation3 + $0xa8] sm:$0xff] %vm965, %v1055
        %1099 = vst.msk [vmem:[#allocation3 + $0xd0] sm:$0xff] %vm965, %v1057
        %1100 = vst.msk [vmem:[#allocation3 + $0xf8] sm:$0xff] %vm965, %v1059
        %1101 = vst.msk [vmem:[#allocation3 + $0x120] sm:$0xff] %vm965, %v1061
        %1102 = vst.msk [vmem:[#allocation3 + $0x148] sm:$0xff] %vm965, %v1063
        %1103 = vst.msk [vmem:[#allocation3 + $0x170] sm:$0xff] %vm965, %v1065
        %1104 = vst.msk [vmem:[#allocation3 + $0x198] sm:$0xff] %vm965, %v1067
        %1105 = vst.msk [vmem:[#allocation3 + $0x1c0] sm:$0xff] %vm965, %v1069
        %1106 = vst.msk [vmem:[#allocation3 + $0x1e8] sm:$0xff] %vm965, %v1071
        %1107 = vst.msk [vmem:[#allocation3 + $0x210] sm:$0xff] %vm965, %v1073
        %1108 = vst.msk [vmem:[#allocation3 + $0x238] sm:$0xff] %vm965, %v1075
        %1109 = vst.msk [vmem:[#allocation3 + $0x260] sm:$0xff] %vm965, %v1077
        %v1110 = vld [vmem:[%s830 + $0x1] sm:$0xff]
        %v1111 = vld [vmem:[%s830 + $0x9] sm:$0xff]
        %v1112 = vld [vmem:[%s830 + $0x19] sm:$0xff]
        %v1113 = vld [vmem:[%s830 + $0x21] sm:$0xff]
        %v1114 = vld [vmem:[%s830 + $0x31] sm:$0xff]
        %v1115 = vld [vmem:[%s830 + $0x39] sm:$0xff]
        %v1116 = vld [vmem:[%s830 + $0x49] sm:$0xff]
        %v1117 = vld [vmem:[%s830 + $0x51] sm:$0xff]
        %v1118 = vld [vmem:[%s830 + $0x61] sm:$0xff]
        %v1119 = vld [vmem:[%s830 + $0x69] sm:$0xff]
        %v1120 = vld [vmem:[%s830 + $0x79] sm:$0xff]
        %v1121 = vld [vmem:[%s830 + $0x81] sm:$0xff]
        %v1122 = vld [vmem:[%s830 + $0x91] sm:$0xff]
        %v1123 = vld [vmem:[%s830 + $0x99] sm:$0xff]
        %v1124 = vld [vmem:[%s830 + $0xa9] sm:$0xff]
        %v1125 = vld [vmem:[%s830 + $0xb1] sm:$0xff]
        %1126 = vst.msk [vmem:[#allocation3 + $0x10] sm:$0xff] %vm831, %v1110
        %1127 = vst.msk [vmem:[#allocation3 + $0x38] sm:$0xff] %vm831, %v1111
        %1128 = vst.msk [vmem:[#allocation3 + $0x60] sm:$0xff] %vm831, %v1112
        %1129 = vst.msk [vmem:[#allocation3 + $0x88] sm:$0xff] %vm831, %v1113
        %1130 = vst.msk [vmem:[#allocation3 + $0xb0] sm:$0xff] %vm831, %v1114
        %1131 = vst.msk [vmem:[#allocation3 + $0xd8] sm:$0xff] %vm831, %v1115
        %1132 = vst.msk [vmem:[#allocation3 + $0x100] sm:$0xff] %vm831, %v1116
        %1133 = vst.msk [vmem:[#allocation3 + $0x128] sm:$0xff] %vm831, %v1117
        %1134 = vst.msk [vmem:[#allocation3 + $0x150] sm:$0xff] %vm831, %v1118
        %1135 = vst.msk [vmem:[#allocation3 + $0x178] sm:$0xff] %vm831, %v1119
        %1136 = vst.msk [vmem:[#allocation3 + $0x1a0] sm:$0xff] %vm831, %v1120
        %1137 = vst.msk [vmem:[#allocation3 + $0x1c8] sm:$0xff] %vm831, %v1121
        %1138 = vst.msk [vmem:[#allocation3 + $0x1f0] sm:$0xff] %vm831, %v1122
        %1139 = vst.msk [vmem:[#allocation3 + $0x218] sm:$0xff] %vm831, %v1123
        %1140 = vst.msk [vmem:[#allocation3 + $0x240] sm:$0xff] %vm831, %v1124
        %1141 = vst.msk [vmem:[#allocation3 + $0x268] sm:$0xff] %vm831, %v1125
        %v1142 = vld [vmem:[%s830 + $0x2] sm:$0xff]
        %v1143 = vld [vmem:[%s830 + $0xa] sm:$0xff]
        %v1144 = vld [vmem:[%s830 + $0x1a] sm:$0xff]
        %v1145 = vld [vmem:[%s830 + $0x22] sm:$0xff]
        %v1146 = vld [vmem:[%s830 + $0x32] sm:$0xff]
        %v1147 = vld [vmem:[%s830 + $0x3a] sm:$0xff]
        %v1148 = vld [vmem:[%s830 + $0x4a] sm:$0xff]
        %v1149 = vld [vmem:[%s830 + $0x52] sm:$0xff]
        %v1150 = vld [vmem:[%s830 + $0x62] sm:$0xff]
        %v1151 = vld [vmem:[%s830 + $0x6a] sm:$0xff]
        %v1152 = vld [vmem:[%s830 + $0x7a] sm:$0xff]
        %v1153 = vld [vmem:[%s830 + $0x82] sm:$0xff]
        %v1154 = vld [vmem:[%s830 + $0x92] sm:$0xff]
        %v1155 = vld [vmem:[%s830 + $0x9a] sm:$0xff]
        %v1156 = vld [vmem:[%s830 + $0xaa] sm:$0xff]
        %v1157 = vld [vmem:[%s830 + $0xb2] sm:$0xff]
        %1174 = vrot.lane.b32.xlu0 %v1142, 64
        %v1175 = vpop.permute.xlu0 %1174
        %1176 = vrot.lane.b32.xlu0 %v1143, 64
        %v1177 = vpop.permute.xlu0 %1176
        %1178 = vrot.lane.b32.xlu0 %v1144, 64
        %v1179 = vpop.permute.xlu0 %1178
        %1180 = vrot.lane.b32.xlu0 %v1145, 64
        %v1181 = vpop.permute.xlu0 %1180
        %1182 = vrot.lane.b32.xlu0 %v1146, 64
        %v1183 = vpop.permute.xlu0 %1182
        %1184 = vrot.lane.b32.xlu0 %v1147, 64
        %v1185 = vpop.permute.xlu0 %1184
        %1186 = vrot.lane.b32.xlu0 %v1148, 64
        %v1187 = vpop.permute.xlu0 %1186
        %1188 = vrot.lane.b32.xlu0 %v1149, 64
        %v1189 = vpop.permute.xlu0 %1188
        %1190 = vrot.lane.b32.xlu0 %v1150, 64
        %v1191 = vpop.permute.xlu0 %1190
        %1192 = vrot.lane.b32.xlu0 %v1151, 64
        %v1193 = vpop.permute.xlu0 %1192
        %1194 = vrot.lane.b32.xlu0 %v1152, 64
        %v1195 = vpop.permute.xlu0 %1194
        %1196 = vrot.lane.b32.xlu0 %v1153, 64
        %v1197 = vpop.permute.xlu0 %1196
        %1198 = vrot.lane.b32.xlu0 %v1154, 64
        %v1199 = vpop.permute.xlu0 %1198
        %1200 = vrot.lane.b32.xlu0 %v1155, 64
        %v1201 = vpop.permute.xlu0 %1200
        %1202 = vrot.lane.b32.xlu0 %v1156, 64
        %v1203 = vpop.permute.xlu0 %1202
        %1204 = vrot.lane.b32.xlu0 %v1157, 64
        %v1205 = vpop.permute.xlu0 %1204
        %1222 = vst.msk [vmem:[#allocation3 + $0x10] sm:$0xff] %vm965, %v1175
        %1223 = vst.msk [vmem:[#allocation3 + $0x38] sm:$0xff] %vm965, %v1177
        %1224 = vst.msk [vmem:[#allocation3 + $0x60] sm:$0xff] %vm965, %v1179
        %1225 = vst.msk [vmem:[#allocation3 + $0x88] sm:$0xff] %vm965, %v1181
        %1226 = vst.msk [vmem:[#allocation3 + $0xb0] sm:$0xff] %vm965, %v1183
        %1227 = vst.msk [vmem:[#allocation3 + $0xd8] sm:$0xff] %vm965, %v1185
        %1228 = vst.msk [vmem:[#allocation3 + $0x100] sm:$0xff] %vm965, %v1187
        %1229 = vst.msk [vmem:[#allocation3 + $0x128] sm:$0xff] %vm965, %v1189
        %1230 = vst.msk [vmem:[#allocation3 + $0x150] sm:$0xff] %vm965, %v1191
        %1231 = vst.msk [vmem:[#allocation3 + $0x178] sm:$0xff] %vm965, %v1193
        %1232 = vst.msk [vmem:[#allocation3 + $0x1a0] sm:$0xff] %vm965, %v1195
        %1233 = vst.msk [vmem:[#allocation3 + $0x1c8] sm:$0xff] %vm965, %v1197
        %1234 = vst.msk [vmem:[#allocation3 + $0x1f0] sm:$0xff] %vm965, %v1199
        %1235 = vst.msk [vmem:[#allocation3 + $0x218] sm:$0xff] %vm965, %v1201
        %1236 = vst.msk [vmem:[#allocation3 + $0x240] sm:$0xff] %vm965, %v1203
        %1237 = vst.msk [vmem:[#allocation3 + $0x268] sm:$0xff] %vm965, %v1205
        %s1238 = scalar_lea.vmem [#allocation2], 48
        %v1239 = vld [vmem:[%s1238] sm:$0xff]
        %v1240 = vld [vmem:[%s1238 + $0x8] sm:$0xff]
        %v1241 = vld [vmem:[%s1238 + $0x18] sm:$0xff]
        %v1242 = vld [vmem:[%s1238 + $0x20] sm:$0xff]
        %v1243 = vld [vmem:[%s1238 + $0x30] sm:$0xff]
        %v1244 = vld [vmem:[%s1238 + $0x38] sm:$0xff]
        %v1245 = vld [vmem:[%s1238 + $0x48] sm:$0xff]
        %v1246 = vld [vmem:[%s1238 + $0x50] sm:$0xff]
        %v1247 = vld [vmem:[%s1238 + $0x60] sm:$0xff]
        %v1248 = vld [vmem:[%s1238 + $0x68] sm:$0xff]
        %v1249 = vld [vmem:[%s1238 + $0x78] sm:$0xff]
        %v1250 = vld [vmem:[%s1238 + $0x80] sm:$0xff]
        %v1251 = vld [vmem:[%s1238 + $0x90] sm:$0xff]
        %v1252 = vld [vmem:[%s1238 + $0x98] sm:$0xff]
        %v1253 = vld [vmem:[%s1238 + $0xa8] sm:$0xff]
        %v1254 = vld [vmem:[%s1238 + $0xb0] sm:$0xff]
        %1255 = vst.msk [vmem:[#allocation3 + $0x18] sm:$0xff] %vm831, %v1239
        %1256 = vst.msk [vmem:[#allocation3 + $0x40] sm:$0xff] %vm831, %v1240
        %1257 = vst.msk [vmem:[#allocation3 + $0x68] sm:$0xff] %vm831, %v1241
        %1258 = vst.msk [vmem:[#allocation3 + $0x90] sm:$0xff] %vm831, %v1242
        %1259 = vst.msk [vmem:[#allocation3 + $0xb8] sm:$0xff] %vm831, %v1243
        %1260 = vst.msk [vmem:[#allocation3 + $0xe0] sm:$0xff] %vm831, %v1244
        %1261 = vst.msk [vmem:[#allocation3 + $0x108] sm:$0xff] %vm831, %v1245
        %1262 = vst.msk [vmem:[#allocation3 + $0x130] sm:$0xff] %vm831, %v1246
        %1263 = vst.msk [vmem:[#allocation3 + $0x158] sm:$0xff] %vm831, %v1247
        %1264 = vst.msk [vmem:[#allocation3 + $0x180] sm:$0xff] %vm831, %v1248
        %1265 = vst.msk [vmem:[#allocation3 + $0x1a8] sm:$0xff] %vm831, %v1249
        %1266 = vst.msk [vmem:[#allocation3 + $0x1d0] sm:$0xff] %vm831, %v1250
        %1267 = vst.msk [vmem:[#allocation3 + $0x1f8] sm:$0xff] %vm831, %v1251
        %1268 = vst.msk [vmem:[#allocation3 + $0x220] sm:$0xff] %vm831, %v1252
        %1269 = vst.msk [vmem:[#allocation3 + $0x248] sm:$0xff] %vm831, %v1253
        %1270 = vst.msk [vmem:[#allocation3 + $0x270] sm:$0xff] %vm831, %v1254
        %v1271 = vld [vmem:[%s1238 + $0x1] sm:$0xff]
        %v1272 = vld [vmem:[%s1238 + $0x9] sm:$0xff]
        %v1273 = vld [vmem:[%s1238 + $0x19] sm:$0xff]
        %v1274 = vld [vmem:[%s1238 + $0x21] sm:$0xff]
        %v1275 = vld [vmem:[%s1238 + $0x31] sm:$0xff]
        %v1276 = vld [vmem:[%s1238 + $0x39] sm:$0xff]
        %v1277 = vld [vmem:[%s1238 + $0x49] sm:$0xff]
        %v1278 = vld [vmem:[%s1238 + $0x51] sm:$0xff]
        %v1279 = vld [vmem:[%s1238 + $0x61] sm:$0xff]
        %v1280 = vld [vmem:[%s1238 + $0x69] sm:$0xff]
        %v1281 = vld [vmem:[%s1238 + $0x79] sm:$0xff]
        %v1282 = vld [vmem:[%s1238 + $0x81] sm:$0xff]
        %v1283 = vld [vmem:[%s1238 + $0x91] sm:$0xff]
        %v1284 = vld [vmem:[%s1238 + $0x99] sm:$0xff]
        %v1285 = vld [vmem:[%s1238 + $0xa9] sm:$0xff]
        %v1286 = vld [vmem:[%s1238 + $0xb1] sm:$0xff]
        %1303 = vrot.lane.b32.xlu0 %v1271, 64
        %v1304 = vpop.permute.xlu0 %1303
        %1305 = vrot.lane.b32.xlu0 %v1272, 64
        %v1306 = vpop.permute.xlu0 %1305
        %1307 = vrot.lane.b32.xlu0 %v1273, 64
        %v1308 = vpop.permute.xlu0 %1307
        %1309 = vrot.lane.b32.xlu0 %v1274, 64
        %v1310 = vpop.permute.xlu0 %1309
        %1311 = vrot.lane.b32.xlu0 %v1275, 64
        %v1312 = vpop.permute.xlu0 %1311
        %1313 = vrot.lane.b32.xlu0 %v1276, 64
        %v1314 = vpop.permute.xlu0 %1313
        %1315 = vrot.lane.b32.xlu0 %v1277, 64
        %v1316 = vpop.permute.xlu0 %1315
        %1317 = vrot.lane.b32.xlu0 %v1278, 64
        %v1318 = vpop.permute.xlu0 %1317
        %1319 = vrot.lane.b32.xlu0 %v1279, 64
        %v1320 = vpop.permute.xlu0 %1319
        %1321 = vrot.lane.b32.xlu0 %v1280, 64
        %v1322 = vpop.permute.xlu0 %1321
        %1323 = vrot.lane.b32.xlu0 %v1281, 64
        %v1324 = vpop.permute.xlu0 %1323
        %1325 = vrot.lane.b32.xlu0 %v1282, 64
        %v1326 = vpop.permute.xlu0 %1325
        %1327 = vrot.lane.b32.xlu0 %v1283, 64
        %v1328 = vpop.permute.xlu0 %1327
        %1329 = vrot.lane.b32.xlu0 %v1284, 64
        %v1330 = vpop.permute.xlu0 %1329
        %1331 = vrot.lane.b32.xlu0 %v1285, 64
        %v1332 = vpop.permute.xlu0 %1331
        %1333 = vrot.lane.b32.xlu0 %v1286, 64
        %v1334 = vpop.permute.xlu0 %1333
        %1351 = vst.msk [vmem:[#allocation3 + $0x18] sm:$0xff] %vm965, %v1304
        %1352 = vst.msk [vmem:[#allocation3 + $0x40] sm:$0xff] %vm965, %v1306
        %1353 = vst.msk [vmem:[#allocation3 + $0x68] sm:$0xff] %vm965, %v1308
        %1354 = vst.msk [vmem:[#allocation3 + $0x90] sm:$0xff] %vm965, %v1310
        %1355 = vst.msk [vmem:[#allocation3 + $0xb8] sm:$0xff] %vm965, %v1312
        %1356 = vst.msk [vmem:[#allocation3 + $0xe0] sm:$0xff] %vm965, %v1314
        %1357 = vst.msk [vmem:[#allocation3 + $0x108] sm:$0xff] %vm965, %v1316
        %1358 = vst.msk [vmem:[#allocation3 + $0x130] sm:$0xff] %vm965, %v1318
        %1359 = vst.msk [vmem:[#allocation3 + $0x158] sm:$0xff] %vm965, %v1320
        %1360 = vst.msk [vmem:[#allocation3 + $0x180] sm:$0xff] %vm965, %v1322
        %1361 = vst.msk [vmem:[#allocation3 + $0x1a8] sm:$0xff] %vm965, %v1324
        %1362 = vst.msk [vmem:[#allocation3 + $0x1d0] sm:$0xff] %vm965, %v1326
        %1363 = vst.msk [vmem:[#allocation3 + $0x1f8] sm:$0xff] %vm965, %v1328
        %1364 = vst.msk [vmem:[#allocation3 + $0x220] sm:$0xff] %vm965, %v1330
        %1365 = vst.msk [vmem:[#allocation3 + $0x248] sm:$0xff] %vm965, %v1332
        %1366 = vst.msk [vmem:[#allocation3 + $0x270] sm:$0xff] %vm965, %v1334
        %v1367 = vld [vmem:[%s1238 + $0x2] sm:$0xff]
        %v1368 = vld [vmem:[%s1238 + $0xa] sm:$0xff]
        %v1369 = vld [vmem:[%s1238 + $0x1a] sm:$0xff]
        %v1370 = vld [vmem:[%s1238 + $0x22] sm:$0xff]
        %v1371 = vld [vmem:[%s1238 + $0x32] sm:$0xff]
        %v1372 = vld [vmem:[%s1238 + $0x3a] sm:$0xff]
        %v1373 = vld [vmem:[%s1238 + $0x4a] sm:$0xff]
        %v1374 = vld [vmem:[%s1238 + $0x52] sm:$0xff]
        %v1375 = vld [vmem:[%s1238 + $0x62] sm:$0xff]
        %v1376 = vld [vmem:[%s1238 + $0x6a] sm:$0xff]
        %v1377 = vld [vmem:[%s1238 + $0x7a] sm:$0xff]
        %v1378 = vld [vmem:[%s1238 + $0x82] sm:$0xff]
        %v1379 = vld [vmem:[%s1238 + $0x92] sm:$0xff]
        %v1380 = vld [vmem:[%s1238 + $0x9a] sm:$0xff]
        %v1381 = vld [vmem:[%s1238 + $0xaa] sm:$0xff]
        %v1382 = vld [vmem:[%s1238 + $0xb2] sm:$0xff]
        %1383 = vst.msk [vmem:[#allocation3 + $0x20] sm:$0xff] %vm831, %v1367
        %1384 = vst.msk [vmem:[#allocation3 + $0x48] sm:$0xff] %vm831, %v1368
        %1385 = vst.msk [vmem:[#allocation3 + $0x70] sm:$0xff] %vm831, %v1369
        %1386 = vst.msk [vmem:[#allocation3 + $0x98] sm:$0xff] %vm831, %v1370
        %1387 = vst.msk [vmem:[#allocation3 + $0xc0] sm:$0xff] %vm831, %v1371
        %1388 = vst.msk [vmem:[#allocation3 + $0xe8] sm:$0xff] %vm831, %v1372
        %1389 = vst.msk [vmem:[#allocation3 + $0x110] sm:$0xff] %vm831, %v1373
        %1390 = vst.msk [vmem:[#allocation3 + $0x138] sm:$0xff] %vm831, %v1374
        %1391 = vst.msk [vmem:[#allocation3 + $0x160] sm:$0xff] %vm831, %v1375
        %1392 = vst.msk [vmem:[#allocation3 + $0x188] sm:$0xff] %vm831, %v1376
        %1393 = vst.msk [vmem:[#allocation3 + $0x1b0] sm:$0xff] %vm831, %v1377
        %1394 = vst.msk [vmem:[#allocation3 + $0x1d8] sm:$0xff] %vm831, %v1378
        %1395 = vst.msk [vmem:[#allocation3 + $0x200] sm:$0xff] %vm831, %v1379
        %1396 = vst.msk [vmem:[#allocation3 + $0x228] sm:$0xff] %vm831, %v1380
        %1397 = vst.msk [vmem:[#allocation3 + $0x250] sm:$0xff] %vm831, %v1381
        %1398 = vst.msk [vmem:[#allocation3 + $0x278] sm:$0xff] %vm831, %v1382
        %v1399 = vld [vmem:[#allocation3] sm:$0xff]
        %v1400 = vld [vmem:[#allocation3 + $0x8] sm:$0xff]
        %v1401 = vld [vmem:[#allocation3 + $0x10] sm:$0xff]
        %v1402 = vld [vmem:[#allocation3 + $0x18] sm:$0xff]
        %v1403 = vld [vmem:[#allocation3 + $0x20] sm:$0xff]
        %v1404 = vld [vmem:[#allocation3 + $0x28] sm:$0xff]
        %v1405 = vld [vmem:[#allocation3 + $0x30] sm:$0xff]
        %v1406 = vld [vmem:[#allocation3 + $0x38] sm:$0xff]
        %v1407 = vld [vmem:[#allocation3 + $0x40] sm:$0xff]
        %v1408 = vld [vmem:[#allocation3 + $0x48] sm:$0xff]
        %v1409 = vld [vmem:[#allocation3 + $0x50] sm:$0xff]
        %v1410 = vld [vmem:[#allocation3 + $0x58] sm:$0xff]
        %v1411 = vld [vmem:[#allocation3 + $0x60] sm:$0xff]
        %v1412 = vld [vmem:[#allocation3 + $0x68] sm:$0xff]
        %v1413 = vld [vmem:[#allocation3 + $0x70] sm:$0xff]
        %v1414 = vld [vmem:[#allocation3 + $0x78] sm:$0xff]
        %v1415 = vld [vmem:[#allocation3 + $0x80] sm:$0xff]
        %v1416 = vld [vmem:[#allocation3 + $0x88] sm:$0xff]
        %v1417 = vld [vmem:[#allocation3 + $0x90] sm:$0xff]
        %v1418 = vld [vmem:[#allocation3 + $0x98] sm:$0xff]
        %v1419 = vld [vmem:[#allocation3 + $0xa0] sm:$0xff]
        %v1420 = vld [vmem:[#allocation3 + $0xa8] sm:$0xff]
        %v1421 = vld [vmem:[#allocation3 + $0xb0] sm:$0xff]
        %v1422 = vld [vmem:[#allocation3 + $0xb8] sm:$0xff]
        %v1423 = vld [vmem:[#allocation3 + $0xc0] sm:$0xff]
        %v1424 = vld [vmem:[#allocation3 + $0xc8] sm:$0xff]
        %v1425 = vld [vmem:[#allocation3 + $0xd0] sm:$0xff]
        %v1426 = vld [vmem:[#allocation3 + $0xd8] sm:$0xff]
        %v1427 = vld [vmem:[#allocation3 + $0xe0] sm:$0xff]
        %v1428 = vld [vmem:[#allocation3 + $0xe8] sm:$0xff]
        %v1429 = vld [vmem:[#allocation3 + $0xf0] sm:$0xff]
        %v1430 = vld [vmem:[#allocation3 + $0xf8] sm:$0xff]
        %v1431 = vld [vmem:[#allocation3 + $0x100] sm:$0xff]
        %v1432 = vld [vmem:[#allocation3 + $0x108] sm:$0xff]
        %v1433 = vld [vmem:[#allocation3 + $0x110] sm:$0xff]
        %v1434 = vld [vmem:[#allocation3 + $0x118] sm:$0xff]
        %v1435 = vld [vmem:[#allocation3 + $0x120] sm:$0xff]
        %v1436 = vld [vmem:[#allocation3 + $0x128] sm:$0xff]
        %v1437 = vld [vmem:[#allocation3 + $0x130] sm:$0xff]
        %v1438 = vld [vmem:[#allocation3 + $0x138] sm:$0xff]
        %v1439 = vld [vmem:[#allocation3 + $0x140] sm:$0xff]
        %v1440 = vld [vmem:[#allocation3 + $0x148] sm:$0xff]
        %v1441 = vld [vmem:[#allocation3 + $0x150] sm:$0xff]
        %v1442 = vld [vmem:[#allocation3 + $0x158] sm:$0xff]
        %v1443 = vld [vmem:[#allocation3 + $0x160] sm:$0xff]
        %v1444 = vld [vmem:[#allocation3 + $0x168] sm:$0xff]
        %v1445 = vld [vmem:[#allocation3 + $0x170] sm:$0xff]
        %v1446 = vld [vmem:[#allocation3 + $0x178] sm:$0xff]
        %v1447 = vld [vmem:[#allocation3 + $0x180] sm:$0xff]
        %v1448 = vld [vmem:[#allocation3 + $0x188] sm:$0xff]
        %v1449 = vld [vmem:[#allocation3 + $0x190] sm:$0xff]
        %v1450 = vld [vmem:[#allocation3 + $0x198] sm:$0xff]
        %v1451 = vld [vmem:[#allocation3 + $0x1a0] sm:$0xff]
        %v1452 = vld [vmem:[#allocation3 + $0x1a8] sm:$0xff]
        %v1453 = vld [vmem:[#allocation3 + $0x1b0] sm:$0xff]
        %v1454 = vld [vmem:[#allocation3 + $0x1b8] sm:$0xff]
        %v1455 = vld [vmem:[#allocation3 + $0x1c0] sm:$0xff]
        %v1456 = vld [vmem:[#allocation3 + $0x1c8] sm:$0xff]
        %v1457 = vld [vmem:[#allocation3 + $0x1d0] sm:$0xff]
        %v1458 = vld [vmem:[#allocation3 + $0x1d8] sm:$0xff]
        %v1459 = vld [vmem:[#allocation3 + $0x1e0] sm:$0xff]
        %v1460 = vld [vmem:[#allocation3 + $0x1e8] sm:$0xff]
        %v1461 = vld [vmem:[#allocation3 + $0x1f0] sm:$0xff]
        %v1462 = vld [vmem:[#allocation3 + $0x1f8] sm:$0xff]
        %v1463 = vld [vmem:[#allocation3 + $0x200] sm:$0xff]
        %v1464 = vld [vmem:[#allocation3 + $0x208] sm:$0xff]
        %v1465 = vld [vmem:[#allocation3 + $0x210] sm:$0xff]
        %v1466 = vld [vmem:[#allocation3 + $0x218] sm:$0xff]
        %v1467 = vld [vmem:[#allocation3 + $0x220] sm:$0xff]
        %v1468 = vld [vmem:[#allocation3 + $0x228] sm:$0xff]
        %v1469 = vld [vmem:[#allocation3 + $0x230] sm:$0xff]
        %v1470 = vld [vmem:[#allocation3 + $0x238] sm:$0xff]
        %v1471 = vld [vmem:[#allocation3 + $0x240] sm:$0xff]
        %v1472 = vld [vmem:[#allocation3 + $0x248] sm:$0xff]
        %v1473 = vld [vmem:[#allocation3 + $0x250] sm:$0xff]
        %v1474 = vld [vmem:[#allocation3 + $0x258] sm:$0xff]
        %v1475 = vld [vmem:[#allocation3 + $0x260] sm:$0xff]
        %v1476 = vld [vmem:[#allocation3 + $0x268] sm:$0xff]
        %v1477 = vld [vmem:[#allocation3 + $0x270] sm:$0xff]
        %v1478 = vld [vmem:[#allocation3 + $0x278] sm:$0xff]
        %v1479 = vld [vmem:[%s5] sm:$0xff]
        %v1480 = vld [vmem:[%s5 + $0x8] sm:$0xff]
        %v1481 = vld [vmem:[%s5 + $0x10] sm:$0xff]
        %v1482 = vld [vmem:[%s5 + $0x18] sm:$0xff]
        %v1483 = vld [vmem:[%s5 + $0x20] sm:$0xff]
        %v1484 = vld [vmem:[%s5 + $0x28] sm:$0xff]
        %v1485 = vld [vmem:[%s5 + $0x30] sm:$0xff]
        %v1486 = vld [vmem:[%s5 + $0x38] sm:$0xff]
        %v1487 = vld [vmem:[%s5 + $0x40] sm:$0xff]
        %v1488 = vld [vmem:[%s5 + $0x48] sm:$0xff]
        %v1489 = vld [vmem:[%s5 + $0x50] sm:$0xff]
        %v1490 = vld [vmem:[%s5 + $0x58] sm:$0xff]
        %v1491 = vld [vmem:[%s5 + $0x60] sm:$0xff]
        %v1492 = vld [vmem:[%s5 + $0x68] sm:$0xff]
        %v1493 = vld [vmem:[%s5 + $0x70] sm:$0xff]
        %v1494 = vld [vmem:[%s5 + $0x78] sm:$0xff]
        %v1495 = vld [vmem:[%s5 + $0x80] sm:$0xff]
        %v1496 = vld [vmem:[%s5 + $0x88] sm:$0xff]
        %v1497 = vld [vmem:[%s5 + $0x90] sm:$0xff]
        %v1498 = vld [vmem:[%s5 + $0x98] sm:$0xff]
        %v1499 = vld [vmem:[%s5 + $0xa0] sm:$0xff]
        %v1500 = vld [vmem:[%s5 + $0xa8] sm:$0xff]
        %v1501 = vld [vmem:[%s5 + $0xb0] sm:$0xff]
        %v1502 = vld [vmem:[%s5 + $0xb8] sm:$0xff]
        %v1503 = vld [vmem:[%s5 + $0xc0] sm:$0xff]
        %v1504 = vld [vmem:[%s5 + $0xc8] sm:$0xff]
        %v1505 = vld [vmem:[%s5 + $0xd0] sm:$0xff]
        %v1506 = vld [vmem:[%s5 + $0xd8] sm:$0xff]
        %v1507 = vld [vmem:[%s5 + $0xe0] sm:$0xff]
        %v1508 = vld [vmem:[%s5 + $0xe8] sm:$0xff]
        %v1509 = vld [vmem:[%s5 + $0xf0] sm:$0xff]
        %v1510 = vld [vmem:[%s5 + $0xf8] sm:$0xff]
        %v1511 = vld [vmem:[%s5 + $0x100] sm:$0xff]
        %v1512 = vld [vmem:[%s5 + $0x108] sm:$0xff]
        %v1513 = vld [vmem:[%s5 + $0x110] sm:$0xff]
        %v1514 = vld [vmem:[%s5 + $0x118] sm:$0xff]
        %v1515 = vld [vmem:[%s5 + $0x120] sm:$0xff]
        %v1516 = vld [vmem:[%s5 + $0x128] sm:$0xff]
        %v1517 = vld [vmem:[%s5 + $0x130] sm:$0xff]
        %v1518 = vld [vmem:[%s5 + $0x138] sm:$0xff]
        %v1519 = vld [vmem:[%s5 + $0x140] sm:$0xff]
        %v1520 = vld [vmem:[%s5 + $0x148] sm:$0xff]
        %v1521 = vld [vmem:[%s5 + $0x150] sm:$0xff]
        %v1522 = vld [vmem:[%s5 + $0x158] sm:$0xff]
        %v1523 = vld [vmem:[%s5 + $0x160] sm:$0xff]
        %v1524 = vld [vmem:[%s5 + $0x168] sm:$0xff]
        %v1525 = vld [vmem:[%s5 + $0x170] sm:$0xff]
        %v1526 = vld [vmem:[%s5 + $0x178] sm:$0xff]
        %v1527 = vld [vmem:[%s5 + $0x180] sm:$0xff]
        %v1528 = vld [vmem:[%s5 + $0x188] sm:$0xff]
        %v1529 = vld [vmem:[%s5 + $0x190] sm:$0xff]
        %v1530 = vld [vmem:[%s5 + $0x198] sm:$0xff]
        %v1531 = vld [vmem:[%s5 + $0x1a0] sm:$0xff]
        %v1532 = vld [vmem:[%s5 + $0x1a8] sm:$0xff]
        %v1533 = vld [vmem:[%s5 + $0x1b0] sm:$0xff]
        %v1534 = vld [vmem:[%s5 + $0x1b8] sm:$0xff]
        %v1535 = vld [vmem:[%s5 + $0x1c0] sm:$0xff]
        %v1536 = vld [vmem:[%s5 + $0x1c8] sm:$0xff]
        %v1537 = vld [vmem:[%s5 + $0x1d0] sm:$0xff]
        %v1538 = vld [vmem:[%s5 + $0x1d8] sm:$0xff]
        %v1539 = vld [vmem:[%s5 + $0x1e0] sm:$0xff]
        %v1540 = vld [vmem:[%s5 + $0x1e8] sm:$0xff]
        %v1541 = vld [vmem:[%s5 + $0x1f0] sm:$0xff]
        %v1542 = vld [vmem:[%s5 + $0x1f8] sm:$0xff]
        %v1543 = vld [vmem:[%s5 + $0x200] sm:$0xff]
        %v1544 = vld [vmem:[%s5 + $0x208] sm:$0xff]
        %v1545 = vld [vmem:[%s5 + $0x210] sm:$0xff]
        %v1546 = vld [vmem:[%s5 + $0x218] sm:$0xff]
        %v1547 = vld [vmem:[%s5 + $0x220] sm:$0xff]
        %v1548 = vld [vmem:[%s5 + $0x228] sm:$0xff]
        %v1549 = vld [vmem:[%s5 + $0x230] sm:$0xff]
        %v1550 = vld [vmem:[%s5 + $0x238] sm:$0xff]
        %v1551 = vld [vmem:[%s6] sm:$0x1]
        %v1553 = vlaneseq
        %v1554 = vshrl.u32 %v1553, 7
        %v1555 = vsub.s32 0, %v1554
        %v1556 = vrot.slane %v1551, %v1555
        %v1559 = vsel %vm831, %v1403, 0
        %v1562 = vsel %vm831, %v1408, 0
        %v1565 = vsel %vm831, %v1413, 0
        %v1568 = vsel %vm831, %v1418, 0
        %v1571 = vsel %vm831, %v1423, 0
        %v1574 = vsel %vm831, %v1428, 0
        %v1577 = vsel %vm831, %v1433, 0
        %v1580 = vsel %vm831, %v1438, 0
        %v1583 = vsel %vm831, %v1443, 0
        %v1586 = vsel %vm831, %v1448, 0
        %v1589 = vsel %vm831, %v1453, 0
        %v1592 = vsel %vm831, %v1458, 0
        %v1595 = vsel %vm831, %v1463, 0
        %v1598 = vsel %vm831, %v1468, 0
        %v1601 = vsel %vm831, %v1473, 0
        %v1604 = vsel %vm831, %v1478, 0
        %1606 = vmatprep.subr.mxu0 0.0
        %1607 = vmatpush1.msra.mxu0 %v1479
        %1608 = vmatprep.subr.mxu0 0.0
        %1609 = vmatpush1.msra.mxu0 %v1480
        %1610 = vmatprep.subr.mxu0 0.0
        %1611 = vmatpush1.msra.mxu0 %v1481
        %1612 = vmatprep.subr.mxu0 0.0
        %1613 = vmatpush1.msra.mxu0 %v1482
        %1614 = vmatprep.subr.mxu0 0.0
        %1615 = vmatpush1.msra.mxu0 %v1483
        %1616 = vmatprep.subr.mxu0 0.0
        %1617 = vmatpush1.msra.mxu0 %v1484
        %1618 = vmatprep.subr.mxu0 0.0
        %1619 = vmatpush1.msra.mxu0 %v1485
        %1620 = vmatprep.subr.mxu0 0.0
        %1621 = vmatpush1.msra.mxu0 %v1486
        %1622 = vmatprep.subr.mxu0 0.0
        %1623 = vmatpush1.msra.mxu0 %v1487
        %1624 = vmatprep.subr.mxu0 0.0
        %1625 = vmatpush1.msra.mxu0 %v1488
        %1626 = vmatprep.subr.mxu0 0.0
        %1627 = vmatpush1.msra.mxu0 %v1489
        %1628 = vmatprep.subr.mxu0 0.0
        %1629 = vmatpush1.msra.mxu0 %v1490
        %1630 = vmatprep.subr.mxu0 0.0
        %1631 = vmatpush1.msra.mxu0 %v1491
        %1632 = vmatprep.subr.mxu0 0.0
        %1633 = vmatpush1.msra.mxu0 %v1492
        %1634 = vmatprep.subr.mxu0 0.0
        %1635 = vmatpush1.msra.mxu0 %v1493
        %1636 = vmatprep.subr.mxu0 0.0
        %1637 = vmatpush1.msra.mxu0 %v1494
        %1638 = vmatprep.subr.mxu0 0.0
        %1639 = vmatpush1.msra.mxu0 %v1495
        %1640 = vmatprep.subr.mxu0 0.0
        %1641 = vmatpush1.msra.mxu0 %v1496
        %1642 = vmatprep.subr.mxu0 0.0
        %1643 = vmatpush1.msra.mxu0 %v1497
        %1644 = vmatprep.subr.mxu0 0.0
        %1645 = vmatpush1.msra.mxu0 %v1498
        %1646 = vmatprep.subr.mxu0 0.0
        %1647 = vmatpush1.msra.mxu0 %v1499
        %1648 = vmatprep.subr.mxu0 0.0
        %1649 = vmatpush1.msra.mxu0 %v1500
        %1650 = vmatprep.subr.mxu0 0.0
        %1651 = vmatpush1.msra.mxu0 %v1501
        %1652 = vmatprep.subr.mxu0 0.0
        %1653 = vmatpush1.msra.mxu0 %v1502
        %1654 = vmatprep.subr.mxu0 0.0
        %1655 = vmatpush1.msra.mxu0 %v1503
        %1656 = vmatprep.subr.mxu0 0.0
        %1657 = vmatpush1.msra.mxu0 %v1504
        %1658 = vmatprep.subr.mxu0 0.0
        %1659 = vmatpush1.msra.mxu0 %v1505
        %1660 = vmatprep.subr.mxu0 0.0
        %1661 = vmatpush1.msra.mxu0 %v1506
        %1662 = vmatprep.subr.mxu0 0.0
        %1663 = vmatpush1.msra.mxu0 %v1507
        %1664 = vmatprep.subr.mxu0 0.0
        %1665 = vmatpush1.msra.mxu0 %v1508
        %1666 = vmatprep.subr.mxu0 0.0
        %1667 = vmatpush1.msra.mxu0 %v1509
        %1668 = vmatprep.subr.mxu0 0.0
        %1669 = vmatpush1.msra.mxu0 %v1510
        %1670 = vmatprep.mubr.f32.mxu0 %v1400
        %1671 = vmatmul.mubr.f32.gmra.mrb[0].mxu0 %v1399
        %v1672 = vpop.f32.mrb[0].mxu0
        %v1673 = vadd.f32 %v1556, %v1672
        %v1674 = vpop.f32.mrb[0].mxu0
        %1675 = vmatprep.mubr.f32.mxu0 %v1405
        %1676 = vmatmul.mubr.f32.gmra.mrb[0].mxu0 %v1404
        %v1677 = vpop.f32.mrb[0].mxu0
        %v1678 = vadd.f32 %v1556, %v1677
        %v1679 = vpop.f32.mrb[0].mxu0
        %1680 = vmatprep.mubr.f32.mxu0 %v1410
        %1681 = vmatmul.mubr.f32.gmra.mrb[0].mxu0 %v1409
        %v1682 = vpop.f32.mrb[0].mxu0
        %v1683 = vadd.f32 %v1556, %v1682
        %v1684 = vpop.f32.mrb[0].mxu0
        %1685 = vmatprep.mubr.f32.mxu0 %v1415
        %1686 = vmatmul.mubr.f32.gmra.mrb[0].mxu0 %v1414
        %v1687 = vpop.f32.mrb[0].mxu0
        %v1688 = vadd.f32 %v1556, %v1687
        %v1689 = vpop.f32.mrb[0].mxu0
        %1690 = vmatprep.mubr.f32.mxu0 %v1420
        %1691 = vmatmul.mubr.f32.gmra.mrb[0].mxu0 %v1419
        %v1692 = vpop.f32.mrb[0].mxu0
        %v1693 = vadd.f32 %v1556, %v1692
        %v1694 = vpop.f32.mrb[0].mxu0
        %1695 = vmatprep.mubr.f32.mxu0 %v1425
        %1696 = vmatmul.mubr.f32.gmra.mrb[0].mxu0 %v1424
        %v1697 = vpop.f32.mrb[0].mxu0
        %v1698 = vadd.f32 %v1556, %v1697
        %v1699 = vpop.f32.mrb[0].mxu0
        %1700 = vmatprep.mubr.f32.mxu0 %v1430
        %1701 = vmatmul.mubr.f32.gmra.mrb[0].mxu0 %v1429
        %v1702 = vpop.f32.mrb[0].mxu0
        %v1703 = vadd.f32 %v1556, %v1702
        %v1704 = vpop.f32.mrb[0].mxu0
        %1705 = vmatprep.mubr.f32.mxu0 %v1435
        %1706 = vmatmul.mubr.f32.gmra.mrb[0].mxu0 %v1434
        %v1707 = vpop.f32.mrb[0].mxu0
        %v1708 = vadd.f32 %v1556, %v1707
        %v1709 = vpop.f32.mrb[0].mxu0
        %1710 = vmatprep.mubr.f32.mxu0 %v1440
        %1711 = vmatmul.mubr.f32.gmra.mrb[0].mxu0 %v1439
        %v1712 = vpop.f32.mrb[0].mxu0
        %v1713 = vadd.f32 %v1556, %v1712
        %v1714 = vpop.f32.mrb[0].mxu0
        %1715 = vmatprep.mubr.f32.mxu0 %v1445
        %1716 = vmatmul.mubr.f32.gmra.mrb[0].mxu0 %v1444
        %v1717 = vpop.f32.mrb[0].mxu0
        %v1718 = vadd.f32 %v1556, %v1717
        %v1719 = vpop.f32.mrb[0].mxu0
        %1720 = vmatprep.mubr.f32.mxu0 %v1450
        %1721 = vmatmul.mubr.f32.gmra.mrb[0].mxu0 %v1449
        %v1722 = vpop.f32.mrb[0].mxu0
        %v1723 = vadd.f32 %v1556, %v1722
        %v1724 = vpop.f32.mrb[0].mxu0
        %1725 = vmatprep.mubr.f32.mxu0 %v1455
        %1726 = vmatmul.mubr.f32.gmra.mrb[0].mxu0 %v1454
        %v1727 = vpop.f32.mrb[0].mxu0
        %v1728 = vadd.f32 %v1556, %v1727
        %v1729 = vpop.f32.mrb[0].mxu0
        %1730 = vmatprep.mubr.f32.mxu0 %v1460
        %1731 = vmatmul.mubr.f32.gmra.mrb[0].mxu0 %v1459
        %v1732 = vpop.f32.mrb[0].mxu0
        %v1733 = vadd.f32 %v1556, %v1732
        %v1734 = vpop.f32.mrb[0].mxu0
        %1735 = vmatprep.mubr.f32.mxu0 %v1465
        %1736 = vmatmul.mubr.f32.gmra.mrb[0].mxu0 %v1464
        %v1737 = vpop.f32.mrb[0].mxu0
        %v1738 = vadd.f32 %v1556, %v1737
        %v1739 = vpop.f32.mrb[0].mxu0
        %1740 = vmatprep.mubr.f32.mxu0 %v1470
        %1741 = vmatmul.mubr.f32.gmra.mrb[0].mxu0 %v1469
        %v1742 = vpop.f32.mrb[0].mxu0
        %v1743 = vadd.f32 %v1556, %v1742
        %v1744 = vpop.f32.mrb[0].mxu0
        %1745 = vmatprep.mubr.f32.mxu0 %v1475
        %1746 = vmatmul.mubr.f32.gmra.mrb[0].mxu0 %v1474
        %v1747 = vpop.f32.mrb[0].mxu0
        %v1748 = vadd.f32 %v1556, %v1747
        %v1749 = vpop.f32.mrb[0].mxu0
        %1750 = vdwg.mxu0
        %1751 = vmatprep.subr.mxu0 0.0
        %1752 = vmatpush1.msra.mxu0 %v1511
        %1753 = vmatprep.subr.mxu0 0.0
        %1754 = vmatpush1.msra.mxu0 %v1512
        %1755 = vmatprep.subr.mxu0 0.0
        %1756 = vmatpush1.msra.mxu0 %v1513
        %1757 = vmatprep.subr.mxu0 0.0
        %1758 = vmatpush1.msra.mxu0 %v1514
        %1759 = vmatprep.subr.mxu0 0.0
        %1760 = vmatpush1.msra.mxu0 %v1515
        %1761 = vmatprep.subr.mxu0 0.0
        %1762 = vmatpush1.msra.mxu0 %v1516
        %1763 = vmatprep.subr.mxu0 0.0
        %1764 = vmatpush1.msra.mxu0 %v1517
        %1765 = vmatprep.subr.mxu0 0.0
        %1766 = vmatpush1.msra.mxu0 %v1518
        %1767 = vmatprep.subr.mxu0 0.0
        %1768 = vmatpush1.msra.mxu0 %v1519
        %1769 = vmatprep.subr.mxu0 0.0
        %1770 = vmatpush1.msra.mxu0 %v1520
        %1771 = vmatprep.subr.mxu0 0.0
        %1772 = vmatpush1.msra.mxu0 %v1521
        %1773 = vmatprep.subr.mxu0 0.0
        %1774 = vmatpush1.msra.mxu0 %v1522
        %1775 = vmatprep.subr.mxu0 0.0
        %1776 = vmatpush1.msra.mxu0 %v1523
        %1777 = vmatprep.subr.mxu0 0.0
        %1778 = vmatpush1.msra.mxu0 %v1524
        %1779 = vmatprep.subr.mxu0 0.0
        %1780 = vmatpush1.msra.mxu0 %v1525
        %1781 = vmatprep.subr.mxu0 0.0
        %1782 = vmatpush1.msra.mxu0 %v1526
        %1783 = vmatprep.subr.mxu0 0.0
        %1784 = vmatpush1.msra.mxu0 %v1527
        %1785 = vmatprep.subr.mxu0 0.0
        %1786 = vmatpush1.msra.mxu0 %v1528
        %1787 = vmatprep.subr.mxu0 0.0
        %1788 = vmatpush1.msra.mxu0 %v1529
        %1789 = vmatprep.subr.mxu0 0.0
        %1790 = vmatpush1.msra.mxu0 %v1530
        %1791 = vmatprep.subr.mxu0 0.0
        %1792 = vmatpush1.msra.mxu0 %v1531
        %1793 = vmatprep.subr.mxu0 0.0
        %1794 = vmatpush1.msra.mxu0 %v1532
        %1795 = vmatprep.subr.mxu0 0.0
        %1796 = vmatpush1.msra.mxu0 %v1533
        %1797 = vmatprep.subr.mxu0 0.0
        %1798 = vmatpush1.msra.mxu0 %v1534
        %1799 = vmatprep.subr.mxu0 0.0
        %1800 = vmatpush1.msra.mxu0 %v1535
        %1801 = vmatprep.subr.mxu0 0.0
        %1802 = vmatpush1.msra.mxu0 %v1536
        %1803 = vmatprep.subr.mxu0 0.0
        %1804 = vmatpush1.msra.mxu0 %v1537
        %1805 = vmatprep.subr.mxu0 0.0
        %1806 = vmatpush1.msra.mxu0 %v1538
        %1807 = vmatprep.subr.mxu0 0.0
        %1808 = vmatpush1.msra.mxu0 %v1539
        %1809 = vmatprep.subr.mxu0 0.0
        %1810 = vmatpush1.msra.mxu0 %v1540
        %1811 = vmatprep.subr.mxu0 0.0
        %1812 = vmatpush1.msra.mxu0 %v1541
        %1813 = vmatprep.subr.mxu0 0.0
        %1814 = vmatpush1.msra.mxu0 %v1542
        %1815 = vmatprep.mubr.f32.mxu0 %v1402
        %1816 = vmatmul.mubr.f32.gmra.mrb[0].mxu0 %v1401
        %v1817 = vpop.f32.mrb[0].mxu0
        %v1818 = vadd.f32 %v1673, %v1817
        %v1819 = vpop.f32.mrb[0].mxu0
        %1820 = vmatprep.mubr.f32.mxu0 %v1407
        %1821 = vmatmul.mubr.f32.gmra.mrb[0].mxu0 %v1406
        %v1822 = vpop.f32.mrb[0].mxu0
        %v1823 = vadd.f32 %v1678, %v1822
        %v1824 = vpop.f32.mrb[0].mxu0
        %1825 = vmatprep.mubr.f32.mxu0 %v1412
        %1826 = vmatmul.mubr.f32.gmra.mrb[0].mxu0 %v1411
        %v1827 = vpop.f32.mrb[0].mxu0
        %v1828 = vadd.f32 %v1683, %v1827
        %v1829 = vpop.f32.mrb[0].mxu0
        %1830 = vmatprep.mubr.f32.mxu0 %v1417
        %1831 = vmatmul.mubr.f32.gmra.mrb[0].mxu0 %v1416
        %v1832 = vpop.f32.mrb[0].mxu0
        %v1833 = vadd.f32 %v1688, %v1832
        %v1834 = vpop.f32.mrb[0].mxu0
        %1835 = vmatprep.mubr.f32.mxu0 %v1422
        %1836 = vmatmul.mubr.f32.gmra.mrb[0].mxu0 %v1421
        %v1837 = vpop.f32.mrb[0].mxu0
        %v1838 = vadd.f32 %v1693, %v1837
        %v1839 = vpop.f32.mrb[0].mxu0
        %1840 = vmatprep.mubr.f32.mxu0 %v1427
        %1841 = vmatmul.mubr.f32.gmra.mrb[0].mxu0 %v1426
        %v1842 = vpop.f32.mrb[0].mxu0
        %v1843 = vadd.f32 %v1698, %v1842
        %v1844 = vpop.f32.mrb[0].mxu0
        %1845 = vmatprep.mubr.f32.mxu0 %v1432
        %1846 = vmatmul.mubr.f32.gmra.mrb[0].mxu0 %v1431
        %v1847 = vpop.f32.mrb[0].mxu0
        %v1848 = vadd.f32 %v1703, %v1847
        %v1849 = vpop.f32.mrb[0].mxu0
        %1850 = vmatprep.mubr.f32.mxu0 %v1437
        %1851 = vmatmul.mubr.f32.gmra.mrb[0].mxu0 %v1436
        %v1852 = vpop.f32.mrb[0].mxu0
        %v1853 = vadd.f32 %v1708, %v1852
        %v1854 = vpop.f32.mrb[0].mxu0
        %1855 = vmatprep.mubr.f32.mxu0 %v1442
        %1856 = vmatmul.mubr.f32.gmra.mrb[0].mxu0 %v1441
        %v1857 = vpop.f32.mrb[0].mxu0
        %v1858 = vadd.f32 %v1713, %v1857
        %v1859 = vpop.f32.mrb[0].mxu0
        %1860 = vmatprep.mubr.f32.mxu0 %v1447
        %1861 = vmatmul.mubr.f32.gmra.mrb[0].mxu0 %v1446
        %v1862 = vpop.f32.mrb[0].mxu0
        %v1863 = vadd.f32 %v1718, %v1862
        %v1864 = vpop.f32.mrb[0].mxu0
        %1865 = vmatprep.mubr.f32.mxu0 %v1452
        %1866 = vmatmul.mubr.f32.gmra.mrb[0].mxu0 %v1451
        %v1867 = vpop.f32.mrb[0].mxu0
        %v1868 = vadd.f32 %v1723, %v1867
        %v1869 = vpop.f32.mrb[0].mxu0
        %1870 = vmatprep.mubr.f32.mxu0 %v1457
        %1871 = vmatmul.mubr.f32.gmra.mrb[0].mxu0 %v1456
        %v1872 = vpop.f32.mrb[0].mxu0
        %v1873 = vadd.f32 %v1728, %v1872
        %v1874 = vpop.f32.mrb[0].mxu0
        %1875 = vmatprep.mubr.f32.mxu0 %v1462
        %1876 = vmatmul.mubr.f32.gmra.mrb[0].mxu0 %v1461
        %v1877 = vpop.f32.mrb[0].mxu0
        %v1878 = vadd.f32 %v1733, %v1877
        %v1879 = vpop.f32.mrb[0].mxu0
        %1880 = vmatprep.mubr.f32.mxu0 %v1467
        %1881 = vmatmul.mubr.f32.gmra.mrb[0].mxu0 %v1466
        %v1882 = vpop.f32.mrb[0].mxu0
        %v1883 = vadd.f32 %v1738, %v1882
        %v1884 = vpop.f32.mrb[0].mxu0
        %1885 = vmatprep.mubr.f32.mxu0 %v1472
        %1886 = vmatmul.mubr.f32.gmra.mrb[0].mxu0 %v1471
        %v1887 = vpop.f32.mrb[0].mxu0
        %v1888 = vadd.f32 %v1743, %v1887
        %v1889 = vpop.f32.mrb[0].mxu0
        %1890 = vmatprep.mubr.f32.mxu0 %v1477
        %1891 = vmatmul.mubr.f32.gmra.mrb[0].mxu0 %v1476
        %v1892 = vpop.f32.mrb[0].mxu0
        %v1893 = vadd.f32 %v1748, %v1892
        %v1894 = vpop.f32.mrb[0].mxu0
        %1895 = vdwg.mxu0
        %1896 = vmatprep.subr.mxu0 0.0
        %1897 = vmatpush1.msra.mxu0 %v1543
        %1898 = vmatprep.subr.mxu0 0.0
        %1899 = vmatpush1.msra.mxu0 %v1544
        %1900 = vmatprep.subr.mxu0 0.0
        %1901 = vmatpush1.msra.mxu0 %v1545
        %1902 = vmatprep.subr.mxu0 0.0
        %1903 = vmatpush1.msra.mxu0 %v1546
        %1904 = vmatprep.subr.mxu0 0.0
        %1905 = vmatpush1.msra.mxu0 %v1547
        %1906 = vmatprep.subr.mxu0 0.0
        %1907 = vmatpush1.msra.mxu0 %v1548
        %1908 = vmatprep.subr.mxu0 0.0
        %1909 = vmatpush1.msra.mxu0 %v1549
        %1910 = vmatprep.subr.mxu0 0.0
        %1911 = vmatpush1.msra.mxu0 %v1550
        %1912 = vmatprep.subr.mxu0 0.0
        %1913 = vmatpush1.msra.mxu0 0.0
        %1914 = vmatprep.subr.mxu0 0.0
        %1915 = vmatpush1.msra.mxu0 0.0
        %1916 = vmatprep.subr.mxu0 0.0
        %1917 = vmatpush1.msra.mxu0 0.0
        %1918 = vmatprep.subr.mxu0 0.0
        %1919 = vmatpush1.msra.mxu0 0.0
        %1920 = vmatprep.subr.mxu0 0.0
        %1921 = vmatpush1.msra.mxu0 0.0
        %1922 = vmatprep.subr.mxu0 0.0
        %1923 = vmatpush1.msra.mxu0 0.0
        %1924 = vmatprep.subr.mxu0 0.0
        %1925 = vmatpush1.msra.mxu0 0.0
        %1926 = vmatprep.subr.mxu0 0.0
        %1927 = vmatpush1.msra.mxu0 0.0
        %1928 = vmatprep.subr.mxu0 0.0
        %1929 = vmatpush1.msra.mxu0 0.0
        %1930 = vmatprep.subr.mxu0 0.0
        %1931 = vmatpush1.msra.mxu0 0.0
        %1932 = vmatprep.subr.mxu0 0.0
        %1933 = vmatpush1.msra.mxu0 0.0
        %1934 = vmatprep.subr.mxu0 0.0
        %1935 = vmatpush1.msra.mxu0 0.0
        %1936 = vmatprep.subr.mxu0 0.0
        %1937 = vmatpush1.msra.mxu0 0.0
        %1938 = vmatprep.subr.mxu0 0.0
        %1939 = vmatpush1.msra.mxu0 0.0
        %1940 = vmatprep.subr.mxu0 0.0
        %1941 = vmatpush1.msra.mxu0 0.0
        %1942 = vmatprep.subr.mxu0 0.0
        %1943 = vmatpush1.msra.mxu0 0.0
        %1944 = vmatprep.subr.mxu0 0.0
        %1945 = vmatpush1.msra.mxu0 0.0
        %1946 = vmatprep.subr.mxu0 0.0
        %1947 = vmatpush1.msra.mxu0 0.0
        %1948 = vmatprep.subr.mxu0 0.0
        %1949 = vmatpush1.msra.mxu0 0.0
        %1950 = vmatprep.subr.mxu0 0.0
        %1951 = vmatpush1.msra.mxu0 0.0
        %1952 = vmatprep.subr.mxu0 0.0
        %1953 = vmatpush1.msra.mxu0 0.0
        %1954 = vmatprep.subr.mxu0 0.0
        %1955 = vmatpush1.msra.mxu0 0.0
        %1956 = vmatprep.subr.mxu0 0.0
        %1957 = vmatpush1.msra.mxu0 0.0
        %1958 = vmatprep.subr.mxu0 0.0
        %1959 = vmatpush1.msra.mxu0 0.0
        %1960 = vmatprep.mubr.f32.mxu0 0.0
        %1961 = vmatmul.mubr.f32.gmra.mrb[0].mxu0 %v1559
        %v1962 = vpop.f32.mrb[0].mxu0
        %v1963 = vadd.f32 %v1818, %v1962
        %v1964 = vpop.f32.mrb[0].mxu0
        %1965 = vmatprep.mubr.f32.mxu0 0.0
        %1966 = vmatmul.mubr.f32.gmra.mrb[0].mxu0 %v1562
        %v1967 = vpop.f32.mrb[0].mxu0
        %v1968 = vadd.f32 %v1823, %v1967
        %v1969 = vpop.f32.mrb[0].mxu0
        %1970 = vmatprep.mubr.f32.mxu0 0.0
        %1971 = vmatmul.mubr.f32.gmra.mrb[0].mxu0 %v1565
        %v1972 = vpop.f32.mrb[0].mxu0
        %v1973 = vadd.f32 %v1828, %v1972
        %v1974 = vpop.f32.mrb[0].mxu0
        %1975 = vmatprep.mubr.f32.mxu0 0.0
        %1976 = vmatmul.mubr.f32.gmra.mrb[0].mxu0 %v1568
        %v1977 = vpop.f32.mrb[0].mxu0
        %v1978 = vadd.f32 %v1833, %v1977
        %v1979 = vpop.f32.mrb[0].mxu0
        %1980 = vmatprep.mubr.f32.mxu0 0.0
        %1981 = vmatmul.mubr.f32.gmra.mrb[0].mxu0 %v1571
        %v1982 = vpop.f32.mrb[0].mxu0
        %v1983 = vadd.f32 %v1838, %v1982
        %v1984 = vpop.f32.mrb[0].mxu0
        %1985 = vmatprep.mubr.f32.mxu0 0.0
        %1986 = vmatmul.mubr.f32.gmra.mrb[0].mxu0 %v1574
        %v1987 = vpop.f32.mrb[0].mxu0
        %v1988 = vadd.f32 %v1843, %v1987
        %v1989 = vpop.f32.mrb[0].mxu0
        %1990 = vmatprep.mubr.f32.mxu0 0.0
        %1991 = vmatmul.mubr.f32.gmra.mrb[0].mxu0 %v1577
        %v1992 = vpop.f32.mrb[0].mxu0
        %v1993 = vadd.f32 %v1848, %v1992
        %v1994 = vpop.f32.mrb[0].mxu0
        %1995 = vmatprep.mubr.f32.mxu0 0.0
        %1996 = vmatmul.mubr.f32.gmra.mrb[0].mxu0 %v1580
        %v1997 = vpop.f32.mrb[0].mxu0
        %v1998 = vadd.f32 %v1853, %v1997
        %v1999 = vpop.f32.mrb[0].mxu0
        %2000 = vmatprep.mubr.f32.mxu0 0.0
        %2001 = vmatmul.mubr.f32.gmra.mrb[0].mxu0 %v1583
        %v2002 = vpop.f32.mrb[0].mxu0
        %v2003 = vadd.f32 %v1858, %v2002
        %v2004 = vpop.f32.mrb[0].mxu0
        %2005 = vmatprep.mubr.f32.mxu0 0.0
        %2006 = vmatmul.mubr.f32.gmra.mrb[0].mxu0 %v1586
        %v2007 = vpop.f32.mrb[0].mxu0
        %v2008 = vadd.f32 %v1863, %v2007
        %v2009 = vpop.f32.mrb[0].mxu0
        %2010 = vmatprep.mubr.f32.mxu0 0.0
        %2011 = vmatmul.mubr.f32.gmra.mrb[0].mxu0 %v1589
        %v2012 = vpop.f32.mrb[0].mxu0
        %v2013 = vadd.f32 %v1868, %v2012
        %v2014 = vpop.f32.mrb[0].mxu0
        %2015 = vmatprep.mubr.f32.mxu0 0.0
        %2016 = vmatmul.mubr.f32.gmra.mrb[0].mxu0 %v1592
        %v2017 = vpop.f32.mrb[0].mxu0
        %v2018 = vadd.f32 %v1873, %v2017
        %v2019 = vpop.f32.mrb[0].mxu0
        %2020 = vmatprep.mubr.f32.mxu0 0.0
        %2021 = vmatmul.mubr.f32.gmra.mrb[0].mxu0 %v1595
        %v2022 = vpop.f32.mrb[0].mxu0
        %v2023 = vadd.f32 %v1878, %v2022
        %v2024 = vpop.f32.mrb[0].mxu0
        %2025 = vmatprep.mubr.f32.mxu0 0.0
        %2026 = vmatmul.mubr.f32.gmra.mrb[0].mxu0 %v1598
        %v2027 = vpop.f32.mrb[0].mxu0
        %v2028 = vadd.f32 %v1883, %v2027
        %v2029 = vpop.f32.mrb[0].mxu0
        %2030 = vmatprep.mubr.f32.mxu0 0.0
        %2031 = vmatmul.mubr.f32.gmra.mrb[0].mxu0 %v1601
        %v2032 = vpop.f32.mrb[0].mxu0
        %v2033 = vadd.f32 %v1888, %v2032
        %v2034 = vpop.f32.mrb[0].mxu0
        %2035 = vmatprep.mubr.f32.mxu0 0.0
        %2036 = vmatmul.mubr.f32.gmra.mrb[0].mxu0 %v1604
        %v2037 = vpop.f32.mrb[0].mxu0
        %v2038 = vadd.f32 %v1893, %v2037
        %v2039 = vpop.f32.mrb[0].mxu0
        %2040 = vdwg.mxu0
        %v2041 = vld [vmem:[%s580] sm:$0xff]
        %v2042 = vld [vmem:[%s580 + $0x8] sm:$0xff]
        %v2043 = vld [vmem:[%s580 + $0x10] sm:$0xff]
        %v2044 = vld [vmem:[%s580 + $0x18] sm:$0xff]
        %v2045 = vld [vmem:[%s580 + $0x20] sm:$0xff]
        %v2046 = vld [vmem:[%s580 + $0x28] sm:$0xff]
        %v2047 = vld [vmem:[%s580 + $0x30] sm:$0xff]
        %v2048 = vld [vmem:[%s580 + $0x38] sm:$0xff]
        %v2049 = vld [vmem:[%s580 + $0x40] sm:$0xff]
        %v2050 = vld [vmem:[%s580 + $0x48] sm:$0xff]
        %v2051 = vld [vmem:[%s580 + $0x50] sm:$0xff]
        %v2052 = vld [vmem:[%s580 + $0x58] sm:$0xff]
        %v2053 = vld [vmem:[%s580 + $0x60] sm:$0xff]
        %v2054 = vld [vmem:[%s580 + $0x68] sm:$0xff]
        %v2055 = vld [vmem:[%s580 + $0x70] sm:$0xff]
        %v2056 = vld [vmem:[%s580 + $0x78] sm:$0xff]
        %v2057 = vld [vmem:[%s8] sm:$0xff]
        %v2058 = vld [vmem:[%s8 + $0x8] sm:$0xff]
        %v2059 = vld [vmem:[%s8 + $0x10] sm:$0xff]
        %v2060 = vld [vmem:[%s8 + $0x18] sm:$0xff]
        %vm2061 = vcmask 261120
        %v2063 = vsel %vm2061, %v2041, 0
        %v2066 = vsel %vm2061, %v2042, 0
        %v2069 = vsel %vm2061, %v2043, 0
        %v2072 = vsel %vm2061, %v2044, 0
        %v2075 = vsel %vm2061, %v2045, 0
        %v2078 = vsel %vm2061, %v2046, 0
        %v2081 = vsel %vm2061, %v2047, 0
        %v2084 = vsel %vm2061, %v2048, 0
        %v2087 = vsel %vm2061, %v2049, 0
        %v2090 = vsel %vm2061, %v2050, 0
        %v2093 = vsel %vm2061, %v2051, 0
        %v2096 = vsel %vm2061, %v2052, 0
        %v2099 = vsel %vm2061, %v2053, 0
        %v2102 = vsel %vm2061, %v2054, 0
        %v2105 = vsel %vm2061, %v2055, 0
        %v2108 = vsel %vm2061, %v2056, 0
        %2110 = vmatprep.subr.mxu0 0.0
        %2111 = vmatpush1.msra.mxu0 %v2057
        %2112 = vmatprep.subr.mxu0 0.0
        %2113 = vmatpush1.msra.mxu0 %v2058
        %2114 = vmatprep.subr.mxu0 0.0
        %2115 = vmatpush1.msra.mxu0 %v2059
        %2116 = vmatprep.subr.mxu0 0.0
        %2117 = vmatpush1.msra.mxu0 %v2060
        %2118 = vmatprep.subr.mxu0 0.0
        %2119 = vmatpush1.msra.mxu0 0.0
        %2120 = vmatprep.subr.mxu0 0.0
        %2121 = vmatpush1.msra.mxu0 0.0
        %2122 = vmatprep.subr.mxu0 0.0
        %2123 = vmatpush1.msra.mxu0 0.0
        %2124 = vmatprep.subr.mxu0 0.0
        %2125 = vmatpush1.msra.mxu0 0.0
        %2126 = vmatprep.subr.mxu0 0.0
        %2127 = vmatpush1.msra.mxu0 0.0
        %2128 = vmatprep.subr.mxu0 0.0
        %2129 = vmatpush1.msra.mxu0 0.0
        %2130 = vmatprep.subr.mxu0 0.0
        %2131 = vmatpush1.msra.mxu0 0.0
        %2132 = vmatprep.subr.mxu0 0.0
        %2133 = vmatpush1.msra.mxu0 0.0
        %2134 = vmatprep.subr.mxu0 0.0
        %2135 = vmatpush1.msra.mxu0 0.0
        %2136 = vmatprep.subr.mxu0 0.0
        %2137 = vmatpush1.msra.mxu0 0.0
        %2138 = vmatprep.subr.mxu0 0.0
        %2139 = vmatpush1.msra.mxu0 0.0
        %2140 = vmatprep.subr.mxu0 0.0
        %2141 = vmatpush1.msra.mxu0 0.0
        %2142 = vmatprep.subr.mxu0 0.0
        %2143 = vmatpush1.msra.mxu0 0.0
        %2144 = vmatprep.subr.mxu0 0.0
        %2145 = vmatpush1.msra.mxu0 0.0
        %2146 = vmatprep.subr.mxu0 0.0
        %2147 = vmatpush1.msra.mxu0 0.0
        %2148 = vmatprep.subr.mxu0 0.0
        %2149 = vmatpush1.msra.mxu0 0.0
        %2150 = vmatprep.subr.mxu0 0.0
        %2151 = vmatpush1.msra.mxu0 0.0
        %2152 = vmatprep.subr.mxu0 0.0
        %2153 = vmatpush1.msra.mxu0 0.0
        %2154 = vmatprep.subr.mxu0 0.0
        %2155 = vmatpush1.msra.mxu0 0.0
        %2156 = vmatprep.subr.mxu0 0.0
        %2157 = vmatpush1.msra.mxu0 0.0
        %2158 = vmatprep.subr.mxu0 0.0
        %2159 = vmatpush1.msra.mxu0 0.0
        %2160 = vmatprep.subr.mxu0 0.0
        %2161 = vmatpush1.msra.mxu0 0.0
        %2162 = vmatprep.subr.mxu0 0.0
        %2163 = vmatpush1.msra.mxu0 0.0
        %2164 = vmatprep.subr.mxu0 0.0
        %2165 = vmatpush1.msra.mxu0 0.0
        %2166 = vmatprep.subr.mxu0 0.0
        %2167 = vmatpush1.msra.mxu0 0.0
        %2168 = vmatprep.subr.mxu0 0.0
        %2169 = vmatpush1.msra.mxu0 0.0
        %2170 = vmatprep.subr.mxu0 0.0
        %2171 = vmatpush1.msra.mxu0 0.0
        %2172 = vmatprep.subr.mxu0 0.0
        %2173 = vmatpush1.msra.mxu0 0.0
        %2174 = vmatprep.mubr.f32.mxu0 0.0
        %2175 = vmatmul.mubr.f32.gmra.mrb[0].mxu0 %v2063
        %v2176 = vpop.f32.mrb[0].mxu0
        %v2177 = vadd.f32 0.0, %v2176
        %v2178 = vpop.f32.mrb[0].mxu0
        %2179 = vmatprep.mubr.f32.mxu0 0.0
        %2180 = vmatmul.mubr.f32.gmra.mrb[0].mxu0 %v2066
        %v2181 = vpop.f32.mrb[0].mxu0
        %v2182 = vadd.f32 0.0, %v2181
        %v2183 = vpop.f32.mrb[0].mxu0
        %2184 = vmatprep.mubr.f32.mxu0 0.0
        %2185 = vmatmul.mubr.f32.gmra.mrb[0].mxu0 %v2069
        %v2186 = vpop.f32.mrb[0].mxu0
        %v2187 = vadd.f32 0.0, %v2186
        %v2188 = vpop.f32.mrb[0].mxu0
        %2189 = vmatprep.mubr.f32.mxu0 0.0
        %2190 = vmatmul.mubr.f32.gmra.mrb[0].mxu0 %v2072
        %v2191 = vpop.f32.mrb[0].mxu0
        %v2192 = vadd.f32 0.0, %v2191
        %v2193 = vpop.f32.mrb[0].mxu0
        %2194 = vmatprep.mubr.f32.mxu0 0.0
        %2195 = vmatmul.mubr.f32.gmra.mrb[0].mxu0 %v2075
        %v2196 = vpop.f32.mrb[0].mxu0
        %v2197 = vadd.f32 0.0, %v2196
        %v2198 = vpop.f32.mrb[0].mxu0
        %2199 = vmatprep.mubr.f32.mxu0 0.0
        %2200 = vmatmul.mubr.f32.gmra.mrb[0].mxu0 %v2078
        %v2201 = vpop.f32.mrb[0].mxu0
        %v2202 = vadd.f32 0.0, %v2201
        %v2203 = vpop.f32.mrb[0].mxu0
        %2204 = vmatprep.mubr.f32.mxu0 0.0
        %2205 = vmatmul.mubr.f32.gmra.mrb[0].mxu0 %v2081
        %v2206 = vpop.f32.mrb[0].mxu0
        %v2207 = vadd.f32 0.0, %v2206
        %v2208 = vpop.f32.mrb[0].mxu0
        %2209 = vmatprep.mubr.f32.mxu0 0.0
        %2210 = vmatmul.mubr.f32.gmra.mrb[0].mxu0 %v2084
        %v2211 = vpop.f32.mrb[0].mxu0
        %v2212 = vadd.f32 0.0, %v2211
        %v2213 = vpop.f32.mrb[0].mxu0
        %2214 = vmatprep.mubr.f32.mxu0 0.0
        %2215 = vmatmul.mubr.f32.gmra.mrb[0].mxu0 %v2087
        %v2216 = vpop.f32.mrb[0].mxu0
        %v2217 = vadd.f32 0.0, %v2216
        %v2218 = vpop.f32.mrb[0].mxu0
        %2219 = vmatprep.mubr.f32.mxu0 0.0
        %2220 = vmatmul.mubr.f32.gmra.mrb[0].mxu0 %v2090
        %v2221 = vpop.f32.mrb[0].mxu0
        %v2222 = vadd.f32 0.0, %v2221
        %v2223 = vpop.f32.mrb[0].mxu0
        %2224 = vmatprep.mubr.f32.mxu0 0.0
        %2225 = vmatmul.mubr.f32.gmra.mrb[0].mxu0 %v2093
        %v2226 = vpop.f32.mrb[0].mxu0
        %v2227 = vadd.f32 0.0, %v2226
        %v2228 = vpop.f32.mrb[0].mxu0
        %2229 = vmatprep.mubr.f32.mxu0 0.0
        %2230 = vmatmul.mubr.f32.gmra.mrb[0].mxu0 %v2096
        %v2231 = vpop.f32.mrb[0].mxu0
        %v2232 = vadd.f32 0.0, %v2231
        %v2233 = vpop.f32.mrb[0].mxu0
        %2234 = vmatprep.mubr.f32.mxu0 0.0
        %2235 = vmatmul.mubr.f32.gmra.mrb[0].mxu0 %v2099
        %v2236 = vpop.f32.mrb[0].mxu0
        %v2237 = vadd.f32 0.0, %v2236
        %v2238 = vpop.f32.mrb[0].mxu0
        %2239 = vmatprep.mubr.f32.mxu0 0.0
        %2240 = vmatmul.mubr.f32.gmra.mrb[0].mxu0 %v2102
        %v2241 = vpop.f32.mrb[0].mxu0
        %v2242 = vadd.f32 0.0, %v2241
        %v2243 = vpop.f32.mrb[0].mxu0
        %2244 = vmatprep.mubr.f32.mxu0 0.0
        %2245 = vmatmul.mubr.f32.gmra.mrb[0].mxu0 %v2105
        %v2246 = vpop.f32.mrb[0].mxu0
        %v2247 = vadd.f32 0.0, %v2246
        %v2248 = vpop.f32.mrb[0].mxu0
        %2249 = vmatprep.mubr.f32.mxu0 0.0
        %2250 = vmatmul.mubr.f32.gmra.mrb[0].mxu0 %v2108
        %v2251 = vpop.f32.mrb[0].mxu0
        %v2252 = vadd.f32 0.0, %v2251
        %v2253 = vpop.f32.mrb[0].mxu0
        %2254 = vdwg.mxu0
        %v2255 = vadd.f32 %v1963, %v2177
        %v2256 = vadd.f32 %v1968, %v2182
        %v2257 = vadd.f32 %v1973, %v2187
        %v2258 = vadd.f32 %v1978, %v2192
        %v2259 = vadd.f32 %v1983, %v2197
        %v2260 = vadd.f32 %v1988, %v2202
        %v2261 = vadd.f32 %v1993, %v2207
        %v2262 = vadd.f32 %v1998, %v2212
        %v2263 = vadd.f32 %v2003, %v2217
        %v2264 = vadd.f32 %v2008, %v2222
        %v2265 = vadd.f32 %v2013, %v2227
        %v2266 = vadd.f32 %v2018, %v2232
        %v2267 = vadd.f32 %v2023, %v2237
        %v2268 = vadd.f32 %v2028, %v2242
        %v2269 = vadd.f32 %v2033, %v2247
        %v2270 = vadd.f32 %v2038, %v2252
        %v2271 = vld [vmem:[%s9] sm:$0x1]
        %v2273 = vlaneseq
        %v2274 = vshrl.u32 %v2273, 7
        %v2275 = vsub.s32 0, %v2274
        %v2276 = vrot.slane %v2271, %v2275
        %v2278 = vadd.f32 %v2255, %v2276
        %v2279 = vadd.f32 %v2256, %v2276
        %v2280 = vadd.f32 %v2257, %v2276
        %v2281 = vadd.f32 %v2258, %v2276
        %v2282 = vadd.f32 %v2259, %v2276
        %v2283 = vadd.f32 %v2260, %v2276
        %v2284 = vadd.f32 %v2261, %v2276
        %v2285 = vadd.f32 %v2262, %v2276
        %v2286 = vadd.f32 %v2263, %v2276
        %v2287 = vadd.f32 %v2264, %v2276
        %v2288 = vadd.f32 %v2265, %v2276
        %v2289 = vadd.f32 %v2266, %v2276
        %v2290 = vadd.f32 %v2267, %v2276
        %v2291 = vadd.f32 %v2268, %v2276
        %v2292 = vadd.f32 %v2269, %v2276
        %v2293 = vadd.f32 %v2270, %v2276
        %2294 = vst.msk [vmem:[%s519] sm:$0xff] %vm831, %v2278
        %2295 = vst.msk [vmem:[%s519 + $0x8] sm:$0xff] %vm831, %v2279
        %2296 = vst.msk [vmem:[%s519 + $0x10] sm:$0xff] %vm831, %v2280
        %2297 = vst.msk [vmem:[%s519 + $0x18] sm:$0xff] %vm831, %v2281
        %2298 = vst.msk [vmem:[%s519 + $0x20] sm:$0xff] %vm831, %v2282
        %2299 = vst.msk [vmem:[%s519 + $0x28] sm:$0xff] %vm831, %v2283
        %2300 = vst.msk [vmem:[%s519 + $0x30] sm:$0xff] %vm831, %v2284
        %2301 = vst.msk [vmem:[%s519 + $0x38] sm:$0xff] %vm831, %v2285
        %2302 = vst.msk [vmem:[%s519 + $0x40] sm:$0xff] %vm831, %v2286
        %2303 = vst.msk [vmem:[%s519 + $0x48] sm:$0xff] %vm831, %v2287
        %2304 = vst.msk [vmem:[%s519 + $0x50] sm:$0xff] %vm831, %v2288
        %2305 = vst.msk [vmem:[%s519 + $0x58] sm:$0xff] %vm831, %v2289
        %2306 = vst.msk [vmem:[%s519 + $0x60] sm:$0xff] %vm831, %v2290
        %2307 = vst.msk [vmem:[%s519 + $0x68] sm:$0xff] %vm831, %v2291
        %2308 = vst.msk [vmem:[%s519 + $0x70] sm:$0xff] %vm831, %v2292
        %2309 = vst.msk [vmem:[%s519 + $0x78] sm:$0xff] %vm831, %v2293
        %s2310 = sand.u32 %s310, 1
        %s2311 = scalar_lea.sflag [#allocation5], %s2310
        %s2312 = sand.u32 %s310, 1
        %s2313 = smul.addr %s2312, 128
        %s2314 = scalar_lea.vmem [#allocation4], %s2313
        // Predicated region
        $region61: #{res_block_forward.7} parent=59 // pred_check
          %p2315 = pneg %p320
        $region62: #{res_block_forward.7} parent=59 // pred_check_branch
          %2317 = sbr.rel (%p2315) target = $region64
        $region63: #{res_block_forward.7} parent=59 // pred_region
          %s2318 = smul.u32 8, %s29
          %s2320 = ssub.s32 2048, 2048
          %2321 = vsyncadd %s2311, %s2320
          %s2322 = smul.addr %s2318, 2
          %s2323 = smul.addr %s28, 32
          %s2324 = sadd.s32 %s2322, %s2323
          %s2325 = smul.addr %s2324, 128
          %s2326 = scalar_lea.hbm %s10, %s2325
          %s2327 = sshll.u32 %s2314, 4
          %s2328 = int_to_ptr.vmem [resolvable:$true] %s2327
          %2333 = dma.vmem_to_hbm [thread:$0]  %s2328, 2048, %s2326, %s2311, 128, 128, 8
        $region64: #{res_block_forward.7} parent=59 // pred_fallthru
          _
      $region60: #{res_block_forward.7} parent=5 // pred_fallthru
        _
      %p2334 = scmp.le.s32.totalorder 2, %s19
      // Predicated region
      $region65: #{res_block_forward.7} parent=5 // pred_check
        %p2335 = pneg %p2334
      $region66: #{res_block_forward.7} parent=5 // pred_check_branch
        %2337 = sbr.rel (%p2335) target = $region68
      $region67: #{res_block_forward.7} parent=5 // pred_region
        %s2338 = ssub.s32 %s19, 2
        // Predicated region
        $region69: #{res_block_forward.7} parent=67 // pred_check
          %p2339 = pneg %p326
        $region70: #{res_block_forward.7} parent=67 // pred_check_branch
          %2341 = sbr.rel (%p2339) target = $region72
        $region71: #{res_block_forward.7} parent=67 // pred_region
          %s2342 = sand.u32 %s311, 1
          %s2343 = scalar_lea.sflag [#allocation5], %s2342
          %s2344 = sand.u32 %s311, 1
          %s2345 = smul.addr %s2344, 128
          %s2346 = scalar_lea.vmem [#allocation4], %s2345
          %2347 = dma.done %s2343, 2048
        $region72: #{res_block_forward.7} parent=67 // pred_fallthru
          _
      $region68: #{res_block_forward.7} parent=5 // pred_fallthru
        _
    $region6: #{res_block_forward.7} parent=1 // loop_footer
      %s23 = sadd.s32 1, %s19
    $region7: #{res_block_forward.7} parent=1 // loop_footer_branch
      %18 = sbr.rel target = $region3
    $region8: #{res_block_forward.7} parent=1 // loop_exit
      _
    %2348 = vsyncpa [#allocation5], 1
    %s2349 = scalar_lea.sflag [#allocation5], 1
    %2350 = vsyncpa %s2349, 1

</llo_original>
